<compile_context>
chip_gen: v6e
topology: v6e:2x2x1
jax: 0.10.0
libtpu: 0.0.40
codegen_flags: <defaults>
</compile_context>

<pallas_src>
import functools

import jax
import jax.numpy as jnp
import numpy as np
from jax import lax
from jax.experimental import pallas as pl
from jax.experimental.pallas import tpu as pltpu


def _inception_kernel(x_ref, wxr_ref, bxr_ref, wp_ref, bp_ref,
                      w3_ref, b3_ref, w5_ref, b5_ref, out_ref,
                      *, H, W, C, c1, cr3, cr5, cp):
    """One grid step: nb batch images, flattened to M = nb*H*W pixel rows."""
    M = x_ref.shape[0]
    nb = M // (H * W)
    f32, bf16 = jnp.float32, jnp.bfloat16

    def relu(v):
        return jnp.maximum(v, 0.0)

    x_rows = x_ref[...]                                   # (M, C) f32
    x = x_rows.reshape(nb, H, W, C)                       # safe: last dim kept

    # ---- branch 4 pre-step: 3x3 / stride 1 / pad 1 max pool (separable). ----
    # Edge-replication padding == -inf padding for a max pool, so no sentinel
    # values and no (W+2)/(H+2) temporaries are needed; everything stays f32.
    left = jnp.concatenate([x[:, :, :1], x[:, :, :W - 1]], axis=2)
    right = jnp.concatenate([x[:, :, 1:], x[:, :, W - 1:]], axis=2)
    mw = jnp.maximum(jnp.maximum(left, x), right)
    up = jnp.concatenate([mw[:, :1], mw[:, :H - 1]], axis=1)
    down = jnp.concatenate([mw[:, 1:], mw[:, H - 1:]], axis=1)
    pooled = jnp.maximum(jnp.maximum(up, mw), down)       # (nb, H, W, C) f32

    # ---- 1x1 convs: two MXU matmuls, bf16 operands / f32 accumulation. ------
    # Column order [wr3 | wr5 | w1] so the slices feeding the downstream 3x3 /
    # 5x5 matmuls start at lane offset 0; the pool-proj branch has its own
    # small matmul so no discarded cross terms are computed.
    f = relu(jnp.dot(x_rows.astype(bf16), wxr_ref[...],
                     preferred_element_type=f32) + bxr_ref[...])
    y3 = f[:, 0:cr3].astype(bf16).reshape(nb, H, W, cr3)
    y5 = f[:, cr3:cr3 + cr5].astype(bf16).reshape(nb, H, W, cr5)
    x1 = f[:, cr3 + cr5:cr3 + cr5 + c1]                   # (M, c1) f32

    x4 = relu(jnp.dot(pooled.reshape(M, C).astype(bf16), wp_ref[...],
                      preferred_element_type=f32) + bp_ref[...])   # (M, cp)

    # ---- k x k conv (pad k//2): W-only im2col + per-H-tap accumulation. -----
    # Patches carry only the k W-shifts (K = k*c_in); the k H-taps are a short
    # unrolled loop of matmuls into an f32 accumulator (weight sliced per dy),
    # so the (M, k*k*c_in) blow-up and second lane-concat round are avoided.
    def conv_kxk(y, w_ref, b_ref, k, cin):
        r = k // 2
        zc = jnp.zeros((nb, H, r, cin), y.dtype)
        yw = jnp.concatenate([zc, y, zc], axis=2)                    # (nb,H,W+2r,cin)
        px = jnp.concatenate([yw[:, :, dx:dx + W, :] for dx in range(k)],
                             axis=-1)                                # (nb,H,W,k*cin)
        zr = jnp.zeros((nb, r, W, k * cin), y.dtype)
        ph = jnp.concatenate([zr, px, zr], axis=1)                   # (nb,H+2r,W,k*cin)
        cout = w_ref.shape[-1]
        acc = jnp.zeros((M, cout), f32)
        for dy in range(k):                                          # unrolled H taps
            rows = ph[:, dy:dy + H].reshape(M, k * cin)
            acc = acc + jnp.dot(rows, w_ref[dy], preferred_element_type=f32)
        return relu(acc + b_ref[...])

    x2 = conv_kxk(y3, w3_ref, b3_ref, 3, cr3)             # (M, c3) f32
    x3 = conv_kxk(y5, w5_ref, b5_ref, 5, cr5)             # (M, c5) f32

    # ---- output: [1x1 | 3x3 | 5x5 | pool_proj] channel concat, one store. ---
    out_ref[...] = jnp.concatenate([x1, x2, x3, x4], axis=-1)


def _pick_block_batch(n, hw, min_steps=2, max_rows=2048):
    """Largest divisor of n giving >= min_steps grid steps (so v7x's two
    TensorCores can shard the 'parallel' axis and the pipeline has steps to
    overlap) while keeping <= max_rows flattened rows per step.
    (v5e/v6e can raise max_rows; v7x with 64 MiB VMEM should keep it small.)"""
    for d in sorted((d for d in range(1, n + 1) if n % d == 0), reverse=True):
        if d * hw <= max_rows and (n // d >= min_steps or n < min_steps):
            return d
    return 1


def inception_block(x_nhwc, params, block_batch=None):
    """x_nhwc: (N, H, W, C) float32; params: tuple of 12 weight/bias arrays."""
    N, H, W, C = x_nhwc.shape
    w1, b1, wr3, br3, w3, b3, wr5, br5, w5, b5, wp, bp = params
    c1, cr3, cr5, cp = w1.shape[1], wr3.shape[1], wr5.shape[1], wp.shape[1]
    c3, c5 = w3.shape[3], w5.shape[3]
    c_out = c1 + c3 + c5 + cp

    # Host-side weight prep: bf16 MXU operands (accumulation stays f32 in the
    # kernel), f32 biases.  3x3/5x5 weights reshaped to (k, k*c_in, c_out) for
    # per-H-tap slicing; 1x1 weights fused in [wr3 | wr5 | w1] column order.
    bf16 = jnp.bfloat16
    wxr = jnp.concatenate([wr3, wr5, w1], axis=1).astype(bf16)   # (C, cr3+cr5+c1)
    bxr = jnp.concatenate([br3, br5, b1], axis=1).astype(jnp.float32)
    w3r = w3.reshape(3, 3 * cr3, c3).astype(bf16)
    w5r = w5.reshape(5, 5 * cr5, c5).astype(bf16)
    wpc = wp.astype(bf16)

    nb = block_batch if block_batch is not None else _pick_block_batch(N, H * W)
    assert N % nb == 0
    rows_per_step = nb * H * W

    # Exact-size, contiguous I/O: x and the output cross the pallas_call
    # boundary as flat pixel rows, so every HBM<->VMEM DMA is contiguous and
    # transfers exactly the real bytes (no pad-to-128 channel slab).
    x_rows = x_nhwc.reshape(N * H * W, C)

    kernel = functools.partial(_inception_kernel, H=H, W=W, C=C,
                               c1=c1, cr3=cr3, cr5=cr5, cp=cp)

    def wspec(a):
        nd = a.ndim
        return pl.BlockSpec(a.shape, lambda b, _nd=nd: (0,) * _nd)

    weights = (wxr, bxr, wpc, bp, w3r, b3, w5r, b5)
    out_rows = pl.pallas_call(
        kernel,
        out_shape=jax.ShapeDtypeStruct((N * H * W, c_out), jnp.float32),
        grid_spec=pltpu.PrefetchScalarGridSpec(
            num_scalar_prefetch=0,
            grid=(N // nb,),
            in_specs=[pl.BlockSpec((rows_per_step, C), lambda b: (b, 0))]
                     + [wspec(p) for p in weights],
            out_specs=pl.BlockSpec((rows_per_step, c_out), lambda b: (b, 0))),
        compiler_params=pltpu.CompilerParams(
            dimension_semantics=("parallel",),
            # Explicit scoped-VMEM budget: tiny at the test shape, and safely
            # below v7x's 64 MiB physical VMEM; re-derive (smaller nb / H
            # tiling) for early-Inception shapes on v7x.
            vmem_limit_bytes=48 * 1024 * 1024),
    )(x_rows, *weights)
    return out_rows.reshape(N, H, W, c_out)


def ref_inception(x, params):
    """Pure-JAX reference (NHWC), using the same bf16-operand / f32-accumulate
    numerics as the kernel."""
    w1, b1, wr3, br3, w3, b3, wr5, br5, w5, b5, wp, bp = params
    dn = ('NHWC', 'HWIO', 'NHWC')
    bf16 = jnp.bfloat16

    def conv(inp, w, b, pad):
        y = lax.conv_general_dilated(inp.astype(bf16), w.astype(bf16), (1, 1),
                                     [(pad, pad), (pad, pad)],
                                     dimension_numbers=dn,
                                     preferred_element_type=jnp.float32)
        return jnp.maximum(y + b.reshape(1, 1, 1, -1), 0.0)

    x1 = conv(x, w1[None, None], b1, 0)
    x2 = conv(conv(x, wr3[None, None], br3, 0), w3, b3, 1)
    x3 = conv(conv(x, wr5[None, None], br5, 0), w5, b5, 2)
    x4 = lax.reduce_window(x, -jnp.inf, lax.max, (1, 3, 3, 1), (1, 1, 1, 1),
                           [(0, 0), (1, 1), (1, 1), (0, 0)])
    x4 = conv(x4, wp[None, None], bp, 0)
    return jnp.concatenate([x1, x2, x3, x4], axis=-1)


def make_params(key, im_c, num_1x1, num_3x3_red, num_3x3,
                num_5x5_red, num_5x5, num_pool_proj):
    ks = jax.random.split(key, 12)
    s = 0.1

    def w(k, shape):
        return (s * jax.random.normal(k, shape)).astype(jnp.float32)

    return (
        w(ks[0], (im_c, num_1x1)),              w(ks[1], (1, num_1x1)),
        w(ks[2], (im_c, num_3x3_red)),          w(ks[3], (1, num_3x3_red)),
        w(ks[4], (3, 3, num_3x3_red, num_3x3)), w(ks[5], (1, num_3x3)),
        w(ks[6], (im_c, num_5x5_red)),          w(ks[7], (1, num_5x5_red)),
        w(ks[8], (5, 5, num_5x5_red, num_5x5)), w(ks[9], (1, num_5x5)),
        w(ks[10], (im_c, num_pool_proj)),       w(ks[11], (1, num_pool_proj)),
    )


if __name__ == "__main__":
    key = jax.random.PRNGKey(0)
    k_x, k_p = jax.random.split(key)

    N, C, H, W = 2, 4, 16, 16                       # small NCHW input
    x_nchw = jax.random.normal(k_x, (N, C, H, W), dtype=jnp.float32)
    x_nhwc = jnp.transpose(x_nchw, (0, 2, 3, 1))    # NCHW -> NHWC

    params = make_params(k_p, im_c=C, num_1x1=8, num_3x3_red=4, num_3x3=8,
                         num_5x5_red=4, num_5x5=8, num_pool_proj=8)

    out = inception_block(x_nhwc, params)
    out = jax.block_until_ready(out)

    ref = ref_inception(x_nhwc, params)
    np.testing.assert_allclose(np.asarray(out), np.asarray(ref),
                               rtol=1e-3, atol=1e-3)
    print("KERNEL_OK")
</pallas_src>

<mosaic_0001>
module attributes {stable_mosaic.version = 11 : i64} {
  func.func @_inception_kernel(%arg0: i32, %arg1: memref<256x4xf32, #tpu.memory_space<vmem>>, %arg2: memref<4x16xbf16, #tpu.memory_space<vmem>>, %arg3: memref<1x16xf32, #tpu.memory_space<vmem>>, %arg4: memref<4x8xbf16, #tpu.memory_space<vmem>>, %arg5: memref<1x8xf32, #tpu.memory_space<vmem>>, %arg6: memref<3x12x8xbf16, #tpu.memory_space<vmem>>, %arg7: memref<1x8xf32, #tpu.memory_space<vmem>>, %arg8: memref<5x20x8xbf16, #tpu.memory_space<vmem>>, %arg9: memref<1x8xf32, #tpu.memory_space<vmem>>, %arg10: memref<256x32xf32, #tpu.memory_space<vmem>>) attributes {dimension_semantics = [#tpu.dimension_semantics<parallel>], iteration_bounds = array<i64: 2>, scalar_prefetch = 0 : i64, scratch_operands = 0 : i64, tpu.core_type = #tpu.core_type<tc>, window_params = [{transform_indices = @transform_0, window_bounds = array<i64: 256, 4>}, {pipeline_mode = #tpu.pipeline_mode<synchronous>, transform_indices = @transform_1, window_bounds = array<i64: 4, 16>}, {pipeline_mode = #tpu.pipeline_mode<synchronous>, transform_indices = @transform_2, window_bounds = array<i64: 1, 16>}, {pipeline_mode = #tpu.pipeline_mode<synchronous>, transform_indices = @transform_3, window_bounds = array<i64: 4, 8>}, {pipeline_mode = #tpu.pipeline_mode<synchronous>, transform_indices = @transform_4, window_bounds = array<i64: 1, 8>}, {pipeline_mode = #tpu.pipeline_mode<synchronous>, transform_indices = @transform_5, window_bounds = array<i64: 3, 12, 8>}, {pipeline_mode = #tpu.pipeline_mode<synchronous>, transform_indices = @transform_6, window_bounds = array<i64: 1, 8>}, {pipeline_mode = #tpu.pipeline_mode<synchronous>, transform_indices = @transform_7, window_bounds = array<i64: 5, 20, 8>}, {pipeline_mode = #tpu.pipeline_mode<synchronous>, transform_indices = @transform_8, window_bounds = array<i64: 1, 8>}, {transform_indices = @transform_9, window_bounds = array<i64: 256, 32>}]} {
    %c0 = arith.constant 0 : index
    %c0_0 = arith.constant 0 : index
    %0 = vector.load %arg1[%c0, %c0_0] : memref<256x4xf32, #tpu.memory_space<vmem>>, vector<256x4xf32>
    %1 = vector.shape_cast %0 : vector<256x4xf32> to vector<1x16x16x4xf32>
    %2 = vector.extract_strided_slice %1 {offsets = [0, 0, 0, 0], sizes = [1, 16, 1, 4], strides = [1, 1, 1, 1]} : vector<1x16x16x4xf32> to vector<1x16x1x4xf32>
    %3 = vector.extract_strided_slice %1 {offsets = [0, 0, 0, 0], sizes = [1, 16, 15, 4], strides = [1, 1, 1, 1]} : vector<1x16x16x4xf32> to vector<1x16x15x4xf32>
    %4 = tpu.concatenate %2, %3 in 2 : vector<1x16x1x4xf32>, vector<1x16x15x4xf32> -> vector<1x16x16x4xf32>
    %5 = vector.extract_strided_slice %1 {offsets = [0, 0, 1, 0], sizes = [1, 16, 15, 4], strides = [1, 1, 1, 1]} : vector<1x16x16x4xf32> to vector<1x16x15x4xf32>
    %6 = vector.extract_strided_slice %1 {offsets = [0, 0, 15, 0], sizes = [1, 16, 1, 4], strides = [1, 1, 1, 1]} : vector<1x16x16x4xf32> to vector<1x16x1x4xf32>
    %7 = tpu.concatenate %5, %6 in 2 : vector<1x16x15x4xf32>, vector<1x16x1x4xf32> -> vector<1x16x16x4xf32>
    %8 = arith.maximumf %4, %1 : vector<1x16x16x4xf32>
    %9 = arith.maximumf %8, %7 : vector<1x16x16x4xf32>
    %10 = vector.extract_strided_slice %9 {offsets = [0, 0, 0, 0], sizes = [1, 1, 16, 4], strides = [1, 1, 1, 1]} : vector<1x16x16x4xf32> to vector<1x1x16x4xf32>
    %11 = vector.extract_strided_slice %9 {offsets = [0, 0, 0, 0], sizes = [1, 15, 16, 4], strides = [1, 1, 1, 1]} : vector<1x16x16x4xf32> to vector<1x15x16x4xf32>
    %12 = tpu.concatenate %10, %11 in 1 : vector<1x1x16x4xf32>, vector<1x15x16x4xf32> -> vector<1x16x16x4xf32>
    %13 = vector.extract_strided_slice %9 {offsets = [0, 1, 0, 0], sizes = [1, 15, 16, 4], strides = [1, 1, 1, 1]} : vector<1x16x16x4xf32> to vector<1x15x16x4xf32>
    %14 = vector.extract_strided_slice %9 {offsets = [0, 15, 0, 0], sizes = [1, 1, 16, 4], strides = [1, 1, 1, 1]} : vector<1x16x16x4xf32> to vector<1x1x16x4xf32>
    %15 = tpu.concatenate %13, %14 in 1 : vector<1x15x16x4xf32>, vector<1x1x16x4xf32> -> vector<1x16x16x4xf32>
    %16 = arith.maximumf %12, %9 : vector<1x16x16x4xf32>
    %17 = arith.maximumf %16, %15 : vector<1x16x16x4xf32>
    %18 = arith.truncf %0 : vector<256x4xf32> to vector<256x4xbf16>
    %c0_1 = arith.constant 0 : index
    %c0_2 = arith.constant 0 : index
    %19 = vector.load %arg2[%c0_1, %c0_2] : memref<4x16xbf16, #tpu.memory_space<vmem>>, vector<4x16xbf16>
    %cst = arith.constant dense<0.000000e+00> : vector<256x16xf32>
    %20 = tpu.matmul %18, %19, %cst {dimension_numbers = #tpu.dot_dimension_numbers<[1], [0], [0], [1], [0, 0, 1, 1], [], []>} : vector<256x4xbf16>, vector<4x16xbf16>, vector<256x16xf32> -> vector<256x16xf32>
    %c0_3 = arith.constant 0 : index
    %c0_4 = arith.constant 0 : index
    %21 = vector.load %arg3[%c0_3, %c0_4] : memref<1x16xf32, #tpu.memory_space<vmem>>, vector<1x16xf32>
    %22 = vector.broadcast %21 : vector<1x16xf32> to vector<256x16xf32>
    %23 = arith.addf %20, %22 : vector<256x16xf32>
    %cst_5 = arith.constant 0.000000e+00 : f32
    %24 = vector.broadcast %cst_5 : f32 to vector<256x16xf32>
    %25 = arith.maximumf %23, %24 : vector<256x16xf32>
    %26 = vector.extract_strided_slice %25 {offsets = [0, 0], sizes = [256, 4], strides = [1, 1]} : vector<256x16xf32> to vector<256x4xf32>
    %27 = arith.truncf %26 : vector<256x4xf32> to vector<256x4xbf16>
    %28 = vector.shape_cast %27 : vector<256x4xbf16> to vector<1x16x16x4xbf16>
    %29 = vector.extract_strided_slice %25 {offsets = [0, 4], sizes = [256, 4], strides = [1, 1]} : vector<256x16xf32> to vector<256x4xf32>
    %30 = arith.truncf %29 : vector<256x4xf32> to vector<256x4xbf16>
    %31 = vector.shape_cast %30 : vector<256x4xbf16> to vector<1x16x16x4xbf16>
    %32 = vector.extract_strided_slice %25 {offsets = [0, 8], sizes = [256, 8], strides = [1, 1]} : vector<256x16xf32> to vector<256x8xf32>
    %33 = vector.shape_cast %17 : vector<1x16x16x4xf32> to vector<256x4xf32>
    %34 = arith.truncf %33 : vector<256x4xf32> to vector<256x4xbf16>
    %c0_6 = arith.constant 0 : index
    %c0_7 = arith.constant 0 : index
    %35 = vector.load %arg4[%c0_6, %c0_7] : memref<4x8xbf16, #tpu.memory_space<vmem>>, vector<4x8xbf16>
    %cst_8 = arith.constant dense<0.000000e+00> : vector<256x8xf32>
    %36 = tpu.matmul %34, %35, %cst_8 {dimension_numbers = #tpu.dot_dimension_numbers<[1], [0], [0], [1], [0, 0, 1, 1], [], []>} : vector<256x4xbf16>, vector<4x8xbf16>, vector<256x8xf32> -> vector<256x8xf32>
    %c0_9 = arith.constant 0 : index
    %c0_10 = arith.constant 0 : index
    %37 = vector.load %arg5[%c0_9, %c0_10] : memref<1x8xf32, #tpu.memory_space<vmem>>, vector<1x8xf32>
    %38 = vector.broadcast %37 : vector<1x8xf32> to vector<256x8xf32>
    %39 = arith.addf %36, %38 : vector<256x8xf32>
    %cst_11 = arith.constant 0.000000e+00 : f32
    %40 = vector.broadcast %cst_11 : f32 to vector<256x8xf32>
    %41 = arith.maximumf %39, %40 : vector<256x8xf32>
    %cst_12 = arith.constant 0.000000e+00 : bf16
    %42 = vector.broadcast %cst_12 : bf16 to vector<1x16x1x4xbf16>
    %43 = tpu.concatenate %42, %28, %42 in 2 : vector<1x16x1x4xbf16>, vector<1x16x16x4xbf16>, vector<1x16x1x4xbf16> -> vector<1x16x18x4xbf16>
    %44 = vector.extract_strided_slice %43 {offsets = [0, 0, 0, 0], sizes = [1, 16, 16, 4], strides = [1, 1, 1, 1]} : vector<1x16x18x4xbf16> to vector<1x16x16x4xbf16>
    %45 = vector.extract_strided_slice %43 {offsets = [0, 0, 1, 0], sizes = [1, 16, 16, 4], strides = [1, 1, 1, 1]} : vector<1x16x18x4xbf16> to vector<1x16x16x4xbf16>
    %46 = vector.extract_strided_slice %43 {offsets = [0, 0, 2, 0], sizes = [1, 16, 16, 4], strides = [1, 1, 1, 1]} : vector<1x16x18x4xbf16> to vector<1x16x16x4xbf16>
    %47 = tpu.concatenate %44, %45, %46 in 3 : vector<1x16x16x4xbf16>, vector<1x16x16x4xbf16>, vector<1x16x16x4xbf16> -> vector<1x16x16x12xbf16>
    %cst_13 = arith.constant 0.000000e+00 : bf16
    %48 = vector.broadcast %cst_13 : bf16 to vector<1x1x16x12xbf16>
    %49 = tpu.concatenate %48, %47, %48 in 1 : vector<1x1x16x12xbf16>, vector<1x16x16x12xbf16>, vector<1x1x16x12xbf16> -> vector<1x18x16x12xbf16>
    %cst_14 = arith.constant 0.000000e+00 : f32
    %50 = vector.broadcast %cst_14 : f32 to vector<256x8xf32>
    %51 = vector.extract_strided_slice %49 {offsets = [0, 0, 0, 0], sizes = [1, 16, 16, 12], strides = [1, 1, 1, 1]} : vector<1x18x16x12xbf16> to vector<1x16x16x12xbf16>
    %52 = vector.shape_cast %51 : vector<1x16x16x12xbf16> to vector<256x12xbf16>
    %c0_15 = arith.constant 0 : index
    %c0_16 = arith.constant 0 : index
    %c0_17 = arith.constant 0 : index
    %53 = vector.load %arg6[%c0_15, %c0_16, %c0_17] : memref<3x12x8xbf16, #tpu.memory_space<vmem>>, vector<1x12x8xbf16>
    %54 = vector.shape_cast %53 : vector<1x12x8xbf16> to vector<12x8xbf16>
    %cst_18 = arith.constant dense<0.000000e+00> : vector<256x8xf32>
    %55 = tpu.matmul %52, %54, %cst_18 {dimension_numbers = #tpu.dot_dimension_numbers<[1], [0], [0], [1], [0, 0, 1, 1], [], []>} : vector<256x12xbf16>, vector<12x8xbf16>, vector<256x8xf32> -> vector<256x8xf32>
    %56 = arith.addf %50, %55 : vector<256x8xf32>
    %57 = vector.extract_strided_slice %49 {offsets = [0, 1, 0, 0], sizes = [1, 16, 16, 12], strides = [1, 1, 1, 1]} : vector<1x18x16x12xbf16> to vector<1x16x16x12xbf16>
    %58 = vector.shape_cast %57 : vector<1x16x16x12xbf16> to vector<256x12xbf16>
    %c1 = arith.constant 1 : index
    %c0_19 = arith.constant 0 : index
    %c0_20 = arith.constant 0 : index
    %59 = vector.load %arg6[%c1, %c0_19, %c0_20] : memref<3x12x8xbf16, #tpu.memory_space<vmem>>, vector<1x12x8xbf16>
    %60 = vector.shape_cast %59 : vector<1x12x8xbf16> to vector<12x8xbf16>
    %cst_21 = arith.constant dense<0.000000e+00> : vector<256x8xf32>
    %61 = tpu.matmul %58, %60, %cst_21 {dimension_numbers = #tpu.dot_dimension_numbers<[1], [0], [0], [1], [0, 0, 1, 1], [], []>} : vector<256x12xbf16>, vector<12x8xbf16>, vector<256x8xf32> -> vector<256x8xf32>
    %62 = arith.addf %56, %61 : vector<256x8xf32>
    %63 = vector.extract_strided_slice %49 {offsets = [0, 2, 0, 0], sizes = [1, 16, 16, 12], strides = [1, 1, 1, 1]} : vector<1x18x16x12xbf16> to vector<1x16x16x12xbf16>
    %64 = vector.shape_cast %63 : vector<1x16x16x12xbf16> to vector<256x12xbf16>
    %c2 = arith.constant 2 : index
    %c0_22 = arith.constant 0 : index
    %c0_23 = arith.constant 0 : index
    %65 = vector.load %arg6[%c2, %c0_22, %c0_23] : memref<3x12x8xbf16, #tpu.memory_space<vmem>>, vector<1x12x8xbf16>
    %66 = vector.shape_cast %65 : vector<1x12x8xbf16> to vector<12x8xbf16>
    %cst_24 = arith.constant dense<0.000000e+00> : vector<256x8xf32>
    %67 = tpu.matmul %64, %66, %cst_24 {dimension_numbers = #tpu.dot_dimension_numbers<[1], [0], [0], [1], [0, 0, 1, 1], [], []>} : vector<256x12xbf16>, vector<12x8xbf16>, vector<256x8xf32> -> vector<256x8xf32>
    %68 = arith.addf %62, %67 : vector<256x8xf32>
    %c0_25 = arith.constant 0 : index
    %c0_26 = arith.constant 0 : index
    %69 = vector.load %arg7[%c0_25, %c0_26] : memref<1x8xf32, #tpu.memory_space<vmem>>, vector<1x8xf32>
    %70 = vector.broadcast %69 : vector<1x8xf32> to vector<256x8xf32>
    %71 = arith.addf %68, %70 : vector<256x8xf32>
    %cst_27 = arith.constant 0.000000e+00 : f32
    %72 = vector.broadcast %cst_27 : f32 to vector<256x8xf32>
    %73 = arith.maximumf %71, %72 : vector<256x8xf32>
    %cst_28 = arith.constant 0.000000e+00 : bf16
    %74 = vector.broadcast %cst_28 : bf16 to vector<1x16x2x4xbf16>
    %75 = tpu.concatenate %74, %31, %74 in 2 : vector<1x16x2x4xbf16>, vector<1x16x16x4xbf16>, vector<1x16x2x4xbf16> -> vector<1x16x20x4xbf16>
    %76 = vector.extract_strided_slice %75 {offsets = [0, 0, 0, 0], sizes = [1, 16, 16, 4], strides = [1, 1, 1, 1]} : vector<1x16x20x4xbf16> to vector<1x16x16x4xbf16>
    %77 = vector.extract_strided_slice %75 {offsets = [0, 0, 1, 0], sizes = [1, 16, 16, 4], strides = [1, 1, 1, 1]} : vector<1x16x20x4xbf16> to vector<1x16x16x4xbf16>
    %78 = vector.extract_strided_slice %75 {offsets = [0, 0, 2, 0], sizes = [1, 16, 16, 4], strides = [1, 1, 1, 1]} : vector<1x16x20x4xbf16> to vector<1x16x16x4xbf16>
    %79 = vector.extract_strided_slice %75 {offsets = [0, 0, 3, 0], sizes = [1, 16, 16, 4], strides = [1, 1, 1, 1]} : vector<1x16x20x4xbf16> to vector<1x16x16x4xbf16>
    %80 = vector.extract_strided_slice %75 {offsets = [0, 0, 4, 0], sizes = [1, 16, 16, 4], strides = [1, 1, 1, 1]} : vector<1x16x20x4xbf16> to vector<1x16x16x4xbf16>
    %81 = tpu.concatenate %76, %77, %78, %79, %80 in 3 : vector<1x16x16x4xbf16>, vector<1x16x16x4xbf16>, vector<1x16x16x4xbf16>, vector<1x16x16x4xbf16>, vector<1x16x16x4xbf16> -> vector<1x16x16x20xbf16>
    %cst_29 = arith.constant 0.000000e+00 : bf16
    %82 = vector.broadcast %cst_29 : bf16 to vector<1x2x16x20xbf16>
    %83 = tpu.concatenate %82, %81, %82 in 1 : vector<1x2x16x20xbf16>, vector<1x16x16x20xbf16>, vector<1x2x16x20xbf16> -> vector<1x20x16x20xbf16>
    %cst_30 = arith.constant 0.000000e+00 : f32
    %84 = vector.broadcast %cst_30 : f32 to vector<256x8xf32>
    %85 = vector.extract_strided_slice %83 {offsets = [0, 0, 0, 0], sizes = [1, 16, 16, 20], strides = [1, 1, 1, 1]} : vector<1x20x16x20xbf16> to vector<1x16x16x20xbf16>
    %86 = vector.shape_cast %85 : vector<1x16x16x20xbf16> to vector<256x20xbf16>
    %c0_31 = arith.constant 0 : index
    %c0_32 = arith.constant 0 : index
    %c0_33 = arith.constant 0 : index
    %87 = vector.load %arg8[%c0_31, %c0_32, %c0_33] : memref<5x20x8xbf16, #tpu.memory_space<vmem>>, vector<1x20x8xbf16>
    %88 = vector.shape_cast %87 : vector<1x20x8xbf16> to vector<20x8xbf16>
    %cst_34 = arith.constant dense<0.000000e+00> : vector<256x8xf32>
    %89 = tpu.matmul %86, %88, %cst_34 {dimension_numbers = #tpu.dot_dimension_numbers<[1], [0], [0], [1], [0, 0, 1, 1], [], []>} : vector<256x20xbf16>, vector<20x8xbf16>, vector<256x8xf32> -> vector<256x8xf32>
    %90 = arith.addf %84, %89 : vector<256x8xf32>
    %91 = vector.extract_strided_slice %83 {offsets = [0, 1, 0, 0], sizes = [1, 16, 16, 20], strides = [1, 1, 1, 1]} : vector<1x20x16x20xbf16> to vector<1x16x16x20xbf16>
    %92 = vector.shape_cast %91 : vector<1x16x16x20xbf16> to vector<256x20xbf16>
    %c1_35 = arith.constant 1 : index
    %c0_36 = arith.constant 0 : index
    %c0_37 = arith.constant 0 : index
    %93 = vector.load %arg8[%c1_35, %c0_36, %c0_37] : memref<5x20x8xbf16, #tpu.memory_space<vmem>>, vector<1x20x8xbf16>
    %94 = vector.shape_cast %93 : vector<1x20x8xbf16> to vector<20x8xbf16>
    %cst_38 = arith.constant dense<0.000000e+00> : vector<256x8xf32>
    %95 = tpu.matmul %92, %94, %cst_38 {dimension_numbers = #tpu.dot_dimension_numbers<[1], [0], [0], [1], [0, 0, 1, 1], [], []>} : vector<256x20xbf16>, vector<20x8xbf16>, vector<256x8xf32> -> vector<256x8xf32>
    %96 = arith.addf %90, %95 : vector<256x8xf32>
    %97 = vector.extract_strided_slice %83 {offsets = [0, 2, 0, 0], sizes = [1, 16, 16, 20], strides = [1, 1, 1, 1]} : vector<1x20x16x20xbf16> to vector<1x16x16x20xbf16>
    %98 = vector.shape_cast %97 : vector<1x16x16x20xbf16> to vector<256x20xbf16>
    %c2_39 = arith.constant 2 : index
    %c0_40 = arith.constant 0 : index
    %c0_41 = arith.constant 0 : index
    %99 = vector.load %arg8[%c2_39, %c0_40, %c0_41] : memref<5x20x8xbf16, #tpu.memory_space<vmem>>, vector<1x20x8xbf16>
    %100 = vector.shape_cast %99 : vector<1x20x8xbf16> to vector<20x8xbf16>
    %cst_42 = arith.constant dense<0.000000e+00> : vector<256x8xf32>
    %101 = tpu.matmul %98, %100, %cst_42 {dimension_numbers = #tpu.dot_dimension_numbers<[1], [0], [0], [1], [0, 0, 1, 1], [], []>} : vector<256x20xbf16>, vector<20x8xbf16>, vector<256x8xf32> -> vector<256x8xf32>
    %102 = arith.addf %96, %101 : vector<256x8xf32>
    %103 = vector.extract_strided_slice %83 {offsets = [0, 3, 0, 0], sizes = [1, 16, 16, 20], strides = [1, 1, 1, 1]} : vector<1x20x16x20xbf16> to vector<1x16x16x20xbf16>
    %104 = vector.shape_cast %103 : vector<1x16x16x20xbf16> to vector<256x20xbf16>
    %c3 = arith.constant 3 : index
    %c0_43 = arith.constant 0 : index
    %c0_44 = arith.constant 0 : index
    %105 = vector.load %arg8[%c3, %c0_43, %c0_44] : memref<5x20x8xbf16, #tpu.memory_space<vmem>>, vector<1x20x8xbf16>
    %106 = vector.shape_cast %105 : vector<1x20x8xbf16> to vector<20x8xbf16>
    %cst_45 = arith.constant dense<0.000000e+00> : vector<256x8xf32>
    %107 = tpu.matmul %104, %106, %cst_45 {dimension_numbers = #tpu.dot_dimension_numbers<[1], [0], [0], [1], [0, 0, 1, 1], [], []>} : vector<256x20xbf16>, vector<20x8xbf16>, vector<256x8xf32> -> vector<256x8xf32>
    %108 = arith.addf %102, %107 : vector<256x8xf32>
    %109 = vector.extract_strided_slice %83 {offsets = [0, 4, 0, 0], sizes = [1, 16, 16, 20], strides = [1, 1, 1, 1]} : vector<1x20x16x20xbf16> to vector<1x16x16x20xbf16>
    %110 = vector.shape_cast %109 : vector<1x16x16x20xbf16> to vector<256x20xbf16>
    %c4 = arith.constant 4 : index
    %c0_46 = arith.constant 0 : index
    %c0_47 = arith.constant 0 : index
    %111 = vector.load %arg8[%c4, %c0_46, %c0_47] : memref<5x20x8xbf16, #tpu.memory_space<vmem>>, vector<1x20x8xbf16>
    %112 = vector.shape_cast %111 : vector<1x20x8xbf16> to vector<20x8xbf16>
    %cst_48 = arith.constant dense<0.000000e+00> : vector<256x8xf32>
    %113 = tpu.matmul %110, %112, %cst_48 {dimension_numbers = #tpu.dot_dimension_numbers<[1], [0], [0], [1], [0, 0, 1, 1], [], []>} : vector<256x20xbf16>, vector<20x8xbf16>, vector<256x8xf32> -> vector<256x8xf32>
    %114 = arith.addf %108, %113 : vector<256x8xf32>
    %c0_49 = arith.constant 0 : index
    %c0_50 = arith.constant 0 : index
    %115 = vector.load %arg9[%c0_49, %c0_50] : memref<1x8xf32, #tpu.memory_space<vmem>>, vector<1x8xf32>
    %116 = vector.broadcast %115 : vector<1x8xf32> to vector<256x8xf32>
    %117 = arith.addf %114, %116 : vector<256x8xf32>
    %cst_51 = arith.constant 0.000000e+00 : f32
    %118 = vector.broadcast %cst_51 : f32 to vector<256x8xf32>
    %119 = arith.maximumf %117, %118 : vector<256x8xf32>
    %120 = tpu.concatenate %32, %73, %119, %41 in 1 : vector<256x8xf32>, vector<256x8xf32>, vector<256x8xf32>, vector<256x8xf32> -> vector<256x32xf32>
    %c0_52 = arith.constant 0 : index
    %c0_53 = arith.constant 0 : index
    %121 = vector.load %arg10[%c0_52, %c0_53] : memref<256x32xf32, #tpu.memory_space<vmem>>, vector<256x32xf32>
    tpu.vector_store %arg10[%c0_52, %c0_53], %120 {strides = array<i32>} : memref<256x32xf32, #tpu.memory_space<vmem>>, vector<256x32xf32>,
    return
  }
  func.func @transform_0(%arg0: i32) -> (i32, i32) {
    %c0_i32 = arith.constant 0 : i32
    %c0_i32_0 = arith.constant 0 : i32
    return %arg0, %c0_i32 : i32, i32
  }
  func.func @transform_1(%arg0: i32) -> (i32, i32) {
    %c0_i32 = arith.constant 0 : i32
    %c0_i32_0 = arith.constant 0 : i32
    %c0_i32_1 = arith.constant 0 : i32
    return %c0_i32, %c0_i32_0 : i32, i32
  }
  func.func @transform_2(%arg0: i32) -> (i32, i32) {
    %c0_i32 = arith.constant 0 : i32
    %c0_i32_0 = arith.constant 0 : i32
    %c0_i32_1 = arith.constant 0 : i32
    return %c0_i32, %c0_i32_0 : i32, i32
  }
  func.func @transform_3(%arg0: i32) -> (i32, i32) {
    %c0_i32 = arith.constant 0 : i32
    %c0_i32_0 = arith.constant 0 : i32
    %c0_i32_1 = arith.constant 0 : i32
    return %c0_i32, %c0_i32_0 : i32, i32
  }
  func.func @transform_4(%arg0: i32) -> (i32, i32) {
    %c0_i32 = arith.constant 0 : i32
    %c0_i32_0 = arith.constant 0 : i32
    %c0_i32_1 = arith.constant 0 : i32
    return %c0_i32, %c0_i32_0 : i32, i32
  }
  func.func @transform_5(%arg0: i32) -> (i32, i32, i32) {
    %c0_i32 = arith.constant 0 : i32
    %c0_i32_0 = arith.constant 0 : i32
    %c0_i32_1 = arith.constant 0 : i32
    %c0_i32_2 = arith.constant 0 : i32
    return %c0_i32, %c0_i32_0, %c0_i32_1 : i32, i32, i32
  }
  func.func @transform_6(%arg0: i32) -> (i32, i32) {
    %c0_i32 = arith.constant 0 : i32
    %c0_i32_0 = arith.constant 0 : i32
    %c0_i32_1 = arith.constant 0 : i32
    return %c0_i32, %c0_i32_0 : i32, i32
  }
  func.func @transform_7(%arg0: i32) -> (i32, i32, i32) {
    %c0_i32 = arith.constant 0 : i32
    %c0_i32_0 = arith.constant 0 : i32
    %c0_i32_1 = arith.constant 0 : i32
    %c0_i32_2 = arith.constant 0 : i32
    return %c0_i32, %c0_i32_0, %c0_i32_1 : i32, i32, i32
  }
  func.func @transform_8(%arg0: i32) -> (i32, i32) {
    %c0_i32 = arith.constant 0 : i32
    %c0_i32_0 = arith.constant 0 : i32
    %c0_i32_1 = arith.constant 0 : i32
    return %c0_i32, %c0_i32_0 : i32, i32
  }
  func.func @transform_9(%arg0: i32) -> (i32, i32) {
    %c0_i32 = arith.constant 0 : i32
    %c0_i32_0 = arith.constant 0 : i32
    return %arg0, %c0_i32 : i32, i32
  }
}

</mosaic_0001>

<llo_original>
// kernel: tpu_custom_call.1
$region0: #{tpu_custom_call.1}
  #allocation0 [shape = 'u32[]', space=smem, size = 0x4, offset = 0x4, fixed_abs, tag = 'smem constant byte address 0x4 - core index']
  #allocation1 [shape = 'u32[144,128]{1,0:T(1,128)}', space=vmem, size = 0x12000, scoped, tag = 'internal scratch']
  %s0 = inlined_call_operand.vmem [shape: f32[512,4], index: 0, kind: input, shape index: {}]
  %s1 = inlined_call_operand.vmem [shape: bf16[4,16], index: 1, kind: input, shape index: {}]
  %s2 = inlined_call_operand.vmem [shape: f32[1,16], index: 2, kind: input, shape index: {}]
  %s3 = inlined_call_operand.vmem [shape: bf16[4,8], index: 3, kind: input, shape index: {}]
  %s4 = inlined_call_operand.vmem [shape: f32[1,8], index: 4, kind: input, shape index: {}]
  %s5 = inlined_call_operand.vmem [shape: bf16[3,12,8], index: 5, kind: input, shape index: {}]
  %s6 = inlined_call_operand.vmem [shape: f32[1,8], index: 6, kind: input, shape index: {}]
  %s7 = inlined_call_operand.vmem [shape: bf16[5,20,8], index: 7, kind: input, shape index: {}]
  %s8 = inlined_call_operand.vmem [shape: f32[1,8], index: 8, kind: input, shape index: {}]
  %s9 = inlined_call_operand.vmem [shape: f32[512,32], index: 9, kind: output, shape index: {}]
  %s10 = sld [smem:[#allocation0]]
  $region69: #{tpu_custom_call.1} parent=0
    _
  %s12 = ssub.s32 1, %s10
  %s13 = scalar_select 0, %s12, %s10
  loop: start=0, step=1, limit=4
  $region2: #{tpu_custom_call.1} parent=0 // loop_pre_header
    _
  $region3: #{tpu_custom_call.1} parent=0 // loop_header
    %s15 = sphi 0, %s19
    %p16 = scmp.ge.s32.totalorder %s15, 4
    %s25 = sphi 0, %s27
    %s28 = sphi 0, %s25
    %s29 = sphi 0, %s28
    %s45 = sphi 0, %s29
    %s49 = sphi 0, %s49
    %s51 = sphi 0, %s49
    %s52 = sphi 0, %s51
    %s66 = sphi 0, %s52
    %s70 = sphi 0, %s70
    %s72 = sphi 0, %s70
    %s73 = sphi 0, %s72
    %s87 = sphi 0, %s73
    %s91 = sphi 0, %s91
    %s93 = sphi 0, %s91
    %s94 = sphi 0, %s93
    %s108 = sphi 0, %s94
    %s112 = sphi 0, %s112
    %s114 = sphi 0, %s112
    %s115 = sphi 0, %s114
    %s129 = sphi 0, %s115
    %s133 = sphi 0, %s133
    %s135 = sphi 0, %s133
    %s136 = sphi 0, %s135
    %s150 = sphi 0, %s136
    %s154 = sphi 0, %s154
    %s156 = sphi 0, %s154
    %s157 = sphi 0, %s156
    %s171 = sphi 0, %s157
    %s175 = sphi 0, %s175
    %s177 = sphi 0, %s175
    %s178 = sphi 0, %s177
    %s192 = sphi 0, %s178
    %s196 = sphi 0, %s196
    %s198 = sphi 0, %s196
    %s199 = sphi 0, %s198
    %s213 = sphi 0, %s199
    %s219 = sphi 0, %s221
    %s222 = sphi 0, %s219
    %s223 = sphi 0, %s222
    %s239 = sphi 0, %s223
  $region4: #{tpu_custom_call.1} parent=0 // loop_header_branch
    %18 = sbr.rel (%p16) target = $region8
  $region5: #{tpu_custom_call.1} parent=0 // loop_body
    %s20 = ssub.s32 %s15, 1
    %s21 = ssub.s32 %s15, 2
    %s22 = sadd.s32 %s15, 1
    %s23 = ssub.s32 %s15, %s22
    %p24 = scmp.eq.s32.totalorder %s23, 0
    %s26 = sadd.s32 %s25, 1
    %s27 = scalar_select %p24, %s25, %s26
    %p30 = pneg %p24
    %p31 = scmp.eq.s32.totalorder %s15, 1
    %p32 = por %p30, %p31
    %p33 = scmp.ne.s32.totalorder %s25, %s28
    %p34 = scmp.eq.s32.totalorder %s15, 0
    %p35 = por %p33, %p34
    %p36 = scmp.ne.s32.totalorder %s25, %s28
    %p37 = scmp.eq.s32.totalorder %s20, 1
    %p38 = por %p36, %p37
    %p39 = scmp.ne.s32.totalorder %s28, %s29
    %p40 = scmp.eq.s32.totalorder %s20, 0
    %p41 = por %p39, %p40
    %p42 = scmp.ne.s32.totalorder %s28, %s29
    %p43 = scmp.eq.s32.totalorder %s21, 1
    %p44 = por %p42, %p43
    %p46 = scmp.ne.s32.totalorder %s29, %s45
    %p47 = scmp.eq.s32.totalorder %s21, 0
    %p48 = por %p46, %p47
    %s50 = sadd.s32 %s49, 1
    %p53 = scmp.eq.s32.totalorder %s15, 1
    %p54 = scmp.ne.s32.totalorder %s49, %s51
    %p55 = scmp.eq.s32.totalorder %s15, 0
    %p56 = por %p54, %p55
    %p57 = scmp.ne.s32.totalorder %s49, %s51
    %p58 = scmp.eq.s32.totalorder %s20, 1
    %p59 = por %p57, %p58
    %p60 = scmp.ne.s32.totalorder %s51, %s52
    %p61 = scmp.eq.s32.totalorder %s20, 0
    %p62 = por %p60, %p61
    %p63 = scmp.ne.s32.totalorder %s51, %s52
    %p64 = scmp.eq.s32.totalorder %s21, 1
    %p65 = por %p63, %p64
    %p67 = scmp.ne.s32.totalorder %s52, %s66
    %p68 = scmp.eq.s32.totalorder %s21, 0
    %p69 = por %p67, %p68
    %s71 = sadd.s32 %s70, 1
    %p74 = scmp.eq.s32.totalorder %s15, 1
    %p75 = scmp.ne.s32.totalorder %s70, %s72
    %p76 = scmp.eq.s32.totalorder %s15, 0
    %p77 = por %p75, %p76
    %p78 = scmp.ne.s32.totalorder %s70, %s72
    %p79 = scmp.eq.s32.totalorder %s20, 1
    %p80 = por %p78, %p79
    %p81 = scmp.ne.s32.totalorder %s72, %s73
    %p82 = scmp.eq.s32.totalorder %s20, 0
    %p83 = por %p81, %p82
    %p84 = scmp.ne.s32.totalorder %s72, %s73
    %p85 = scmp.eq.s32.totalorder %s21, 1
    %p86 = por %p84, %p85
    %p88 = scmp.ne.s32.totalorder %s73, %s87
    %p89 = scmp.eq.s32.totalorder %s21, 0
    %p90 = por %p88, %p89
    %s92 = sadd.s32 %s91, 1
    %p95 = scmp.eq.s32.totalorder %s15, 1
    %p96 = scmp.ne.s32.totalorder %s91, %s93
    %p97 = scmp.eq.s32.totalorder %s15, 0
    %p98 = por %p96, %p97
    %p99 = scmp.ne.s32.totalorder %s91, %s93
    %p100 = scmp.eq.s32.totalorder %s20, 1
    %p101 = por %p99, %p100
    %p102 = scmp.ne.s32.totalorder %s93, %s94
    %p103 = scmp.eq.s32.totalorder %s20, 0
    %p104 = por %p102, %p103
    %p105 = scmp.ne.s32.totalorder %s93, %s94
    %p106 = scmp.eq.s32.totalorder %s21, 1
    %p107 = por %p105, %p106
    %p109 = scmp.ne.s32.totalorder %s94, %s108
    %p110 = scmp.eq.s32.totalorder %s21, 0
    %p111 = por %p109, %p110
    %s113 = sadd.s32 %s112, 1
    %p116 = scmp.eq.s32.totalorder %s15, 1
    %p117 = scmp.ne.s32.totalorder %s112, %s114
    %p118 = scmp.eq.s32.totalorder %s15, 0
    %p119 = por %p117, %p118
    %p120 = scmp.ne.s32.totalorder %s112, %s114
    %p121 = scmp.eq.s32.totalorder %s20, 1
    %p122 = por %p120, %p121
    %p123 = scmp.ne.s32.totalorder %s114, %s115
    %p124 = scmp.eq.s32.totalorder %s20, 0
    %p125 = por %p123, %p124
    %p126 = scmp.ne.s32.totalorder %s114, %s115
    %p127 = scmp.eq.s32.totalorder %s21, 1
    %p128 = por %p126, %p127
    %p130 = scmp.ne.s32.totalorder %s115, %s129
    %p131 = scmp.eq.s32.totalorder %s21, 0
    %p132 = por %p130, %p131
    %s134 = sadd.s32 %s133, 1
    %p137 = scmp.eq.s32.totalorder %s15, 1
    %p138 = scmp.ne.s32.totalorder %s133, %s135
    %p139 = scmp.eq.s32.totalorder %s15, 0
    %p140 = por %p138, %p139
    %p141 = scmp.ne.s32.totalorder %s133, %s135
    %p142 = scmp.eq.s32.totalorder %s20, 1
    %p143 = por %p141, %p142
    %p144 = scmp.ne.s32.totalorder %s135, %s136
    %p145 = scmp.eq.s32.totalorder %s20, 0
    %p146 = por %p144, %p145
    %p147 = scmp.ne.s32.totalorder %s135, %s136
    %p148 = scmp.eq.s32.totalorder %s21, 1
    %p149 = por %p147, %p148
    %p151 = scmp.ne.s32.totalorder %s136, %s150
    %p152 = scmp.eq.s32.totalorder %s21, 0
    %p153 = por %p151, %p152
    %s155 = sadd.s32 %s154, 1
    %p158 = scmp.eq.s32.totalorder %s15, 1
    %p159 = scmp.ne.s32.totalorder %s154, %s156
    %p160 = scmp.eq.s32.totalorder %s15, 0
    %p161 = por %p159, %p160
    %p162 = scmp.ne.s32.totalorder %s154, %s156
    %p163 = scmp.eq.s32.totalorder %s20, 1
    %p164 = por %p162, %p163
    %p165 = scmp.ne.s32.totalorder %s156, %s157
    %p166 = scmp.eq.s32.totalorder %s20, 0
    %p167 = por %p165, %p166
    %p168 = scmp.ne.s32.totalorder %s156, %s157
    %p169 = scmp.eq.s32.totalorder %s21, 1
    %p170 = por %p168, %p169
    %p172 = scmp.ne.s32.totalorder %s157, %s171
    %p173 = scmp.eq.s32.totalorder %s21, 0
    %p174 = por %p172, %p173
    %s176 = sadd.s32 %s175, 1
    %p179 = scmp.eq.s32.totalorder %s15, 1
    %p180 = scmp.ne.s32.totalorder %s175, %s177
    %p181 = scmp.eq.s32.totalorder %s15, 0
    %p182 = por %p180, %p181
    %p183 = scmp.ne.s32.totalorder %s175, %s177
    %p184 = scmp.eq.s32.totalorder %s20, 1
    %p185 = por %p183, %p184
    %p186 = scmp.ne.s32.totalorder %s177, %s178
    %p187 = scmp.eq.s32.totalorder %s20, 0
    %p188 = por %p186, %p187
    %p189 = scmp.ne.s32.totalorder %s177, %s178
    %p190 = scmp.eq.s32.totalorder %s21, 1
    %p191 = por %p189, %p190
    %p193 = scmp.ne.s32.totalorder %s178, %s192
    %p194 = scmp.eq.s32.totalorder %s21, 0
    %p195 = por %p193, %p194
    %s197 = sadd.s32 %s196, 1
    %p200 = scmp.eq.s32.totalorder %s15, 1
    %p201 = scmp.ne.s32.totalorder %s196, %s198
    %p202 = scmp.eq.s32.totalorder %s15, 0
    %p203 = por %p201, %p202
    %p204 = scmp.ne.s32.totalorder %s196, %s198
    %p205 = scmp.eq.s32.totalorder %s20, 1
    %p206 = por %p204, %p205
    %p207 = scmp.ne.s32.totalorder %s198, %s199
    %p208 = scmp.eq.s32.totalorder %s20, 0
    %p209 = por %p207, %p208
    %p210 = scmp.ne.s32.totalorder %s198, %s199
    %p211 = scmp.eq.s32.totalorder %s21, 1
    %p212 = por %p210, %p211
    %p214 = scmp.ne.s32.totalorder %s199, %s213
    %p215 = scmp.eq.s32.totalorder %s21, 0
    %p216 = por %p214, %p215
    %s217 = ssub.s32 %s15, %s22
    %p218 = scmp.eq.s32.totalorder %s217, 0
    %s220 = sadd.s32 %s219, 1
    %s221 = scalar_select %p218, %s219, %s220
    %p224 = pneg %p218
    %p225 = scmp.eq.s32.totalorder %s15, 1
    %p226 = por %p224, %p225
    %p227 = scmp.ne.s32.totalorder %s219, %s222
    %p228 = scmp.eq.s32.totalorder %s15, 0
    %p229 = por %p227, %p228
    %p230 = scmp.ne.s32.totalorder %s219, %s222
    %p231 = scmp.eq.s32.totalorder %s20, 1
    %p232 = por %p230, %p231
    %p233 = scmp.ne.s32.totalorder %s222, %s223
    %p234 = scmp.eq.s32.totalorder %s20, 0
    %p235 = por %p233, %p234
    %p236 = scmp.ne.s32.totalorder %s222, %s223
    %p237 = scmp.eq.s32.totalorder %s21, 1
    %p238 = por %p236, %p237
    %p240 = scmp.ne.s32.totalorder %s223, %s239
    %p241 = scmp.eq.s32.totalorder %s21, 0
    %p242 = por %p240, %p241
    %p243 = scmp.le.s32.totalorder 1, %s15
    %p244 = scmp.lt.s32.totalorder %s15, 3
    %p245 = pnand %p243, %p244
    %p246 = pneg %p245
    // Predicated region
    $region9: #{tpu_custom_call.1} parent=5 // pred_check
      _
    $region10: #{tpu_custom_call.1} parent=5 // pred_check_branch
      %248 = sbr.rel (%p245) target = $region12
    $region11: #{tpu_custom_call.1} parent=5 // pred_region
      %s249 = ssub.s32 %s15, 1
      // Predicated region
      $region13: #{tpu_custom_call.1} parent=11 // pred_check
        %p250 = pneg %p62
      $region14: #{tpu_custom_call.1} parent=11 // pred_check_branch
        %252 = sbr.rel (%p250) target = $region16
      $region15: #{tpu_custom_call.1} parent=11 // pred_region
        _
      $region16: #{tpu_custom_call.1} parent=11 // pred_fallthru
        _
      // Predicated region
      $region17: #{tpu_custom_call.1} parent=11 // pred_check
        %p253 = pneg %p83
      $region18: #{tpu_custom_call.1} parent=11 // pred_check_branch
        %255 = sbr.rel (%p253) target = $region20
      $region19: #{tpu_custom_call.1} parent=11 // pred_region
        _
      $region20: #{tpu_custom_call.1} parent=11 // pred_fallthru
        _
      // Predicated region
      $region21: #{tpu_custom_call.1} parent=11 // pred_check
        %p256 = pneg %p104
      $region22: #{tpu_custom_call.1} parent=11 // pred_check_branch
        %258 = sbr.rel (%p256) target = $region24
      $region23: #{tpu_custom_call.1} parent=11 // pred_region
        _
      $region24: #{tpu_custom_call.1} parent=11 // pred_fallthru
        _
      // Predicated region
      $region25: #{tpu_custom_call.1} parent=11 // pred_check
        %p259 = pneg %p125
      $region26: #{tpu_custom_call.1} parent=11 // pred_check_branch
        %261 = sbr.rel (%p259) target = $region28
      $region27: #{tpu_custom_call.1} parent=11 // pred_region
        _
      $region28: #{tpu_custom_call.1} parent=11 // pred_fallthru
        _
      // Predicated region
      $region29: #{tpu_custom_call.1} parent=11 // pred_check
        %p262 = pneg %p146
      $region30: #{tpu_custom_call.1} parent=11 // pred_check_branch
        %264 = sbr.rel (%p262) target = $region32
      $region31: #{tpu_custom_call.1} parent=11 // pred_region
        _
      $region32: #{tpu_custom_call.1} parent=11 // pred_fallthru
        _
      // Predicated region
      $region33: #{tpu_custom_call.1} parent=11 // pred_check
        %p265 = pneg %p167
      $region34: #{tpu_custom_call.1} parent=11 // pred_check_branch
        %267 = sbr.rel (%p265) target = $region36
      $region35: #{tpu_custom_call.1} parent=11 // pred_region
        _
      $region36: #{tpu_custom_call.1} parent=11 // pred_fallthru
        _
      // Predicated region
      $region37: #{tpu_custom_call.1} parent=11 // pred_check
        %p268 = pneg %p188
      $region38: #{tpu_custom_call.1} parent=11 // pred_check_branch
        %270 = sbr.rel (%p268) target = $region40
      $region39: #{tpu_custom_call.1} parent=11 // pred_region
        _
      $region40: #{tpu_custom_call.1} parent=11 // pred_fallthru
        _
      // Predicated region
      $region41: #{tpu_custom_call.1} parent=11 // pred_check
        %p271 = pneg %p209
      $region42: #{tpu_custom_call.1} parent=11 // pred_check_branch
        %273 = sbr.rel (%p271) target = $region44
      $region43: #{tpu_custom_call.1} parent=11 // pred_region
        _
      $region44: #{tpu_custom_call.1} parent=11 // pred_fallthru
        _
    $region12: #{tpu_custom_call.1} parent=5 // pred_fallthru
      _
    %p274 = scmp.lt.s32.totalorder %s15, 2
    // Predicated region
    $region45: #{tpu_custom_call.1} parent=5 // pred_check
      %p275 = pneg %p274
    $region46: #{tpu_custom_call.1} parent=5 // pred_check_branch
      %277 = sbr.rel (%p275) target = $region48
    $region47: #{tpu_custom_call.1} parent=5 // pred_region
      // Predicated region
      $region49: #{tpu_custom_call.1} parent=47 // pred_check
        %p278 = pneg %p35
      $region50: #{tpu_custom_call.1} parent=47 // pred_check_branch
        %280 = sbr.rel (%p278) target = $region52
      $region51: #{tpu_custom_call.1} parent=47 // pred_region
        %s281 = smul.u32 32, %s15
        %p282 = scmp.lt.s32.totalorder %s281, 63
        %s283 = scalar_select %p282, %s281, 63
        %s284 = smul.addr %s283, 8
        %s285 = scalar_lea.vmem %s0, %s284
        %s286 = smul.u32 32, %s15
      $region52: #{tpu_custom_call.1} parent=47 // pred_fallthru
        _
    $region48: #{tpu_custom_call.1} parent=5 // pred_fallthru
      _
    %p287 = scmp.le.s32.totalorder 1, %s15
    %p288 = scmp.lt.s32.totalorder %s15, 3
    %p289 = pnand %p287, %p288
    %p290 = pneg %p289
    // Predicated region
    $region53: #{tpu_custom_call.1} parent=5 // pred_check
      _
    $region54: #{tpu_custom_call.1} parent=5 // pred_check_branch
      %292 = sbr.rel (%p289) target = $region56
    $region55: #{tpu_custom_call.1} parent=5 // pred_region
      %s293 = ssub.s32 %s15, 1
      %s294 = smul.u32 32, %s20
      %p295 = scmp.lt.s32.totalorder %s294, 63
      %s296 = scalar_select %p295, %s294, 63
      %s297 = smul.addr %s296, 8
      %s298 = scalar_lea.vmem %s0, %s297
      %p299 = pneg %p41
      %p300 = pneg %p38
      %p301 = pneg %p62
      %p302 = pneg %p59
      %p303 = pneg %p83
      %p304 = pneg %p80
      %p305 = pneg %p104
      %p306 = pneg %p101
      %p307 = pneg %p125
      %p308 = pneg %p122
      %p309 = pneg %p146
      %p310 = pneg %p143
      %p311 = pneg %p167
      %p312 = pneg %p164
      %p313 = pneg %p188
      %p314 = pneg %p185
      %p315 = pneg %p209
      %p316 = pneg %p206
      %p317 = pneg %p235
      %p318 = pneg %p232
      %s319 = smul.u32 32, %s20
      %p320 = scmp.lt.s32.totalorder %s319, 63
      %s321 = scalar_select %p320, %s319, 63
      %s322 = smul.addr %s321, 8
      %s323 = scalar_lea.vmem %s9, %s322
      %s324 = smul.u32 32, %s20
      %p325 = scmp.lt.s32.totalorder %s324, 63
      %s326 = scalar_select %p325, %s324, 63
      %s327 = smul.addr %s326, 8
      %s328 = scalar_lea.vmem %s0, %s327
      %s329 = smul.u32 32, %s20
      %s330 = smul.u32 32, %s20
      %p331 = scmp.lt.s32.totalorder %s330, 63
      %s332 = scalar_select %p331, %s330, 63
      %s333 = smul.addr %s332, 8
      %s334 = scalar_lea.vmem %s9, %s333
      %s335 = smul.u32 32, %s20
      %v337 = vld [vmem:[%s328] sm:$0xff]
      %v338 = vld [vmem:[%s328 + $0x8] sm:$0xff]
      %v339 = vld [vmem:[%s328 + $0x10] sm:$0xff]
      %v340 = vld [vmem:[%s328 + $0x18] sm:$0xff]
      %v341 = vld [vmem:[%s328 + $0x20] sm:$0xff]
      %v342 = vld [vmem:[%s328 + $0x28] sm:$0xff]
      %v343 = vld [vmem:[%s328 + $0x30] sm:$0xff]
      %v344 = vld [vmem:[%s328 + $0x38] sm:$0xff]
      %v345 = vld [vmem:[%s328 + $0x40] sm:$0xff]
      %v346 = vld [vmem:[%s328 + $0x48] sm:$0xff]
      %v347 = vld [vmem:[%s328 + $0x50] sm:$0xff]
      %v348 = vld [vmem:[%s328 + $0x58] sm:$0xff]
      %v349 = vld [vmem:[%s328 + $0x60] sm:$0xff]
      %v350 = vld [vmem:[%s328 + $0x68] sm:$0xff]
      %v351 = vld [vmem:[%s328 + $0x70] sm:$0xff]
      %v352 = vld [vmem:[%s328 + $0x78] sm:$0xff]
      %v353 = vld [vmem:[%s328 + $0x80] sm:$0xff]
      %v354 = vld [vmem:[%s328 + $0x88] sm:$0xff]
      %v355 = vld [vmem:[%s328 + $0x90] sm:$0xff]
      %v356 = vld [vmem:[%s328 + $0x98] sm:$0xff]
      %v357 = vld [vmem:[%s328 + $0xa0] sm:$0xff]
      %v358 = vld [vmem:[%s328 + $0xa8] sm:$0xff]
      %v359 = vld [vmem:[%s328 + $0xb0] sm:$0xff]
      %v360 = vld [vmem:[%s328 + $0xb8] sm:$0xff]
      %v361 = vld [vmem:[%s328 + $0xc0] sm:$0xff]
      %v362 = vld [vmem:[%s328 + $0xc8] sm:$0xff]
      %v363 = vld [vmem:[%s328 + $0xd0] sm:$0xff]
      %v364 = vld [vmem:[%s328 + $0xd8] sm:$0xff]
      %v365 = vld [vmem:[%s328 + $0xe0] sm:$0xff]
      %v366 = vld [vmem:[%s328 + $0xe8] sm:$0xff]
      %v367 = vld [vmem:[%s328 + $0xf0] sm:$0xff]
      %v368 = vld [vmem:[%s328 + $0xf8] sm:$0xff]
      %vm401 = vcmask 1040384
      %v402 = vrot.slane %v337, 7
      %v403 = vrot.slane %v338, 7
      %v404 = vsel %vm401, %v402, %v403
      %v405 = vrot.slane %v339, 7
      %v406 = vrot.slane %v340, 7
      %v407 = vsel %vm401, %v405, %v406
      %v408 = vrot.slane %v341, 7
      %v409 = vrot.slane %v342, 7
      %v410 = vsel %vm401, %v408, %v409
      %v411 = vrot.slane %v343, 7
      %v412 = vrot.slane %v344, 7
      %v413 = vsel %vm401, %v411, %v412
      %v414 = vrot.slane %v345, 7
      %v415 = vrot.slane %v346, 7
      %v416 = vsel %vm401, %v414, %v415
      %v417 = vrot.slane %v347, 7
      %v418 = vrot.slane %v348, 7
      %v419 = vsel %vm401, %v417, %v418
      %v420 = vrot.slane %v349, 7
      %v421 = vrot.slane %v350, 7
      %v422 = vsel %vm401, %v420, %v421
      %v423 = vrot.slane %v351, 7
      %v424 = vrot.slane %v352, 7
      %v425 = vsel %vm401, %v423, %v424
      %v426 = vrot.slane %v353, 7
      %v427 = vrot.slane %v354, 7
      %v428 = vsel %vm401, %v426, %v427
      %v429 = vrot.slane %v355, 7
      %v430 = vrot.slane %v356, 7
      %v431 = vsel %vm401, %v429, %v430
      %v432 = vrot.slane %v357, 7
      %v433 = vrot.slane %v358, 7
      %v434 = vsel %vm401, %v432, %v433
      %v435 = vrot.slane %v359, 7
      %v436 = vrot.slane %v360, 7
      %v437 = vsel %vm401, %v435, %v436
      %v438 = vrot.slane %v361, 7
      %v439 = vrot.slane %v362, 7
      %v440 = vsel %vm401, %v438, %v439
      %v441 = vrot.slane %v363, 7
      %v442 = vrot.slane %v364, 7
      %v443 = vsel %vm401, %v441, %v442
      %v444 = vrot.slane %v365, 7
      %v445 = vrot.slane %v366, 7
      %v446 = vsel %vm401, %v444, %v445
      %v447 = vrot.slane %v367, 7
      %v448 = vrot.slane %v368, 7
      %v449 = vsel %vm401, %v447, %v448
      %v482 = vsel %vm401, %v337, %v402
      %v483 = vsel %vm401, %v339, %v405
      %v484 = vsel %vm401, %v341, %v408
      %v485 = vsel %vm401, %v343, %v411
      %v486 = vsel %vm401, %v345, %v414
      %v487 = vsel %vm401, %v347, %v417
      %v488 = vsel %vm401, %v349, %v420
      %v489 = vsel %vm401, %v351, %v423
      %v490 = vsel %vm401, %v353, %v426
      %v491 = vsel %vm401, %v355, %v429
      %v492 = vsel %vm401, %v357, %v432
      %v493 = vsel %vm401, %v359, %v435
      %v494 = vsel %vm401, %v361, %v438
      %v495 = vsel %vm401, %v363, %v441
      %v496 = vsel %vm401, %v365, %v444
      %v497 = vsel %vm401, %v367, %v447
      %vm498 = vcmask 1046528
      %v499 = vrot.slane %v337, 1
      %v500 = vrot.slane %v338, 1
      %v501 = vsel %vm498, %v499, %v500
      %v502 = vrot.slane %v339, 1
      %v503 = vrot.slane %v340, 1
      %v504 = vsel %vm498, %v502, %v503
      %v505 = vrot.slane %v341, 1
      %v506 = vrot.slane %v342, 1
      %v507 = vsel %vm498, %v505, %v506
      %v508 = vrot.slane %v343, 1
      %v509 = vrot.slane %v344, 1
      %v510 = vsel %vm498, %v508, %v509
      %v511 = vrot.slane %v345, 1
      %v512 = vrot.slane %v346, 1
      %v513 = vsel %vm498, %v511, %v512
      %v514 = vrot.slane %v347, 1
      %v515 = vrot.slane %v348, 1
      %v516 = vsel %vm498, %v514, %v515
      %v517 = vrot.slane %v349, 1
      %v518 = vrot.slane %v350, 1
      %v519 = vsel %vm498, %v517, %v518
      %v520 = vrot.slane %v351, 1
      %v521 = vrot.slane %v352, 1
      %v522 = vsel %vm498, %v520, %v521
      %v523 = vrot.slane %v353, 1
      %v524 = vrot.slane %v354, 1
      %v525 = vsel %vm498, %v523, %v524
      %v526 = vrot.slane %v355, 1
      %v527 = vrot.slane %v356, 1
      %v528 = vsel %vm498, %v526, %v527
      %v529 = vrot.slane %v357, 1
      %v530 = vrot.slane %v358, 1
      %v531 = vsel %vm498, %v529, %v530
      %v532 = vrot.slane %v359, 1
      %v533 = vrot.slane %v360, 1
      %v534 = vsel %vm498, %v532, %v533
      %v535 = vrot.slane %v361, 1
      %v536 = vrot.slane %v362, 1
      %v537 = vsel %vm498, %v535, %v536
      %v538 = vrot.slane %v363, 1
      %v539 = vrot.slane %v364, 1
      %v540 = vsel %vm498, %v538, %v539
      %v541 = vrot.slane %v365, 1
      %v542 = vrot.slane %v366, 1
      %v543 = vsel %vm498, %v541, %v542
      %v544 = vrot.slane %v367, 1
      %v545 = vrot.slane %v368, 1
      %v546 = vsel %vm498, %v544, %v545
      %v579 = vsel %vm498, %v500, %v338
      %v580 = vsel %vm498, %v503, %v340
      %v581 = vsel %vm498, %v506, %v342
      %v582 = vsel %vm498, %v509, %v344
      %v583 = vsel %vm498, %v512, %v346
      %v584 = vsel %vm498, %v515, %v348
      %v585 = vsel %vm498, %v518, %v350
      %v586 = vsel %vm498, %v521, %v352
      %v587 = vsel %vm498, %v524, %v354
      %v588 = vsel %vm498, %v527, %v356
      %v589 = vsel %vm498, %v530, %v358
      %v590 = vsel %vm498, %v533, %v360
      %v591 = vsel %vm498, %v536, %v362
      %v592 = vsel %vm498, %v539, %v364
      %v593 = vsel %vm498, %v542, %v366
      %v594 = vsel %vm498, %v545, %v368
      %v595 = vmax.f32 %v482, %v337
      %v596 = vmax.f32 %v404, %v338
      %v597 = vmax.f32 %v483, %v339
      %v598 = vmax.f32 %v407, %v340
      %v599 = vmax.f32 %v484, %v341
      %v600 = vmax.f32 %v410, %v342
      %v601 = vmax.f32 %v485, %v343
      %v602 = vmax.f32 %v413, %v344
      %v603 = vmax.f32 %v486, %v345
      %v604 = vmax.f32 %v416, %v346
      %v605 = vmax.f32 %v487, %v347
      %v606 = vmax.f32 %v419, %v348
      %v607 = vmax.f32 %v488, %v349
      %v608 = vmax.f32 %v422, %v350
      %v609 = vmax.f32 %v489, %v351
      %v610 = vmax.f32 %v425, %v352
      %v611 = vmax.f32 %v490, %v353
      %v612 = vmax.f32 %v428, %v354
      %v613 = vmax.f32 %v491, %v355
      %v614 = vmax.f32 %v431, %v356
      %v615 = vmax.f32 %v492, %v357
      %v616 = vmax.f32 %v434, %v358
      %v617 = vmax.f32 %v493, %v359
      %v618 = vmax.f32 %v437, %v360
      %v619 = vmax.f32 %v494, %v361
      %v620 = vmax.f32 %v440, %v362
      %v621 = vmax.f32 %v495, %v363
      %v622 = vmax.f32 %v443, %v364
      %v623 = vmax.f32 %v496, %v365
      %v624 = vmax.f32 %v446, %v366
      %v625 = vmax.f32 %v497, %v367
      %v626 = vmax.f32 %v449, %v368
      %v627 = vmax.f32 %v595, %v501
      %v628 = vmax.f32 %v596, %v579
      %v629 = vmax.f32 %v597, %v504
      %v630 = vmax.f32 %v598, %v580
      %v631 = vmax.f32 %v599, %v507
      %v632 = vmax.f32 %v600, %v581
      %v633 = vmax.f32 %v601, %v510
      %v634 = vmax.f32 %v602, %v582
      %v635 = vmax.f32 %v603, %v513
      %v636 = vmax.f32 %v604, %v583
      %v637 = vmax.f32 %v605, %v516
      %v638 = vmax.f32 %v606, %v584
      %v639 = vmax.f32 %v607, %v519
      %v640 = vmax.f32 %v608, %v585
      %v641 = vmax.f32 %v609, %v522
      %v642 = vmax.f32 %v610, %v586
      %v643 = vmax.f32 %v611, %v525
      %v644 = vmax.f32 %v612, %v587
      %v645 = vmax.f32 %v613, %v528
      %v646 = vmax.f32 %v614, %v588
      %v647 = vmax.f32 %v615, %v531
      %v648 = vmax.f32 %v616, %v589
      %v649 = vmax.f32 %v617, %v534
      %v650 = vmax.f32 %v618, %v590
      %v651 = vmax.f32 %v619, %v537
      %v652 = vmax.f32 %v620, %v591
      %v653 = vmax.f32 %v621, %v540
      %v654 = vmax.f32 %v622, %v592
      %v655 = vmax.f32 %v623, %v543
      %v656 = vmax.f32 %v624, %v593
      %v657 = vmax.f32 %v625, %v546
      %v658 = vmax.f32 %v626, %v594
      %v659 = vmax.f32 %v627, %v629
      %v660 = vmax.f32 %v628, %v630
      %v661 = vmax.f32 %v629, %v631
      %v662 = vmax.f32 %v630, %v632
      %v663 = vmax.f32 %v631, %v633
      %v664 = vmax.f32 %v632, %v634
      %v665 = vmax.f32 %v633, %v635
      %v666 = vmax.f32 %v634, %v636
      %v667 = vmax.f32 %v635, %v637
      %v668 = vmax.f32 %v636, %v638
      %v669 = vmax.f32 %v637, %v639
      %v670 = vmax.f32 %v638, %v640
      %v671 = vmax.f32 %v639, %v641
      %v672 = vmax.f32 %v640, %v642
      %v673 = vmax.f32 %v641, %v643
      %v674 = vmax.f32 %v642, %v644
      %v675 = vmax.f32 %v643, %v645
      %v676 = vmax.f32 %v644, %v646
      %v677 = vmax.f32 %v645, %v647
      %v678 = vmax.f32 %v646, %v648
      %v679 = vmax.f32 %v647, %v649
      %v680 = vmax.f32 %v648, %v650
      %v681 = vmax.f32 %v649, %v651
      %v682 = vmax.f32 %v650, %v652
      %v683 = vmax.f32 %v651, %v653
      %v684 = vmax.f32 %v652, %v654
      %v685 = vmax.f32 %v653, %v655
      %v686 = vmax.f32 %v654, %v656
      %v687 = vmax.f32 %v655, %v657
      %v688 = vmax.f32 %v656, %v658
      %v689 = vmax.f32 %v659, %v631
      %v690 = vmax.f32 %v660, %v632
      %v691 = vmax.f32 %v661, %v633
      %v692 = vmax.f32 %v662, %v634
      %v693 = vmax.f32 %v663, %v635
      %v694 = vmax.f32 %v664, %v636
      %v695 = vmax.f32 %v665, %v637
      %v696 = vmax.f32 %v666, %v638
      %v697 = vmax.f32 %v667, %v639
      %v698 = vmax.f32 %v668, %v640
      %v699 = vmax.f32 %v669, %v641
      %v700 = vmax.f32 %v670, %v642
      %v701 = vmax.f32 %v671, %v643
      %v702 = vmax.f32 %v672, %v644
      %v703 = vmax.f32 %v673, %v645
      %v704 = vmax.f32 %v674, %v646
      %v705 = vmax.f32 %v675, %v647
      %v706 = vmax.f32 %v676, %v648
      %v707 = vmax.f32 %v677, %v649
      %v708 = vmax.f32 %v678, %v650
      %v709 = vmax.f32 %v679, %v651
      %v710 = vmax.f32 %v680, %v652
      %v711 = vmax.f32 %v681, %v653
      %v712 = vmax.f32 %v682, %v654
      %v713 = vmax.f32 %v683, %v655
      %v714 = vmax.f32 %v684, %v656
      %v715 = vmax.f32 %v685, %v657
      %v716 = vmax.f32 %v686, %v658
      %v717 = vmax.f32 %v687, %v657
      %v718 = vmax.f32 %v688, %v658
      %v719 = vpack.c.bf16 %v338, %v337
      %v720 = vpack.c.bf16 %v340, %v339
      %v721 = vpack.c.bf16 %v342, %v341
      %v722 = vpack.c.bf16 %v344, %v343
      %v723 = vpack.c.bf16 %v346, %v345
      %v724 = vpack.c.bf16 %v348, %v347
      %v725 = vpack.c.bf16 %v350, %v349
      %v726 = vpack.c.bf16 %v352, %v351
      %v727 = vpack.c.bf16 %v354, %v353
      %v728 = vpack.c.bf16 %v356, %v355
      %v729 = vpack.c.bf16 %v358, %v357
      %v730 = vpack.c.bf16 %v360, %v359
      %v731 = vpack.c.bf16 %v362, %v361
      %v732 = vpack.c.bf16 %v364, %v363
      %v733 = vpack.c.bf16 %v366, %v365
      %v734 = vpack.c.bf16 %v368, %v367
      %v735 = vld [vmem:[%s1] sm:$0x3]
      %v736 = vld [vmem:[%s2] sm:$0x1]
      %v738 = vlaneseq
      %v739 = vshrl.u32 %v738, 7
      %v740 = vsub.s32 0, %v739
      %v741 = vrot.slane %v736, %v740
      %vm743 = vcmask 31744
      %v745 = vsel %vm743, %v719, 0
      %v748 = vsel %vm743, %v720, 0
      %v751 = vsel %vm743, %v721, 0
      %v754 = vsel %vm743, %v722, 0
      %v757 = vsel %vm743, %v723, 0
      %v760 = vsel %vm743, %v724, 0
      %v763 = vsel %vm743, %v725, 0
      %v766 = vsel %vm743, %v726, 0
      %v769 = vsel %vm743, %v727, 0
      %v772 = vsel %vm743, %v728, 0
      %v775 = vsel %vm743, %v729, 0
      %v778 = vsel %vm743, %v730, 0
      %v781 = vsel %vm743, %v731, 0
      %v784 = vsel %vm743, %v732, 0
      %v787 = vsel %vm743, %v733, 0
      %v790 = vsel %vm743, %v734, 0
      %vm792 = vcmask 1041408
      %v794 = vsel %vm792, %v735, 0
      %796 = vmatprep.subr.bf16.mxu0 0
      %797 = vmatpush1.bf16.msra.mxu0 0
      %798 = vmatprep.subr.bf16.mxu0 0
      %799 = vmatpush1.bf16.msra.mxu0 0
      %800 = vmatprep.subr.bf16.mxu0 0
      %801 = vmatpush1.bf16.msra.mxu0 0
      %802 = vmatprep.subr.bf16.mxu0 0
      %803 = vmatpush1.bf16.msra.mxu0 0
      %804 = vmatprep.subr.bf16.mxu0 0
      %805 = vmatpush1.bf16.msra.mxu0 0
      %806 = vmatprep.subr.bf16.mxu0 0
      %807 = vmatpush1.bf16.msra.mxu0 0
      %808 = vmatprep.subr.bf16.mxu0 0
      %809 = vmatpush1.bf16.msra.mxu0 0
      %810 = vmatprep.subr.bf16.mxu0 0
      %811 = vmatpush1.bf16.msra.mxu0 %v794
      %812 = vmatprep.subr.bf16.mxu0 0
      %813 = vmatpush2.bf16.msra.mxu0 0
      %814 = vmatprep.subr.bf16.mxu0 0
      %815 = vmatpush2.bf16.msra.mxu0 0
      %816 = vmatprep.subr.bf16.mxu0 0
      %817 = vmatpush2.bf16.msra.mxu0 0
      %818 = vmatprep.subr.bf16.mxu0 0
      %819 = vmatpush2.bf16.msra.mxu0 0
      %820 = vmatprep.subr.bf16.mxu0 0
      %821 = vmatpush2.bf16.msra.mxu0 0
      %822 = vmatprep.subr.bf16.mxu0 0
      %823 = vmatpush2.bf16.msra.mxu0 0
      %824 = vmatprep.subr.bf16.mxu0 0
      %825 = vmatpush2.bf16.msra.mxu0 0
      %826 = vmatprep.subr.bf16.mxu0 0
      %827 = vmatpush2.bf16.msra.mxu0 0
      %828 = vmatprep.mubr.bf16.mxu0 0
      %829 = vmatmul.mubr.bf16.gmra.mxu0 %v745
      %v830 = vpop.f32.mrf.mxu0
      %v831 = vadd.f32 %v741, %v830
      %v832 = vpop.f32.mrf.mxu0
      %v833 = vpop.f32.mrf.mxu0
      %v834 = vadd.f32 %v741, %v833
      %v835 = vpop.f32.mrf.mxu0
      %836 = vmatprep.mubr.bf16.mxu0 0
      %837 = vmatmul.mubr.bf16.gmra.mxu0 %v748
      %v838 = vpop.f32.mrf.mxu0
      %v839 = vadd.f32 %v741, %v838
      %v840 = vpop.f32.mrf.mxu0
      %v841 = vpop.f32.mrf.mxu0
      %v842 = vadd.f32 %v741, %v841
      %v843 = vpop.f32.mrf.mxu0
      %844 = vmatprep.mubr.bf16.mxu0 0
      %845 = vmatmul.mubr.bf16.gmra.mxu0 %v751
      %v846 = vpop.f32.mrf.mxu0
      %v847 = vadd.f32 %v741, %v846
      %v848 = vpop.f32.mrf.mxu0
      %v849 = vpop.f32.mrf.mxu0
      %v850 = vadd.f32 %v741, %v849
      %v851 = vpop.f32.mrf.mxu0
      %852 = vmatprep.mubr.bf16.mxu0 0
      %853 = vmatmul.mubr.bf16.gmra.mxu0 %v754
      %v854 = vpop.f32.mrf.mxu0
      %v855 = vadd.f32 %v741, %v854
      %v856 = vpop.f32.mrf.mxu0
      %v857 = vpop.f32.mrf.mxu0
      %v858 = vadd.f32 %v741, %v857
      %v859 = vpop.f32.mrf.mxu0
      %860 = vmatprep.mubr.bf16.mxu0 0
      %861 = vmatmul.mubr.bf16.gmra.mxu0 %v757
      %v862 = vpop.f32.mrf.mxu0
      %v863 = vadd.f32 %v741, %v862
      %v864 = vpop.f32.mrf.mxu0
      %v865 = vpop.f32.mrf.mxu0
      %v866 = vadd.f32 %v741, %v865
      %v867 = vpop.f32.mrf.mxu0
      %868 = vmatprep.mubr.bf16.mxu0 0
      %869 = vmatmul.mubr.bf16.gmra.mxu0 %v760
      %v870 = vpop.f32.mrf.mxu0
      %v871 = vadd.f32 %v741, %v870
      %v872 = vpop.f32.mrf.mxu0
      %v873 = vpop.f32.mrf.mxu0
      %v874 = vadd.f32 %v741, %v873
      %v875 = vpop.f32.mrf.mxu0
      %876 = vmatprep.mubr.bf16.mxu0 0
      %877 = vmatmul.mubr.bf16.gmra.mxu0 %v763
      %v878 = vpop.f32.mrf.mxu0
      %v879 = vadd.f32 %v741, %v878
      %v880 = vpop.f32.mrf.mxu0
      %v881 = vpop.f32.mrf.mxu0
      %v882 = vadd.f32 %v741, %v881
      %v883 = vpop.f32.mrf.mxu0
      %884 = vmatprep.mubr.bf16.mxu0 0
      %885 = vmatmul.mubr.bf16.gmra.mxu0 %v766
      %v886 = vpop.f32.mrf.mxu0
      %v887 = vadd.f32 %v741, %v886
      %v888 = vpop.f32.mrf.mxu0
      %v889 = vpop.f32.mrf.mxu0
      %v890 = vadd.f32 %v741, %v889
      %v891 = vpop.f32.mrf.mxu0
      %892 = vmatprep.mubr.bf16.mxu0 0
      %893 = vmatmul.mubr.bf16.gmra.mxu0 %v769
      %v894 = vpop.f32.mrf.mxu0
      %v895 = vadd.f32 %v741, %v894
      %v896 = vpop.f32.mrf.mxu0
      %v897 = vpop.f32.mrf.mxu0
      %v898 = vadd.f32 %v741, %v897
      %v899 = vpop.f32.mrf.mxu0
      %900 = vmatprep.mubr.bf16.mxu0 0
      %901 = vmatmul.mubr.bf16.gmra.mxu0 %v772
      %v902 = vpop.f32.mrf.mxu0
      %v903 = vadd.f32 %v741, %v902
      %v904 = vpop.f32.mrf.mxu0
      %v905 = vpop.f32.mrf.mxu0
      %v906 = vadd.f32 %v741, %v905
      %v907 = vpop.f32.mrf.mxu0
      %908 = vmatprep.mubr.bf16.mxu0 0
      %909 = vmatmul.mubr.bf16.gmra.mxu0 %v775
      %v910 = vpop.f32.mrf.mxu0
      %v911 = vadd.f32 %v741, %v910
      %v912 = vpop.f32.mrf.mxu0
      %v913 = vpop.f32.mrf.mxu0
      %v914 = vadd.f32 %v741, %v913
      %v915 = vpop.f32.mrf.mxu0
      %916 = vmatprep.mubr.bf16.mxu0 0
      %917 = vmatmul.mubr.bf16.gmra.mxu0 %v778
      %v918 = vpop.f32.mrf.mxu0
      %v919 = vadd.f32 %v741, %v918
      %v920 = vpop.f32.mrf.mxu0
      %v921 = vpop.f32.mrf.mxu0
      %v922 = vadd.f32 %v741, %v921
      %v923 = vpop.f32.mrf.mxu0
      %924 = vmatprep.mubr.bf16.mxu0 0
      %925 = vmatmul.mubr.bf16.gmra.mxu0 %v781
      %v926 = vpop.f32.mrf.mxu0
      %v927 = vadd.f32 %v741, %v926
      %v928 = vpop.f32.mrf.mxu0
      %v929 = vpop.f32.mrf.mxu0
      %v930 = vadd.f32 %v741, %v929
      %v931 = vpop.f32.mrf.mxu0
      %932 = vmatprep.mubr.bf16.mxu0 0
      %933 = vmatmul.mubr.bf16.gmra.mxu0 %v784
      %v934 = vpop.f32.mrf.mxu0
      %v935 = vadd.f32 %v741, %v934
      %v936 = vpop.f32.mrf.mxu0
      %v937 = vpop.f32.mrf.mxu0
      %v938 = vadd.f32 %v741, %v937
      %v939 = vpop.f32.mrf.mxu0
      %940 = vmatprep.mubr.bf16.mxu0 0
      %941 = vmatmul.mubr.bf16.gmra.mxu0 %v787
      %v942 = vpop.f32.mrf.mxu0
      %v943 = vadd.f32 %v741, %v942
      %v944 = vpop.f32.mrf.mxu0
      %v945 = vpop.f32.mrf.mxu0
      %v946 = vadd.f32 %v741, %v945
      %v947 = vpop.f32.mrf.mxu0
      %948 = vmatprep.mubr.bf16.mxu0 0
      %949 = vmatmul.mubr.bf16.gmra.mxu0 %v790
      %v950 = vpop.f32.mrf.mxu0
      %v951 = vadd.f32 %v741, %v950
      %v952 = vpop.f32.mrf.mxu0
      %v953 = vpop.f32.mrf.mxu0
      %v954 = vadd.f32 %v741, %v953
      %v955 = vpop.f32.mrf.mxu0
      %956 = vdwg.mxu0
      %v957 = vmax.f32 %v831, 0.0
      %v958 = vmax.f32 %v834, 0.0
      %v959 = vmax.f32 %v839, 0.0
      %v960 = vmax.f32 %v842, 0.0
      %v961 = vmax.f32 %v847, 0.0
      %v962 = vmax.f32 %v850, 0.0
      %v963 = vmax.f32 %v855, 0.0
      %v964 = vmax.f32 %v858, 0.0
      %v965 = vmax.f32 %v863, 0.0
      %v966 = vmax.f32 %v866, 0.0
      %v967 = vmax.f32 %v871, 0.0
      %v968 = vmax.f32 %v874, 0.0
      %v969 = vmax.f32 %v879, 0.0
      %v970 = vmax.f32 %v882, 0.0
      %v971 = vmax.f32 %v887, 0.0
      %v972 = vmax.f32 %v890, 0.0
      %v973 = vmax.f32 %v895, 0.0
      %v974 = vmax.f32 %v898, 0.0
      %v975 = vmax.f32 %v903, 0.0
      %v976 = vmax.f32 %v906, 0.0
      %v977 = vmax.f32 %v911, 0.0
      %v978 = vmax.f32 %v914, 0.0
      %v979 = vmax.f32 %v919, 0.0
      %v980 = vmax.f32 %v922, 0.0
      %v981 = vmax.f32 %v927, 0.0
      %v982 = vmax.f32 %v930, 0.0
      %v983 = vmax.f32 %v935, 0.0
      %v984 = vmax.f32 %v938, 0.0
      %v985 = vmax.f32 %v943, 0.0
      %v986 = vmax.f32 %v946, 0.0
      %v987 = vmax.f32 %v951, 0.0
      %v988 = vmax.f32 %v954, 0.0
      %v989 = vpack.c.bf16 %v958, %v957
      %v990 = vpack.c.bf16 %v960, %v959
      %v991 = vpack.c.bf16 %v962, %v961
      %v992 = vpack.c.bf16 %v964, %v963
      %v993 = vpack.c.bf16 %v966, %v965
      %v994 = vpack.c.bf16 %v968, %v967
      %v995 = vpack.c.bf16 %v970, %v969
      %v996 = vpack.c.bf16 %v972, %v971
      %v997 = vpack.c.bf16 %v974, %v973
      %v998 = vpack.c.bf16 %v976, %v975
      %v999 = vpack.c.bf16 %v978, %v977
      %v1000 = vpack.c.bf16 %v980, %v979
      %v1001 = vpack.c.bf16 %v982, %v981
      %v1002 = vpack.c.bf16 %v984, %v983
      %v1003 = vpack.c.bf16 %v986, %v985
      %v1004 = vpack.c.bf16 %v988, %v987
      %v1005 = vpack.c.bf16 %v660, %v659
      %v1006 = vpack.c.bf16 %v690, %v689
      %v1007 = vpack.c.bf16 %v692, %v691
      %v1008 = vpack.c.bf16 %v694, %v693
      %v1009 = vpack.c.bf16 %v696, %v695
      %v1010 = vpack.c.bf16 %v698, %v697
      %v1011 = vpack.c.bf16 %v700, %v699
      %v1012 = vpack.c.bf16 %v702, %v701
      %v1013 = vpack.c.bf16 %v704, %v703
      %v1014 = vpack.c.bf16 %v706, %v705
      %v1015 = vpack.c.bf16 %v708, %v707
      %v1016 = vpack.c.bf16 %v710, %v709
      %v1017 = vpack.c.bf16 %v712, %v711
      %v1018 = vpack.c.bf16 %v714, %v713
      %v1019 = vpack.c.bf16 %v716, %v715
      %v1020 = vpack.c.bf16 %v718, %v717
      %v1021 = vld [vmem:[%s3] sm:$0x3]
      %v1022 = vld [vmem:[%s4] sm:$0x1]
      %v1024 = vlaneseq
      %v1025 = vshrl.u32 %v1024, 7
      %v1026 = vsub.s32 0, %v1025
      %v1027 = vrot.slane %v1022, %v1026
      %v1030 = vsel %vm743, %v1005, 0
      %v1033 = vsel %vm743, %v1006, 0
      %v1036 = vsel %vm743, %v1007, 0
      %v1039 = vsel %vm743, %v1008, 0
      %v1042 = vsel %vm743, %v1009, 0
      %v1045 = vsel %vm743, %v1010, 0
      %v1048 = vsel %vm743, %v1011, 0
      %v1051 = vsel %vm743, %v1012, 0
      %v1054 = vsel %vm743, %v1013, 0
      %v1057 = vsel %vm743, %v1014, 0
      %v1060 = vsel %vm743, %v1015, 0
      %v1063 = vsel %vm743, %v1016, 0
      %v1066 = vsel %vm743, %v1017, 0
      %v1069 = vsel %vm743, %v1018, 0
      %v1072 = vsel %vm743, %v1019, 0
      %v1075 = vsel %vm743, %v1020, 0
      %v1078 = vsel %vm792, %v1021, 0
      %1080 = vmatprep.subr.bf16.mxu0 0
      %1081 = vmatpush1.bf16.msra.mxu0 0
      %1082 = vmatprep.subr.bf16.mxu0 0
      %1083 = vmatpush1.bf16.msra.mxu0 0
      %1084 = vmatprep.subr.bf16.mxu0 0
      %1085 = vmatpush1.bf16.msra.mxu0 0
      %1086 = vmatprep.subr.bf16.mxu0 0
      %1087 = vmatpush1.bf16.msra.mxu0 0
      %1088 = vmatprep.subr.bf16.mxu0 0
      %1089 = vmatpush1.bf16.msra.mxu0 0
      %1090 = vmatprep.subr.bf16.mxu0 0
      %1091 = vmatpush1.bf16.msra.mxu0 0
      %1092 = vmatprep.subr.bf16.mxu0 0
      %1093 = vmatpush1.bf16.msra.mxu0 0
      %1094 = vmatprep.subr.bf16.mxu0 0
      %1095 = vmatpush1.bf16.msra.mxu0 %v1078
      %1096 = vmatprep.subr.bf16.mxu0 0
      %1097 = vmatpush2.bf16.msra.mxu0 0
      %1098 = vmatprep.subr.bf16.mxu0 0
      %1099 = vmatpush2.bf16.msra.mxu0 0
      %1100 = vmatprep.subr.bf16.mxu0 0
      %1101 = vmatpush2.bf16.msra.mxu0 0
      %1102 = vmatprep.subr.bf16.mxu0 0
      %1103 = vmatpush2.bf16.msra.mxu0 0
      %1104 = vmatprep.subr.bf16.mxu0 0
      %1105 = vmatpush2.bf16.msra.mxu0 0
      %1106 = vmatprep.subr.bf16.mxu0 0
      %1107 = vmatpush2.bf16.msra.mxu0 0
      %1108 = vmatprep.subr.bf16.mxu0 0
      %1109 = vmatpush2.bf16.msra.mxu0 0
      %1110 = vmatprep.subr.bf16.mxu0 0
      %1111 = vmatpush2.bf16.msra.mxu0 0
      %1112 = vmatprep.mubr.bf16.mxu0 0
      %1113 = vmatmul.mubr.bf16.gmra.mxu0 %v1030
      %v1114 = vpop.f32.mrf.mxu0
      %v1115 = vadd.f32 %v1027, %v1114
      %v1116 = vpop.f32.mrf.mxu0
      %v1117 = vpop.f32.mrf.mxu0
      %v1118 = vadd.f32 %v1027, %v1117
      %v1119 = vpop.f32.mrf.mxu0
      %1120 = vmatprep.mubr.bf16.mxu0 0
      %1121 = vmatmul.mubr.bf16.gmra.mxu0 %v1033
      %v1122 = vpop.f32.mrf.mxu0
      %v1123 = vadd.f32 %v1027, %v1122
      %v1124 = vpop.f32.mrf.mxu0
      %v1125 = vpop.f32.mrf.mxu0
      %v1126 = vadd.f32 %v1027, %v1125
      %v1127 = vpop.f32.mrf.mxu0
      %1128 = vmatprep.mubr.bf16.mxu0 0
      %1129 = vmatmul.mubr.bf16.gmra.mxu0 %v1036
      %v1130 = vpop.f32.mrf.mxu0
      %v1131 = vadd.f32 %v1027, %v1130
      %v1132 = vpop.f32.mrf.mxu0
      %v1133 = vpop.f32.mrf.mxu0
      %v1134 = vadd.f32 %v1027, %v1133
      %v1135 = vpop.f32.mrf.mxu0
      %1136 = vmatprep.mubr.bf16.mxu0 0
      %1137 = vmatmul.mubr.bf16.gmra.mxu0 %v1039
      %v1138 = vpop.f32.mrf.mxu0
      %v1139 = vadd.f32 %v1027, %v1138
      %v1140 = vpop.f32.mrf.mxu0
      %v1141 = vpop.f32.mrf.mxu0
      %v1142 = vadd.f32 %v1027, %v1141
      %v1143 = vpop.f32.mrf.mxu0
      %1144 = vmatprep.mubr.bf16.mxu0 0
      %1145 = vmatmul.mubr.bf16.gmra.mxu0 %v1042
      %v1146 = vpop.f32.mrf.mxu0
      %v1147 = vadd.f32 %v1027, %v1146
      %v1148 = vpop.f32.mrf.mxu0
      %v1149 = vpop.f32.mrf.mxu0
      %v1150 = vadd.f32 %v1027, %v1149
      %v1151 = vpop.f32.mrf.mxu0
      %1152 = vmatprep.mubr.bf16.mxu0 0
      %1153 = vmatmul.mubr.bf16.gmra.mxu0 %v1045
      %v1154 = vpop.f32.mrf.mxu0
      %v1155 = vadd.f32 %v1027, %v1154
      %v1156 = vpop.f32.mrf.mxu0
      %v1157 = vpop.f32.mrf.mxu0
      %v1158 = vadd.f32 %v1027, %v1157
      %v1159 = vpop.f32.mrf.mxu0
      %1160 = vmatprep.mubr.bf16.mxu0 0
      %1161 = vmatmul.mubr.bf16.gmra.mxu0 %v1048
      %v1162 = vpop.f32.mrf.mxu0
      %v1163 = vadd.f32 %v1027, %v1162
      %v1164 = vpop.f32.mrf.mxu0
      %v1165 = vpop.f32.mrf.mxu0
      %v1166 = vadd.f32 %v1027, %v1165
      %v1167 = vpop.f32.mrf.mxu0
      %1168 = vmatprep.mubr.bf16.mxu0 0
      %1169 = vmatmul.mubr.bf16.gmra.mxu0 %v1051
      %v1170 = vpop.f32.mrf.mxu0
      %v1171 = vadd.f32 %v1027, %v1170
      %v1172 = vpop.f32.mrf.mxu0
      %v1173 = vpop.f32.mrf.mxu0
      %v1174 = vadd.f32 %v1027, %v1173
      %v1175 = vpop.f32.mrf.mxu0
      %1176 = vmatprep.mubr.bf16.mxu0 0
      %1177 = vmatmul.mubr.bf16.gmra.mxu0 %v1054
      %v1178 = vpop.f32.mrf.mxu0
      %v1179 = vadd.f32 %v1027, %v1178
      %v1180 = vpop.f32.mrf.mxu0
      %v1181 = vpop.f32.mrf.mxu0
      %v1182 = vadd.f32 %v1027, %v1181
      %v1183 = vpop.f32.mrf.mxu0
      %1184 = vmatprep.mubr.bf16.mxu0 0
      %1185 = vmatmul.mubr.bf16.gmra.mxu0 %v1057
      %v1186 = vpop.f32.mrf.mxu0
      %v1187 = vadd.f32 %v1027, %v1186
      %v1188 = vpop.f32.mrf.mxu0
      %v1189 = vpop.f32.mrf.mxu0
      %v1190 = vadd.f32 %v1027, %v1189
      %v1191 = vpop.f32.mrf.mxu0
      %1192 = vmatprep.mubr.bf16.mxu0 0
      %1193 = vmatmul.mubr.bf16.gmra.mxu0 %v1060
      %v1194 = vpop.f32.mrf.mxu0
      %v1195 = vadd.f32 %v1027, %v1194
      %v1196 = vpop.f32.mrf.mxu0
      %v1197 = vpop.f32.mrf.mxu0
      %v1198 = vadd.f32 %v1027, %v1197
      %v1199 = vpop.f32.mrf.mxu0
      %1200 = vmatprep.mubr.bf16.mxu0 0
      %1201 = vmatmul.mubr.bf16.gmra.mxu0 %v1063
      %v1202 = vpop.f32.mrf.mxu0
      %v1203 = vadd.f32 %v1027, %v1202
      %v1204 = vpop.f32.mrf.mxu0
      %v1205 = vpop.f32.mrf.mxu0
      %v1206 = vadd.f32 %v1027, %v1205
      %v1207 = vpop.f32.mrf.mxu0
      %1208 = vmatprep.mubr.bf16.mxu0 0
      %1209 = vmatmul.mubr.bf16.gmra.mxu0 %v1066
      %v1210 = vpop.f32.mrf.mxu0
      %v1211 = vadd.f32 %v1027, %v1210
      %v1212 = vpop.f32.mrf.mxu0
      %v1213 = vpop.f32.mrf.mxu0
      %v1214 = vadd.f32 %v1027, %v1213
      %v1215 = vpop.f32.mrf.mxu0
      %1216 = vmatprep.mubr.bf16.mxu0 0
      %1217 = vmatmul.mubr.bf16.gmra.mxu0 %v1069
      %v1218 = vpop.f32.mrf.mxu0
      %v1219 = vadd.f32 %v1027, %v1218
      %v1220 = vpop.f32.mrf.mxu0
      %v1221 = vpop.f32.mrf.mxu0
      %v1222 = vadd.f32 %v1027, %v1221
      %v1223 = vpop.f32.mrf.mxu0
      %1224 = vmatprep.mubr.bf16.mxu0 0
      %1225 = vmatmul.mubr.bf16.gmra.mxu0 %v1072
      %v1226 = vpop.f32.mrf.mxu0
      %v1227 = vadd.f32 %v1027, %v1226
      %v1228 = vpop.f32.mrf.mxu0
      %v1229 = vpop.f32.mrf.mxu0
      %v1230 = vadd.f32 %v1027, %v1229
      %v1231 = vpop.f32.mrf.mxu0
      %1232 = vmatprep.mubr.bf16.mxu0 0
      %1233 = vmatmul.mubr.bf16.gmra.mxu0 %v1075
      %v1234 = vpop.f32.mrf.mxu0
      %v1235 = vadd.f32 %v1027, %v1234
      %v1236 = vpop.f32.mrf.mxu0
      %v1237 = vpop.f32.mrf.mxu0
      %v1238 = vadd.f32 %v1027, %v1237
      %v1239 = vpop.f32.mrf.mxu0
      %1240 = vdwg.mxu0
      %v1241 = vmax.f32 %v1115, 0.0
      %v1242 = vmax.f32 %v1118, 0.0
      %v1243 = vmax.f32 %v1123, 0.0
      %v1244 = vmax.f32 %v1126, 0.0
      %v1245 = vmax.f32 %v1131, 0.0
      %v1246 = vmax.f32 %v1134, 0.0
      %v1247 = vmax.f32 %v1139, 0.0
      %v1248 = vmax.f32 %v1142, 0.0
      %v1249 = vmax.f32 %v1147, 0.0
      %v1250 = vmax.f32 %v1150, 0.0
      %v1251 = vmax.f32 %v1155, 0.0
      %v1252 = vmax.f32 %v1158, 0.0
      %v1253 = vmax.f32 %v1163, 0.0
      %v1254 = vmax.f32 %v1166, 0.0
      %v1255 = vmax.f32 %v1171, 0.0
      %v1256 = vmax.f32 %v1174, 0.0
      %v1257 = vmax.f32 %v1179, 0.0
      %v1258 = vmax.f32 %v1182, 0.0
      %v1259 = vmax.f32 %v1187, 0.0
      %v1260 = vmax.f32 %v1190, 0.0
      %v1261 = vmax.f32 %v1195, 0.0
      %v1262 = vmax.f32 %v1198, 0.0
      %v1263 = vmax.f32 %v1203, 0.0
      %v1264 = vmax.f32 %v1206, 0.0
      %v1265 = vmax.f32 %v1211, 0.0
      %v1266 = vmax.f32 %v1214, 0.0
      %v1267 = vmax.f32 %v1219, 0.0
      %v1268 = vmax.f32 %v1222, 0.0
      %v1269 = vmax.f32 %v1227, 0.0
      %v1270 = vmax.f32 %v1230, 0.0
      %v1271 = vmax.f32 %v1235, 0.0
      %v1272 = vmax.f32 %v1238, 0.0
      %v1274 = vshrl.u32 %v989, 16
      %v1276 = vrot.slane %v1274, 7
      %v1277 = vshll.u32 %v989, 16
      %v1279 = vor.u32 %v1276, %v1277
      %v1281 = vshrl.u32 %v990, 16
      %v1283 = vrot.slane %v1281, 7
      %v1284 = vshll.u32 %v990, 16
      %v1286 = vor.u32 %v1283, %v1284
      %v1288 = vshrl.u32 %v991, 16
      %v1290 = vrot.slane %v1288, 7
      %v1291 = vshll.u32 %v991, 16
      %v1293 = vor.u32 %v1290, %v1291
      %v1295 = vshrl.u32 %v992, 16
      %v1297 = vrot.slane %v1295, 7
      %v1298 = vshll.u32 %v992, 16
      %v1300 = vor.u32 %v1297, %v1298
      %v1302 = vshrl.u32 %v993, 16
      %v1304 = vrot.slane %v1302, 7
      %v1305 = vshll.u32 %v993, 16
      %v1307 = vor.u32 %v1304, %v1305
      %v1309 = vshrl.u32 %v994, 16
      %v1311 = vrot.slane %v1309, 7
      %v1312 = vshll.u32 %v994, 16
      %v1314 = vor.u32 %v1311, %v1312
      %v1316 = vshrl.u32 %v995, 16
      %v1318 = vrot.slane %v1316, 7
      %v1319 = vshll.u32 %v995, 16
      %v1321 = vor.u32 %v1318, %v1319
      %v1323 = vshrl.u32 %v996, 16
      %v1325 = vrot.slane %v1323, 7
      %v1326 = vshll.u32 %v996, 16
      %v1328 = vor.u32 %v1325, %v1326
      %v1330 = vshrl.u32 %v997, 16
      %v1332 = vrot.slane %v1330, 7
      %v1333 = vshll.u32 %v997, 16
      %v1335 = vor.u32 %v1332, %v1333
      %v1337 = vshrl.u32 %v998, 16
      %v1339 = vrot.slane %v1337, 7
      %v1340 = vshll.u32 %v998, 16
      %v1342 = vor.u32 %v1339, %v1340
      %v1344 = vshrl.u32 %v999, 16
      %v1346 = vrot.slane %v1344, 7
      %v1347 = vshll.u32 %v999, 16
      %v1349 = vor.u32 %v1346, %v1347
      %v1351 = vshrl.u32 %v1000, 16
      %v1353 = vrot.slane %v1351, 7
      %v1354 = vshll.u32 %v1000, 16
      %v1356 = vor.u32 %v1353, %v1354
      %v1358 = vshrl.u32 %v1001, 16
      %v1360 = vrot.slane %v1358, 7
      %v1361 = vshll.u32 %v1001, 16
      %v1363 = vor.u32 %v1360, %v1361
      %v1365 = vshrl.u32 %v1002, 16
      %v1367 = vrot.slane %v1365, 7
      %v1368 = vshll.u32 %v1002, 16
      %v1370 = vor.u32 %v1367, %v1368
      %v1372 = vshrl.u32 %v1003, 16
      %v1374 = vrot.slane %v1372, 7
      %v1375 = vshll.u32 %v1003, 16
      %v1377 = vor.u32 %v1374, %v1375
      %v1379 = vshrl.u32 %v1004, 16
      %v1381 = vrot.slane %v1379, 7
      %v1382 = vshll.u32 %v1004, 16
      %v1384 = vor.u32 %v1381, %v1382
      %vm1417 = vcmask 1040384
      %vm1418 = vsmask.f32 256
      %vm1419 = vmand %vm1417, %vm1418
      %v1420 = vsel %vm1419, 0, %v1279
      %v1421 = vsel %vm1419, 0, %v1286
      %v1422 = vsel %vm1419, 0, %v1293
      %v1423 = vsel %vm1419, 0, %v1300
      %v1424 = vsel %vm1419, 0, %v1307
      %v1425 = vsel %vm1419, 0, %v1314
      %v1426 = vsel %vm1419, 0, %v1321
      %v1427 = vsel %vm1419, 0, %v1328
      %v1428 = vsel %vm1419, 0, %v1335
      %v1429 = vsel %vm1419, 0, %v1342
      %v1430 = vsel %vm1419, 0, %v1349
      %v1431 = vsel %vm1419, 0, %v1356
      %v1432 = vsel %vm1419, 0, %v1363
      %v1433 = vsel %vm1419, 0, %v1370
      %v1434 = vsel %vm1419, 0, %v1377
      %v1435 = vsel %vm1419, 0, %v1384
      %v1436 = vsel %vm1419, %v1276, 0
      %v1437 = vsel %vm1419, %v1283, 0
      %v1438 = vsel %vm1419, %v1290, 0
      %v1439 = vsel %vm1419, %v1297, 0
      %v1440 = vsel %vm1419, %v1304, 0
      %v1441 = vsel %vm1419, %v1311, 0
      %v1442 = vsel %vm1419, %v1318, 0
      %v1443 = vsel %vm1419, %v1325, 0
      %v1444 = vsel %vm1419, %v1332, 0
      %v1445 = vsel %vm1419, %v1339, 0
      %v1446 = vsel %vm1419, %v1346, 0
      %v1447 = vsel %vm1419, %v1353, 0
      %v1448 = vsel %vm1419, %v1360, 0
      %v1449 = vsel %vm1419, %v1367, 0
      %v1450 = vsel %vm1419, %v1374, 0
      %v1451 = vsel %vm1419, %v1381, 0
      %vm1452 = vsmask.f32 7424
      %v1454 = vshrl.u32 %v1420, 16
      %v1456 = vshll.u32 %v1420, 16
      %v1458 = vrot.slane %v1456, 1
      %v1459 = vor.u32 %v1454, %v1458
      %v1461 = vshll.u32 %v1436, 16
      %v1463 = vrot.slane %v1461, 1
      %v1464 = vsel %vm1452, %v1459, %v1463
      %v1466 = vshrl.u32 %v1421, 16
      %v1468 = vshll.u32 %v1421, 16
      %v1470 = vrot.slane %v1468, 1
      %v1471 = vor.u32 %v1466, %v1470
      %v1473 = vshll.u32 %v1437, 16
      %v1475 = vrot.slane %v1473, 1
      %v1476 = vsel %vm1452, %v1471, %v1475
      %v1478 = vshrl.u32 %v1422, 16
      %v1480 = vshll.u32 %v1422, 16
      %v1482 = vrot.slane %v1480, 1
      %v1483 = vor.u32 %v1478, %v1482
      %v1485 = vshll.u32 %v1438, 16
      %v1487 = vrot.slane %v1485, 1
      %v1488 = vsel %vm1452, %v1483, %v1487
      %v1490 = vshrl.u32 %v1423, 16
      %v1492 = vshll.u32 %v1423, 16
      %v1494 = vrot.slane %v1492, 1
      %v1495 = vor.u32 %v1490, %v1494
      %v1497 = vshll.u32 %v1439, 16
      %v1499 = vrot.slane %v1497, 1
      %v1500 = vsel %vm1452, %v1495, %v1499
      %v1502 = vshrl.u32 %v1424, 16
      %v1504 = vshll.u32 %v1424, 16
      %v1506 = vrot.slane %v1504, 1
      %v1507 = vor.u32 %v1502, %v1506
      %v1509 = vshll.u32 %v1440, 16
      %v1511 = vrot.slane %v1509, 1
      %v1512 = vsel %vm1452, %v1507, %v1511
      %v1514 = vshrl.u32 %v1425, 16
      %v1516 = vshll.u32 %v1425, 16
      %v1518 = vrot.slane %v1516, 1
      %v1519 = vor.u32 %v1514, %v1518
      %v1521 = vshll.u32 %v1441, 16
      %v1523 = vrot.slane %v1521, 1
      %v1524 = vsel %vm1452, %v1519, %v1523
      %v1526 = vshrl.u32 %v1426, 16
      %v1528 = vshll.u32 %v1426, 16
      %v1530 = vrot.slane %v1528, 1
      %v1531 = vor.u32 %v1526, %v1530
      %v1533 = vshll.u32 %v1442, 16
      %v1535 = vrot.slane %v1533, 1
      %v1536 = vsel %vm1452, %v1531, %v1535
      %v1538 = vshrl.u32 %v1427, 16
      %v1540 = vshll.u32 %v1427, 16
      %v1542 = vrot.slane %v1540, 1
      %v1543 = vor.u32 %v1538, %v1542
      %v1545 = vshll.u32 %v1443, 16
      %v1547 = vrot.slane %v1545, 1
      %v1548 = vsel %vm1452, %v1543, %v1547
      %v1550 = vshrl.u32 %v1428, 16
      %v1552 = vshll.u32 %v1428, 16
      %v1554 = vrot.slane %v1552, 1
      %v1555 = vor.u32 %v1550, %v1554
      %v1557 = vshll.u32 %v1444, 16
      %v1559 = vrot.slane %v1557, 1
      %v1560 = vsel %vm1452, %v1555, %v1559
      %v1562 = vshrl.u32 %v1429, 16
      %v1564 = vshll.u32 %v1429, 16
      %v1566 = vrot.slane %v1564, 1
      %v1567 = vor.u32 %v1562, %v1566
      %v1569 = vshll.u32 %v1445, 16
      %v1571 = vrot.slane %v1569, 1
      %v1572 = vsel %vm1452, %v1567, %v1571
      %v1574 = vshrl.u32 %v1430, 16
      %v1576 = vshll.u32 %v1430, 16
      %v1578 = vrot.slane %v1576, 1
      %v1579 = vor.u32 %v1574, %v1578
      %v1581 = vshll.u32 %v1446, 16
      %v1583 = vrot.slane %v1581, 1
      %v1584 = vsel %vm1452, %v1579, %v1583
      %v1586 = vshrl.u32 %v1431, 16
      %v1588 = vshll.u32 %v1431, 16
      %v1590 = vrot.slane %v1588, 1
      %v1591 = vor.u32 %v1586, %v1590
      %v1593 = vshll.u32 %v1447, 16
      %v1595 = vrot.slane %v1593, 1
      %v1596 = vsel %vm1452, %v1591, %v1595
      %v1598 = vshrl.u32 %v1432, 16
      %v1600 = vshll.u32 %v1432, 16
      %v1602 = vrot.slane %v1600, 1
      %v1603 = vor.u32 %v1598, %v1602
      %v1605 = vshll.u32 %v1448, 16
      %v1607 = vrot.slane %v1605, 1
      %v1608 = vsel %vm1452, %v1603, %v1607
      %v1610 = vshrl.u32 %v1433, 16
      %v1612 = vshll.u32 %v1433, 16
      %v1614 = vrot.slane %v1612, 1
      %v1615 = vor.u32 %v1610, %v1614
      %v1617 = vshll.u32 %v1449, 16
      %v1619 = vrot.slane %v1617, 1
      %v1620 = vsel %vm1452, %v1615, %v1619
      %v1622 = vshrl.u32 %v1434, 16
      %v1624 = vshll.u32 %v1434, 16
      %v1626 = vrot.slane %v1624, 1
      %v1627 = vor.u32 %v1622, %v1626
      %v1629 = vshll.u32 %v1450, 16
      %v1631 = vrot.slane %v1629, 1
      %v1632 = vsel %vm1452, %v1627, %v1631
      %v1634 = vshrl.u32 %v1435, 16
      %v1636 = vshll.u32 %v1435, 16
      %v1638 = vrot.slane %v1636, 1
      %v1639 = vor.u32 %v1634, %v1638
      %v1641 = vshll.u32 %v1451, 16
      %v1643 = vrot.slane %v1641, 1
      %v1644 = vsel %vm1452, %v1639, %v1643
      %1645 = vrot.lane.b32.xlu0 %v1464, 4
      %v1646 = vpop.permute.xlu0 %1645
      %1647 = vrot.lane.b32.xlu0 %v1476, 4
      %v1648 = vpop.permute.xlu0 %1647
      %1649 = vrot.lane.b32.xlu0 %v1488, 4
      %v1650 = vpop.permute.xlu0 %1649
      %1651 = vrot.lane.b32.xlu0 %v1500, 4
      %v1652 = vpop.permute.xlu0 %1651
      %1653 = vrot.lane.b32.xlu0 %v1512, 4
      %v1654 = vpop.permute.xlu0 %1653
      %1655 = vrot.lane.b32.xlu0 %v1524, 4
      %v1656 = vpop.permute.xlu0 %1655
      %1657 = vrot.lane.b32.xlu0 %v1536, 4
      %v1658 = vpop.permute.xlu0 %1657
      %1659 = vrot.lane.b32.xlu0 %v1548, 4
      %v1660 = vpop.permute.xlu0 %1659
      %1661 = vrot.lane.b32.xlu0 %v1560, 4
      %v1662 = vpop.permute.xlu0 %1661
      %1663 = vrot.lane.b32.xlu0 %v1572, 4
      %v1664 = vpop.permute.xlu0 %1663
      %1665 = vrot.lane.b32.xlu0 %v1584, 4
      %v1666 = vpop.permute.xlu0 %1665
      %1667 = vrot.lane.b32.xlu0 %v1596, 4
      %v1668 = vpop.permute.xlu0 %1667
      %1669 = vrot.lane.b32.xlu0 %v1608, 4
      %v1670 = vpop.permute.xlu0 %1669
      %1671 = vrot.lane.b32.xlu0 %v1620, 4
      %v1672 = vpop.permute.xlu0 %1671
      %1673 = vrot.lane.b32.xlu0 %v1632, 4
      %v1674 = vpop.permute.xlu0 %1673
      %1675 = vrot.lane.b32.xlu0 %v1644, 4
      %v1676 = vpop.permute.xlu0 %1675
      %vm1709 = vcmask 1046528
      %v1710 = vrot.slane %v1420, 1
      %v1711 = vrot.slane %v1436, 1
      %v1712 = vsel %vm1709, %v1710, %v1711
      %v1713 = vrot.slane %v1421, 1
      %v1714 = vrot.slane %v1437, 1
      %v1715 = vsel %vm1709, %v1713, %v1714
      %v1716 = vrot.slane %v1422, 1
      %v1717 = vrot.slane %v1438, 1
      %v1718 = vsel %vm1709, %v1716, %v1717
      %v1719 = vrot.slane %v1423, 1
      %v1720 = vrot.slane %v1439, 1
      %v1721 = vsel %vm1709, %v1719, %v1720
      %v1722 = vrot.slane %v1424, 1
      %v1723 = vrot.slane %v1440, 1
      %v1724 = vsel %vm1709, %v1722, %v1723
      %v1725 = vrot.slane %v1425, 1
      %v1726 = vrot.slane %v1441, 1
      %v1727 = vsel %vm1709, %v1725, %v1726
      %v1728 = vrot.slane %v1426, 1
      %v1729 = vrot.slane %v1442, 1
      %v1730 = vsel %vm1709, %v1728, %v1729
      %v1731 = vrot.slane %v1427, 1
      %v1732 = vrot.slane %v1443, 1
      %v1733 = vsel %vm1709, %v1731, %v1732
      %v1734 = vrot.slane %v1428, 1
      %v1735 = vrot.slane %v1444, 1
      %v1736 = vsel %vm1709, %v1734, %v1735
      %v1737 = vrot.slane %v1429, 1
      %v1738 = vrot.slane %v1445, 1
      %v1739 = vsel %vm1709, %v1737, %v1738
      %v1740 = vrot.slane %v1430, 1
      %v1741 = vrot.slane %v1446, 1
      %v1742 = vsel %vm1709, %v1740, %v1741
      %v1743 = vrot.slane %v1431, 1
      %v1744 = vrot.slane %v1447, 1
      %v1745 = vsel %vm1709, %v1743, %v1744
      %v1746 = vrot.slane %v1432, 1
      %v1747 = vrot.slane %v1448, 1
      %v1748 = vsel %vm1709, %v1746, %v1747
      %v1749 = vrot.slane %v1433, 1
      %v1750 = vrot.slane %v1449, 1
      %v1751 = vsel %vm1709, %v1749, %v1750
      %v1752 = vrot.slane %v1434, 1
      %v1753 = vrot.slane %v1450, 1
      %v1754 = vsel %vm1709, %v1752, %v1753
      %v1755 = vrot.slane %v1435, 1
      %v1756 = vrot.slane %v1451, 1
      %v1757 = vsel %vm1709, %v1755, %v1756
      %1758 = vrot.lane.b32.xlu0 %v1712, 8
      %v1759 = vpop.permute.xlu0 %1758
      %1760 = vrot.lane.b32.xlu0 %v1715, 8
      %v1761 = vpop.permute.xlu0 %1760
      %1762 = vrot.lane.b32.xlu0 %v1718, 8
      %v1763 = vpop.permute.xlu0 %1762
      %1764 = vrot.lane.b32.xlu0 %v1721, 8
      %v1765 = vpop.permute.xlu0 %1764
      %1766 = vrot.lane.b32.xlu0 %v1724, 8
      %v1767 = vpop.permute.xlu0 %1766
      %1768 = vrot.lane.b32.xlu0 %v1727, 8
      %v1769 = vpop.permute.xlu0 %1768
      %1770 = vrot.lane.b32.xlu0 %v1730, 8
      %v1771 = vpop.permute.xlu0 %1770
      %1772 = vrot.lane.b32.xlu0 %v1733, 8
      %v1773 = vpop.permute.xlu0 %1772
      %1774 = vrot.lane.b32.xlu0 %v1736, 8
      %v1775 = vpop.permute.xlu0 %1774
      %1776 = vrot.lane.b32.xlu0 %v1739, 8
      %v1777 = vpop.permute.xlu0 %1776
      %1778 = vrot.lane.b32.xlu0 %v1742, 8
      %v1779 = vpop.permute.xlu0 %1778
      %1780 = vrot.lane.b32.xlu0 %v1745, 8
      %v1781 = vpop.permute.xlu0 %1780
      %1782 = vrot.lane.b32.xlu0 %v1748, 8
      %v1783 = vpop.permute.xlu0 %1782
      %1784 = vrot.lane.b32.xlu0 %v1751, 8
      %v1785 = vpop.permute.xlu0 %1784
      %1786 = vrot.lane.b32.xlu0 %v1754, 8
      %v1787 = vpop.permute.xlu0 %1786
      %1788 = vrot.lane.b32.xlu0 %v1757, 8
      %v1789 = vpop.permute.xlu0 %1788
      %v1791 = vsel %vm743, %v1420, %v1646
      %v1793 = vsel %vm743, %v1421, %v1648
      %v1795 = vsel %vm743, %v1422, %v1650
      %v1797 = vsel %vm743, %v1423, %v1652
      %v1799 = vsel %vm743, %v1424, %v1654
      %v1801 = vsel %vm743, %v1425, %v1656
      %v1803 = vsel %vm743, %v1426, %v1658
      %v1805 = vsel %vm743, %v1427, %v1660
      %v1807 = vsel %vm743, %v1428, %v1662
      %v1809 = vsel %vm743, %v1429, %v1664
      %v1811 = vsel %vm743, %v1430, %v1666
      %v1813 = vsel %vm743, %v1431, %v1668
      %v1815 = vsel %vm743, %v1432, %v1670
      %v1817 = vsel %vm743, %v1433, %v1672
      %v1819 = vsel %vm743, %v1434, %v1674
      %v1821 = vsel %vm743, %v1435, %v1676
      %vm1822 = vcmask 64512
      %v1824 = vsel %vm1822, %v1791, %v1759
      %v1826 = vsel %vm1822, %v1793, %v1761
      %v1828 = vsel %vm1822, %v1795, %v1763
      %v1830 = vsel %vm1822, %v1797, %v1765
      %v1832 = vsel %vm1822, %v1799, %v1767
      %v1834 = vsel %vm1822, %v1801, %v1769
      %v1836 = vsel %vm1822, %v1803, %v1771
      %v1838 = vsel %vm1822, %v1805, %v1773
      %v1840 = vsel %vm1822, %v1807, %v1775
      %v1842 = vsel %vm1822, %v1809, %v1777
      %v1844 = vsel %vm1822, %v1811, %v1779
      %v1846 = vsel %vm1822, %v1813, %v1781
      %v1848 = vsel %vm1822, %v1815, %v1783
      %v1850 = vsel %vm1822, %v1817, %v1785
      %v1852 = vsel %vm1822, %v1819, %v1787
      %v1854 = vsel %vm1822, %v1821, %v1789
      %v1855 = vld [vmem:[%s5] sm:$0xf]
      %v1856 = vld [vmem:[%s5 + $0x4] sm:$0x3]
      %s1857 = scalar_lea.vmem %s5, 8
      %v1858 = vld [vmem:[%s1857] sm:$0xf]
      %v1859 = vld [vmem:[%s1857 + $0x4] sm:$0x3]
      %v1862 = vunpack.c.l.b16 %v1858
      %v1863 = vunpack.c.l.b16 %v1859
      %v1864 = vpack.c.b16 %v1863, %v1862
      %vm1865 = vcmask 97280
      %v1866 = vsel %vm1865, %v1824, 0
      %v1868 = vsel %vm1865, %v1826, 0
      %v1870 = vsel %vm1865, %v1828, 0
      %v1872 = vsel %vm1865, %v1830, 0
      %v1874 = vsel %vm1865, %v1832, 0
      %v1876 = vsel %vm1865, %v1834, 0
      %v1878 = vsel %vm1865, %v1836, 0
      %v1880 = vsel %vm1865, %v1838, 0
      %v1882 = vsel %vm1865, %v1840, 0
      %v1884 = vsel %vm1865, %v1842, 0
      %v1886 = vsel %vm1865, %v1844, 0
      %v1888 = vsel %vm1865, %v1846, 0
      %v1890 = vsel %vm1865, %v1848, 0
      %v1892 = vsel %vm1865, %v1850, 0
      %v1894 = vsel %vm1865, %v1852, 0
      %v1896 = vsel %vm1865, %v1854, 0
      %vm1898 = vcmask 1045504
      %v1900 = vsel %vm1898, %v1864, 0
      %1902 = vmatprep.subr.bf16.mxu0 0
      %1903 = vmatpush1.bf16.msra.mxu0 0
      %1904 = vmatprep.subr.bf16.mxu0 0
      %1905 = vmatpush1.bf16.msra.mxu0 0
      %1906 = vmatprep.subr.bf16.mxu0 0
      %1907 = vmatpush1.bf16.msra.mxu0 0
      %1908 = vmatprep.subr.bf16.mxu0 0
      %1909 = vmatpush1.bf16.msra.mxu0 0
      %1910 = vmatprep.subr.bf16.mxu0 0
      %1911 = vmatpush1.bf16.msra.mxu0 0
      %1912 = vmatprep.subr.bf16.mxu0 0
      %1913 = vmatpush1.bf16.msra.mxu0 0
      %1914 = vmatprep.subr.bf16.mxu0 0
      %1915 = vmatpush1.bf16.msra.mxu0 0
      %1916 = vmatprep.subr.bf16.mxu0 0
      %1917 = vmatpush1.bf16.msra.mxu0 %v1900
      %1918 = vmatprep.subr.bf16.mxu0 0
      %1919 = vmatpush2.bf16.msra.mxu0 0
      %1920 = vmatprep.subr.bf16.mxu0 0
      %1921 = vmatpush2.bf16.msra.mxu0 0
      %1922 = vmatprep.subr.bf16.mxu0 0
      %1923 = vmatpush2.bf16.msra.mxu0 0
      %1924 = vmatprep.subr.bf16.mxu0 0
      %1925 = vmatpush2.bf16.msra.mxu0 0
      %1926 = vmatprep.subr.bf16.mxu0 0
      %1927 = vmatpush2.bf16.msra.mxu0 0
      %1928 = vmatprep.subr.bf16.mxu0 0
      %1929 = vmatpush2.bf16.msra.mxu0 0
      %1930 = vmatprep.subr.bf16.mxu0 0
      %1931 = vmatpush2.bf16.msra.mxu0 0
      %1932 = vmatprep.subr.bf16.mxu0 0
      %1933 = vmatpush2.bf16.msra.mxu0 0
      %1934 = vmatprep.mubr.bf16.mxu0 0
      %1935 = vmatmul.mubr.bf16.gmra.mxu0 %v1866
      %v1936 = vpop.f32.mrf.mxu0
      %v1937 = vadd.f32 0.0, %v1936
      %v1938 = vpop.f32.mrf.mxu0
      %v1939 = vpop.f32.mrf.mxu0
      %v1940 = vadd.f32 0.0, %v1939
      %v1941 = vpop.f32.mrf.mxu0
      %1942 = vmatprep.mubr.bf16.mxu0 0
      %1943 = vmatmul.mubr.bf16.gmra.mxu0 %v1868
      %v1944 = vpop.f32.mrf.mxu0
      %v1945 = vadd.f32 0.0, %v1944
      %v1946 = vpop.f32.mrf.mxu0
      %v1947 = vpop.f32.mrf.mxu0
      %v1948 = vadd.f32 0.0, %v1947
      %v1949 = vpop.f32.mrf.mxu0
      %1950 = vmatprep.mubr.bf16.mxu0 0
      %1951 = vmatmul.mubr.bf16.gmra.mxu0 %v1870
      %v1952 = vpop.f32.mrf.mxu0
      %v1953 = vadd.f32 0.0, %v1952
      %v1954 = vpop.f32.mrf.mxu0
      %v1955 = vpop.f32.mrf.mxu0
      %v1956 = vadd.f32 0.0, %v1955
      %v1957 = vpop.f32.mrf.mxu0
      %1958 = vmatprep.mubr.bf16.mxu0 0
      %1959 = vmatmul.mubr.bf16.gmra.mxu0 %v1872
      %v1960 = vpop.f32.mrf.mxu0
      %v1961 = vadd.f32 0.0, %v1960
      %v1962 = vpop.f32.mrf.mxu0
      %v1963 = vpop.f32.mrf.mxu0
      %v1964 = vadd.f32 0.0, %v1963
      %v1965 = vpop.f32.mrf.mxu0
      %1966 = vmatprep.mubr.bf16.mxu0 0
      %1967 = vmatmul.mubr.bf16.gmra.mxu0 %v1874
      %v1968 = vpop.f32.mrf.mxu0
      %v1969 = vadd.f32 0.0, %v1968
      %v1970 = vpop.f32.mrf.mxu0
      %v1971 = vpop.f32.mrf.mxu0
      %v1972 = vadd.f32 0.0, %v1971
      %v1973 = vpop.f32.mrf.mxu0
      %1974 = vmatprep.mubr.bf16.mxu0 0
      %1975 = vmatmul.mubr.bf16.gmra.mxu0 %v1876
      %v1976 = vpop.f32.mrf.mxu0
      %v1977 = vadd.f32 0.0, %v1976
      %v1978 = vpop.f32.mrf.mxu0
      %v1979 = vpop.f32.mrf.mxu0
      %v1980 = vadd.f32 0.0, %v1979
      %v1981 = vpop.f32.mrf.mxu0
      %1982 = vmatprep.mubr.bf16.mxu0 0
      %1983 = vmatmul.mubr.bf16.gmra.mxu0 %v1878
      %v1984 = vpop.f32.mrf.mxu0
      %v1985 = vadd.f32 0.0, %v1984
      %v1986 = vpop.f32.mrf.mxu0
      %v1987 = vpop.f32.mrf.mxu0
      %v1988 = vadd.f32 0.0, %v1987
      %v1989 = vpop.f32.mrf.mxu0
      %1990 = vmatprep.mubr.bf16.mxu0 0
      %1991 = vmatmul.mubr.bf16.gmra.mxu0 %v1880
      %v1992 = vpop.f32.mrf.mxu0
      %v1993 = vadd.f32 0.0, %v1992
      %v1994 = vpop.f32.mrf.mxu0
      %v1995 = vpop.f32.mrf.mxu0
      %v1996 = vadd.f32 0.0, %v1995
      %v1997 = vpop.f32.mrf.mxu0
      %1998 = vmatprep.mubr.bf16.mxu0 0
      %1999 = vmatmul.mubr.bf16.gmra.mxu0 %v1882
      %v2000 = vpop.f32.mrf.mxu0
      %v2001 = vadd.f32 0.0, %v2000
      %v2002 = vpop.f32.mrf.mxu0
      %v2003 = vpop.f32.mrf.mxu0
      %v2004 = vadd.f32 0.0, %v2003
      %v2005 = vpop.f32.mrf.mxu0
      %2006 = vmatprep.mubr.bf16.mxu0 0
      %2007 = vmatmul.mubr.bf16.gmra.mxu0 %v1884
      %v2008 = vpop.f32.mrf.mxu0
      %v2009 = vadd.f32 0.0, %v2008
      %v2010 = vpop.f32.mrf.mxu0
      %v2011 = vpop.f32.mrf.mxu0
      %v2012 = vadd.f32 0.0, %v2011
      %v2013 = vpop.f32.mrf.mxu0
      %2014 = vmatprep.mubr.bf16.mxu0 0
      %2015 = vmatmul.mubr.bf16.gmra.mxu0 %v1886
      %v2016 = vpop.f32.mrf.mxu0
      %v2017 = vadd.f32 0.0, %v2016
      %v2018 = vpop.f32.mrf.mxu0
      %v2019 = vpop.f32.mrf.mxu0
      %v2020 = vadd.f32 0.0, %v2019
      %v2021 = vpop.f32.mrf.mxu0
      %2022 = vmatprep.mubr.bf16.mxu0 0
      %2023 = vmatmul.mubr.bf16.gmra.mxu0 %v1888
      %v2024 = vpop.f32.mrf.mxu0
      %v2025 = vadd.f32 0.0, %v2024
      %v2026 = vpop.f32.mrf.mxu0
      %v2027 = vpop.f32.mrf.mxu0
      %v2028 = vadd.f32 0.0, %v2027
      %v2029 = vpop.f32.mrf.mxu0
      %2030 = vmatprep.mubr.bf16.mxu0 0
      %2031 = vmatmul.mubr.bf16.gmra.mxu0 %v1890
      %v2032 = vpop.f32.mrf.mxu0
      %v2033 = vadd.f32 0.0, %v2032
      %v2034 = vpop.f32.mrf.mxu0
      %v2035 = vpop.f32.mrf.mxu0
      %v2036 = vadd.f32 0.0, %v2035
      %v2037 = vpop.f32.mrf.mxu0
      %2038 = vmatprep.mubr.bf16.mxu0 0
      %2039 = vmatmul.mubr.bf16.gmra.mxu0 %v1892
      %v2040 = vpop.f32.mrf.mxu0
      %v2041 = vadd.f32 0.0, %v2040
      %v2042 = vpop.f32.mrf.mxu0
      %v2043 = vpop.f32.mrf.mxu0
      %v2044 = vadd.f32 0.0, %v2043
      %v2045 = vpop.f32.mrf.mxu0
      %2046 = vmatprep.mubr.bf16.mxu0 0
      %2047 = vmatmul.mubr.bf16.gmra.mxu0 %v1894
      %v2048 = vpop.f32.mrf.mxu0
      %v2049 = vadd.f32 0.0, %v2048
      %v2050 = vpop.f32.mrf.mxu0
      %v2051 = vpop.f32.mrf.mxu0
      %v2052 = vadd.f32 0.0, %v2051
      %v2053 = vpop.f32.mrf.mxu0
      %2054 = vmatprep.mubr.bf16.mxu0 0
      %2055 = vmatmul.mubr.bf16.gmra.mxu0 %v1896
      %v2056 = vpop.f32.mrf.mxu0
      %v2057 = vadd.f32 0.0, %v2056
      %v2058 = vpop.f32.mrf.mxu0
      %v2059 = vpop.f32.mrf.mxu0
      %v2060 = vadd.f32 0.0, %v2059
      %v2061 = vpop.f32.mrf.mxu0
      %2062 = vdwg.mxu0
      %v2065 = vunpack.c.l.b16 %v1855
      %v2066 = vunpack.c.l.b16 %v1856
      %v2067 = vpack.c.b16 %v2066, %v2065
      %v2069 = vsel %vm1865, 0, 0
      %v2072 = vsel %vm1898, %v2067, 0
      %2074 = vmatprep.subr.bf16.mxu0 0
      %2075 = vmatpush1.bf16.msra.mxu0 0
      %2076 = vmatprep.subr.bf16.mxu0 0
      %2077 = vmatpush1.bf16.msra.mxu0 0
      %2078 = vmatprep.subr.bf16.mxu0 0
      %2079 = vmatpush1.bf16.msra.mxu0 0
      %2080 = vmatprep.subr.bf16.mxu0 0
      %2081 = vmatpush1.bf16.msra.mxu0 0
      %2082 = vmatprep.subr.bf16.mxu0 0
      %2083 = vmatpush1.bf16.msra.mxu0 0
      %2084 = vmatprep.subr.bf16.mxu0 0
      %2085 = vmatpush1.bf16.msra.mxu0 0
      %2086 = vmatprep.subr.bf16.mxu0 0
      %2087 = vmatpush1.bf16.msra.mxu0 0
      %2088 = vmatprep.subr.bf16.mxu0 0
      %2089 = vmatpush1.bf16.msra.mxu0 %v2072
      %2090 = vmatprep.subr.bf16.mxu0 0
      %2091 = vmatpush2.bf16.msra.mxu0 0
      %2092 = vmatprep.subr.bf16.mxu0 0
      %2093 = vmatpush2.bf16.msra.mxu0 0
      %2094 = vmatprep.subr.bf16.mxu0 0
      %2095 = vmatpush2.bf16.msra.mxu0 0
      %2096 = vmatprep.subr.bf16.mxu0 0
      %2097 = vmatpush2.bf16.msra.mxu0 0
      %2098 = vmatprep.subr.bf16.mxu0 0
      %2099 = vmatpush2.bf16.msra.mxu0 0
      %2100 = vmatprep.subr.bf16.mxu0 0
      %2101 = vmatpush2.bf16.msra.mxu0 0
      %2102 = vmatprep.subr.bf16.mxu0 0
      %2103 = vmatpush2.bf16.msra.mxu0 0
      %2104 = vmatprep.subr.bf16.mxu0 0
      %2105 = vmatpush2.bf16.msra.mxu0 0
      %2106 = vmatprep.mubr.bf16.mxu0 0
      %2107 = vmatmul.mubr.bf16.gmra.mxu0 %v2069
      %v2108 = vpop.f32.mrf.mxu0
      %v2109 = vadd.f32 %v1937, %v2108
      %v2110 = vpop.f32.mrf.mxu0
      %v2111 = vpop.f32.mrf.mxu0
      %v2112 = vadd.f32 %v1940, %v2111
      %v2113 = vpop.f32.mrf.mxu0
      %2114 = vmatprep.mubr.bf16.mxu0 0
      %2115 = vmatmul.mubr.bf16.gmra.mxu0 %v1866
      %v2116 = vpop.f32.mrf.mxu0
      %v2117 = vadd.f32 %v1945, %v2116
      %v2118 = vpop.f32.mrf.mxu0
      %v2119 = vpop.f32.mrf.mxu0
      %v2120 = vadd.f32 %v1948, %v2119
      %v2121 = vpop.f32.mrf.mxu0
      %2122 = vmatprep.mubr.bf16.mxu0 0
      %2123 = vmatmul.mubr.bf16.gmra.mxu0 %v1868
      %v2124 = vpop.f32.mrf.mxu0
      %v2125 = vadd.f32 %v1953, %v2124
      %v2126 = vpop.f32.mrf.mxu0
      %v2127 = vpop.f32.mrf.mxu0
      %v2128 = vadd.f32 %v1956, %v2127
      %v2129 = vpop.f32.mrf.mxu0
      %2130 = vmatprep.mubr.bf16.mxu0 0
      %2131 = vmatmul.mubr.bf16.gmra.mxu0 %v1870
      %v2132 = vpop.f32.mrf.mxu0
      %v2133 = vadd.f32 %v1961, %v2132
      %v2134 = vpop.f32.mrf.mxu0
      %v2135 = vpop.f32.mrf.mxu0
      %v2136 = vadd.f32 %v1964, %v2135
      %v2137 = vpop.f32.mrf.mxu0
      %2138 = vmatprep.mubr.bf16.mxu0 0
      %2139 = vmatmul.mubr.bf16.gmra.mxu0 %v1872
      %v2140 = vpop.f32.mrf.mxu0
      %v2141 = vadd.f32 %v1969, %v2140
      %v2142 = vpop.f32.mrf.mxu0
      %v2143 = vpop.f32.mrf.mxu0
      %v2144 = vadd.f32 %v1972, %v2143
      %v2145 = vpop.f32.mrf.mxu0
      %2146 = vmatprep.mubr.bf16.mxu0 0
      %2147 = vmatmul.mubr.bf16.gmra.mxu0 %v1874
      %v2148 = vpop.f32.mrf.mxu0
      %v2149 = vadd.f32 %v1977, %v2148
      %v2150 = vpop.f32.mrf.mxu0
      %v2151 = vpop.f32.mrf.mxu0
      %v2152 = vadd.f32 %v1980, %v2151
      %v2153 = vpop.f32.mrf.mxu0
      %2154 = vmatprep.mubr.bf16.mxu0 0
      %2155 = vmatmul.mubr.bf16.gmra.mxu0 %v1876
      %v2156 = vpop.f32.mrf.mxu0
      %v2157 = vadd.f32 %v1985, %v2156
      %v2158 = vpop.f32.mrf.mxu0
      %v2159 = vpop.f32.mrf.mxu0
      %v2160 = vadd.f32 %v1988, %v2159
      %v2161 = vpop.f32.mrf.mxu0
      %2162 = vmatprep.mubr.bf16.mxu0 0
      %2163 = vmatmul.mubr.bf16.gmra.mxu0 %v1878
      %v2164 = vpop.f32.mrf.mxu0
      %v2165 = vadd.f32 %v1993, %v2164
      %v2166 = vpop.f32.mrf.mxu0
      %v2167 = vpop.f32.mrf.mxu0
      %v2168 = vadd.f32 %v1996, %v2167
      %v2169 = vpop.f32.mrf.mxu0
      %2170 = vmatprep.mubr.bf16.mxu0 0
      %2171 = vmatmul.mubr.bf16.gmra.mxu0 %v1880
      %v2172 = vpop.f32.mrf.mxu0
      %v2173 = vadd.f32 %v2001, %v2172
      %v2174 = vpop.f32.mrf.mxu0
      %v2175 = vpop.f32.mrf.mxu0
      %v2176 = vadd.f32 %v2004, %v2175
      %v2177 = vpop.f32.mrf.mxu0
      %2178 = vmatprep.mubr.bf16.mxu0 0
      %2179 = vmatmul.mubr.bf16.gmra.mxu0 %v1882
      %v2180 = vpop.f32.mrf.mxu0
      %v2181 = vadd.f32 %v2009, %v2180
      %v2182 = vpop.f32.mrf.mxu0
      %v2183 = vpop.f32.mrf.mxu0
      %v2184 = vadd.f32 %v2012, %v2183
      %v2185 = vpop.f32.mrf.mxu0
      %2186 = vmatprep.mubr.bf16.mxu0 0
      %2187 = vmatmul.mubr.bf16.gmra.mxu0 %v1884
      %v2188 = vpop.f32.mrf.mxu0
      %v2189 = vadd.f32 %v2017, %v2188
      %v2190 = vpop.f32.mrf.mxu0
      %v2191 = vpop.f32.mrf.mxu0
      %v2192 = vadd.f32 %v2020, %v2191
      %v2193 = vpop.f32.mrf.mxu0
      %2194 = vmatprep.mubr.bf16.mxu0 0
      %2195 = vmatmul.mubr.bf16.gmra.mxu0 %v1886
      %v2196 = vpop.f32.mrf.mxu0
      %v2197 = vadd.f32 %v2025, %v2196
      %v2198 = vpop.f32.mrf.mxu0
      %v2199 = vpop.f32.mrf.mxu0
      %v2200 = vadd.f32 %v2028, %v2199
      %v2201 = vpop.f32.mrf.mxu0
      %2202 = vmatprep.mubr.bf16.mxu0 0
      %2203 = vmatmul.mubr.bf16.gmra.mxu0 %v1888
      %v2204 = vpop.f32.mrf.mxu0
      %v2205 = vadd.f32 %v2033, %v2204
      %v2206 = vpop.f32.mrf.mxu0
      %v2207 = vpop.f32.mrf.mxu0
      %v2208 = vadd.f32 %v2036, %v2207
      %v2209 = vpop.f32.mrf.mxu0
      %2210 = vmatprep.mubr.bf16.mxu0 0
      %2211 = vmatmul.mubr.bf16.gmra.mxu0 %v1890
      %v2212 = vpop.f32.mrf.mxu0
      %v2213 = vadd.f32 %v2041, %v2212
      %v2214 = vpop.f32.mrf.mxu0
      %v2215 = vpop.f32.mrf.mxu0
      %v2216 = vadd.f32 %v2044, %v2215
      %v2217 = vpop.f32.mrf.mxu0
      %2218 = vmatprep.mubr.bf16.mxu0 0
      %2219 = vmatmul.mubr.bf16.gmra.mxu0 %v1892
      %v2220 = vpop.f32.mrf.mxu0
      %v2221 = vadd.f32 %v2049, %v2220
      %v2222 = vpop.f32.mrf.mxu0
      %v2223 = vpop.f32.mrf.mxu0
      %v2224 = vadd.f32 %v2052, %v2223
      %v2225 = vpop.f32.mrf.mxu0
      %2226 = vmatprep.mubr.bf16.mxu0 0
      %2227 = vmatmul.mubr.bf16.gmra.mxu0 %v1894
      %v2228 = vpop.f32.mrf.mxu0
      %v2229 = vadd.f32 %v2057, %v2228
      %v2230 = vpop.f32.mrf.mxu0
      %v2231 = vpop.f32.mrf.mxu0
      %v2232 = vadd.f32 %v2060, %v2231
      %v2233 = vpop.f32.mrf.mxu0
      %2234 = vdwg.mxu0
      %s2235 = scalar_lea.vmem %s5, 16
      %v2236 = vld [vmem:[%s2235] sm:$0xf]
      %v2237 = vld [vmem:[%s2235 + $0x4] sm:$0x3]
      %v2240 = vunpack.c.l.b16 %v2236
      %v2241 = vunpack.c.l.b16 %v2237
      %v2242 = vpack.c.b16 %v2241, %v2240
      %v2244 = vsel %vm1898, %v2242, 0
      %2246 = vmatprep.subr.bf16.mxu0 0
      %2247 = vmatpush1.bf16.msra.mxu0 0
      %2248 = vmatprep.subr.bf16.mxu0 0
      %2249 = vmatpush1.bf16.msra.mxu0 0
      %2250 = vmatprep.subr.bf16.mxu0 0
      %2251 = vmatpush1.bf16.msra.mxu0 0
      %2252 = vmatprep.subr.bf16.mxu0 0
      %2253 = vmatpush1.bf16.msra.mxu0 0
      %2254 = vmatprep.subr.bf16.mxu0 0
      %2255 = vmatpush1.bf16.msra.mxu0 0
      %2256 = vmatprep.subr.bf16.mxu0 0
      %2257 = vmatpush1.bf16.msra.mxu0 0
      %2258 = vmatprep.subr.bf16.mxu0 0
      %2259 = vmatpush1.bf16.msra.mxu0 0
      %2260 = vmatprep.subr.bf16.mxu0 0
      %2261 = vmatpush1.bf16.msra.mxu0 %v2244
      %2262 = vmatprep.subr.bf16.mxu0 0
      %2263 = vmatpush2.bf16.msra.mxu0 0
      %2264 = vmatprep.subr.bf16.mxu0 0
      %2265 = vmatpush2.bf16.msra.mxu0 0
      %2266 = vmatprep.subr.bf16.mxu0 0
      %2267 = vmatpush2.bf16.msra.mxu0 0
      %2268 = vmatprep.subr.bf16.mxu0 0
      %2269 = vmatpush2.bf16.msra.mxu0 0
      %2270 = vmatprep.subr.bf16.mxu0 0
      %2271 = vmatpush2.bf16.msra.mxu0 0
      %2272 = vmatprep.subr.bf16.mxu0 0
      %2273 = vmatpush2.bf16.msra.mxu0 0
      %2274 = vmatprep.subr.bf16.mxu0 0
      %2275 = vmatpush2.bf16.msra.mxu0 0
      %2276 = vmatprep.subr.bf16.mxu0 0
      %2277 = vmatpush2.bf16.msra.mxu0 0
      %2278 = vmatprep.mubr.bf16.mxu0 0
      %2279 = vmatmul.mubr.bf16.gmra.mxu0 %v1868
      %v2280 = vpop.f32.mrf.mxu0
      %v2281 = vadd.f32 0.0, %v2280
      %v2282 = vpop.f32.mrf.mxu0
      %v2283 = vpop.f32.mrf.mxu0
      %v2284 = vadd.f32 0.0, %v2283
      %v2285 = vpop.f32.mrf.mxu0
      %2286 = vmatprep.mubr.bf16.mxu0 0
      %2287 = vmatmul.mubr.bf16.gmra.mxu0 %v1870
      %v2288 = vpop.f32.mrf.mxu0
      %v2289 = vadd.f32 0.0, %v2288
      %v2290 = vpop.f32.mrf.mxu0
      %v2291 = vpop.f32.mrf.mxu0
      %v2292 = vadd.f32 0.0, %v2291
      %v2293 = vpop.f32.mrf.mxu0
      %2294 = vmatprep.mubr.bf16.mxu0 0
      %2295 = vmatmul.mubr.bf16.gmra.mxu0 %v1872
      %v2296 = vpop.f32.mrf.mxu0
      %v2297 = vadd.f32 0.0, %v2296
      %v2298 = vpop.f32.mrf.mxu0
      %v2299 = vpop.f32.mrf.mxu0
      %v2300 = vadd.f32 0.0, %v2299
      %v2301 = vpop.f32.mrf.mxu0
      %2302 = vmatprep.mubr.bf16.mxu0 0
      %2303 = vmatmul.mubr.bf16.gmra.mxu0 %v1874
      %v2304 = vpop.f32.mrf.mxu0
      %v2305 = vadd.f32 0.0, %v2304
      %v2306 = vpop.f32.mrf.mxu0
      %v2307 = vpop.f32.mrf.mxu0
      %v2308 = vadd.f32 0.0, %v2307
      %v2309 = vpop.f32.mrf.mxu0
      %2310 = vmatprep.mubr.bf16.mxu0 0
      %2311 = vmatmul.mubr.bf16.gmra.mxu0 %v1876
      %v2312 = vpop.f32.mrf.mxu0
      %v2313 = vadd.f32 0.0, %v2312
      %v2314 = vpop.f32.mrf.mxu0
      %v2315 = vpop.f32.mrf.mxu0
      %v2316 = vadd.f32 0.0, %v2315
      %v2317 = vpop.f32.mrf.mxu0
      %2318 = vmatprep.mubr.bf16.mxu0 0
      %2319 = vmatmul.mubr.bf16.gmra.mxu0 %v1878
      %v2320 = vpop.f32.mrf.mxu0
      %v2321 = vadd.f32 0.0, %v2320
      %v2322 = vpop.f32.mrf.mxu0
      %v2323 = vpop.f32.mrf.mxu0
      %v2324 = vadd.f32 0.0, %v2323
      %v2325 = vpop.f32.mrf.mxu0
      %2326 = vmatprep.mubr.bf16.mxu0 0
      %2327 = vmatmul.mubr.bf16.gmra.mxu0 %v1880
      %v2328 = vpop.f32.mrf.mxu0
      %v2329 = vadd.f32 0.0, %v2328
      %v2330 = vpop.f32.mrf.mxu0
      %v2331 = vpop.f32.mrf.mxu0
      %v2332 = vadd.f32 0.0, %v2331
      %v2333 = vpop.f32.mrf.mxu0
      %2334 = vmatprep.mubr.bf16.mxu0 0
      %2335 = vmatmul.mubr.bf16.gmra.mxu0 %v1882
      %v2336 = vpop.f32.mrf.mxu0
      %v2337 = vadd.f32 0.0, %v2336
      %v2338 = vpop.f32.mrf.mxu0
      %v2339 = vpop.f32.mrf.mxu0
      %v2340 = vadd.f32 0.0, %v2339
      %v2341 = vpop.f32.mrf.mxu0
      %2342 = vmatprep.mubr.bf16.mxu0 0
      %2343 = vmatmul.mubr.bf16.gmra.mxu0 %v1884
      %v2344 = vpop.f32.mrf.mxu0
      %v2345 = vadd.f32 0.0, %v2344
      %v2346 = vpop.f32.mrf.mxu0
      %v2347 = vpop.f32.mrf.mxu0
      %v2348 = vadd.f32 0.0, %v2347
      %v2349 = vpop.f32.mrf.mxu0
      %2350 = vmatprep.mubr.bf16.mxu0 0
      %2351 = vmatmul.mubr.bf16.gmra.mxu0 %v1886
      %v2352 = vpop.f32.mrf.mxu0
      %v2353 = vadd.f32 0.0, %v2352
      %v2354 = vpop.f32.mrf.mxu0
      %v2355 = vpop.f32.mrf.mxu0
      %v2356 = vadd.f32 0.0, %v2355
      %v2357 = vpop.f32.mrf.mxu0
      %2358 = vmatprep.mubr.bf16.mxu0 0
      %2359 = vmatmul.mubr.bf16.gmra.mxu0 %v1888
      %v2360 = vpop.f32.mrf.mxu0
      %v2361 = vadd.f32 0.0, %v2360
      %v2362 = vpop.f32.mrf.mxu0
      %v2363 = vpop.f32.mrf.mxu0
      %v2364 = vadd.f32 0.0, %v2363
      %v2365 = vpop.f32.mrf.mxu0
      %2366 = vmatprep.mubr.bf16.mxu0 0
      %2367 = vmatmul.mubr.bf16.gmra.mxu0 %v1890
      %v2368 = vpop.f32.mrf.mxu0
      %v2369 = vadd.f32 0.0, %v2368
      %v2370 = vpop.f32.mrf.mxu0
      %v2371 = vpop.f32.mrf.mxu0
      %v2372 = vadd.f32 0.0, %v2371
      %v2373 = vpop.f32.mrf.mxu0
      %2374 = vmatprep.mubr.bf16.mxu0 0
      %2375 = vmatmul.mubr.bf16.gmra.mxu0 %v1892
      %v2376 = vpop.f32.mrf.mxu0
      %v2377 = vadd.f32 0.0, %v2376
      %v2378 = vpop.f32.mrf.mxu0
      %v2379 = vpop.f32.mrf.mxu0
      %v2380 = vadd.f32 0.0, %v2379
      %v2381 = vpop.f32.mrf.mxu0
      %2382 = vmatprep.mubr.bf16.mxu0 0
      %2383 = vmatmul.mubr.bf16.gmra.mxu0 %v1894
      %v2384 = vpop.f32.mrf.mxu0
      %v2385 = vadd.f32 0.0, %v2384
      %v2386 = vpop.f32.mrf.mxu0
      %v2387 = vpop.f32.mrf.mxu0
      %v2388 = vadd.f32 0.0, %v2387
      %v2389 = vpop.f32.mrf.mxu0
      %2390 = vmatprep.mubr.bf16.mxu0 0
      %2391 = vmatmul.mubr.bf16.gmra.mxu0 %v1896
      %v2392 = vpop.f32.mrf.mxu0
      %v2393 = vadd.f32 0.0, %v2392
      %v2394 = vpop.f32.mrf.mxu0
      %v2395 = vpop.f32.mrf.mxu0
      %v2396 = vadd.f32 0.0, %v2395
      %v2397 = vpop.f32.mrf.mxu0
      %2398 = vmatprep.mubr.bf16.mxu0 0
      %2399 = vmatmul.mubr.bf16.gmra.mxu0 %v2069
      %v2400 = vpop.f32.mrf.mxu0
      %v2401 = vadd.f32 0.0, %v2400
      %v2402 = vpop.f32.mrf.mxu0
      %v2403 = vpop.f32.mrf.mxu0
      %v2404 = vadd.f32 0.0, %v2403
      %v2405 = vpop.f32.mrf.mxu0
      %2406 = vdwg.mxu0
      %v2407 = vadd.f32 %v2109, %v2281
      %v2408 = vadd.f32 %v2112, %v2284
      %v2409 = vadd.f32 %v2117, %v2289
      %v2410 = vadd.f32 %v2120, %v2292
      %v2411 = vadd.f32 %v2125, %v2297
      %v2412 = vadd.f32 %v2128, %v2300
      %v2413 = vadd.f32 %v2133, %v2305
      %v2414 = vadd.f32 %v2136, %v2308
      %v2415 = vadd.f32 %v2141, %v2313
      %v2416 = vadd.f32 %v2144, %v2316
      %v2417 = vadd.f32 %v2149, %v2321
      %v2418 = vadd.f32 %v2152, %v2324
      %v2419 = vadd.f32 %v2157, %v2329
      %v2420 = vadd.f32 %v2160, %v2332
      %v2421 = vadd.f32 %v2165, %v2337
      %v2422 = vadd.f32 %v2168, %v2340
      %v2423 = vadd.f32 %v2173, %v2345
      %v2424 = vadd.f32 %v2176, %v2348
      %v2425 = vadd.f32 %v2181, %v2353
      %v2426 = vadd.f32 %v2184, %v2356
      %v2427 = vadd.f32 %v2189, %v2361
      %v2428 = vadd.f32 %v2192, %v2364
      %v2429 = vadd.f32 %v2197, %v2369
      %v2430 = vadd.f32 %v2200, %v2372
      %v2431 = vadd.f32 %v2205, %v2377
      %v2432 = vadd.f32 %v2208, %v2380
      %v2433 = vadd.f32 %v2213, %v2385
      %v2434 = vadd.f32 %v2216, %v2388
      %v2435 = vadd.f32 %v2221, %v2393
      %v2436 = vadd.f32 %v2224, %v2396
      %v2437 = vadd.f32 %v2229, %v2401
      %v2438 = vadd.f32 %v2232, %v2404
      %v2439 = vld [vmem:[%s6] sm:$0x1]
      %v2441 = vlaneseq
      %v2442 = vshrl.u32 %v2441, 7
      %v2443 = vsub.s32 0, %v2442
      %v2444 = vrot.slane %v2439, %v2443
      %v2446 = vadd.f32 %v2407, %v2444
      %v2447 = vadd.f32 %v2408, %v2444
      %v2448 = vadd.f32 %v2409, %v2444
      %v2449 = vadd.f32 %v2410, %v2444
      %v2450 = vadd.f32 %v2411, %v2444
      %v2451 = vadd.f32 %v2412, %v2444
      %v2452 = vadd.f32 %v2413, %v2444
      %v2453 = vadd.f32 %v2414, %v2444
      %v2454 = vadd.f32 %v2415, %v2444
      %v2455 = vadd.f32 %v2416, %v2444
      %v2456 = vadd.f32 %v2417, %v2444
      %v2457 = vadd.f32 %v2418, %v2444
      %v2458 = vadd.f32 %v2419, %v2444
      %v2459 = vadd.f32 %v2420, %v2444
      %v2460 = vadd.f32 %v2421, %v2444
      %v2461 = vadd.f32 %v2422, %v2444
      %v2462 = vadd.f32 %v2423, %v2444
      %v2463 = vadd.f32 %v2424, %v2444
      %v2464 = vadd.f32 %v2425, %v2444
      %v2465 = vadd.f32 %v2426, %v2444
      %v2466 = vadd.f32 %v2427, %v2444
      %v2467 = vadd.f32 %v2428, %v2444
      %v2468 = vadd.f32 %v2429, %v2444
      %v2469 = vadd.f32 %v2430, %v2444
      %v2470 = vadd.f32 %v2431, %v2444
      %v2471 = vadd.f32 %v2432, %v2444
      %v2472 = vadd.f32 %v2433, %v2444
      %v2473 = vadd.f32 %v2434, %v2444
      %v2474 = vadd.f32 %v2435, %v2444
      %v2475 = vadd.f32 %v2436, %v2444
      %v2476 = vadd.f32 %v2437, %v2444
      %v2477 = vadd.f32 %v2438, %v2444
      %v2478 = vmax.f32 %v2446, 0.0
      %v2479 = vmax.f32 %v2447, 0.0
      %v2480 = vmax.f32 %v2448, 0.0
      %v2481 = vmax.f32 %v2449, 0.0
      %v2482 = vmax.f32 %v2450, 0.0
      %v2483 = vmax.f32 %v2451, 0.0
      %v2484 = vmax.f32 %v2452, 0.0
      %v2485 = vmax.f32 %v2453, 0.0
      %v2486 = vmax.f32 %v2454, 0.0
      %v2487 = vmax.f32 %v2455, 0.0
      %v2488 = vmax.f32 %v2456, 0.0
      %v2489 = vmax.f32 %v2457, 0.0
      %v2490 = vmax.f32 %v2458, 0.0
      %v2491 = vmax.f32 %v2459, 0.0
      %v2492 = vmax.f32 %v2460, 0.0
      %v2493 = vmax.f32 %v2461, 0.0
      %v2494 = vmax.f32 %v2462, 0.0
      %v2495 = vmax.f32 %v2463, 0.0
      %v2496 = vmax.f32 %v2464, 0.0
      %v2497 = vmax.f32 %v2465, 0.0
      %v2498 = vmax.f32 %v2466, 0.0
      %v2499 = vmax.f32 %v2467, 0.0
      %v2500 = vmax.f32 %v2468, 0.0
      %v2501 = vmax.f32 %v2469, 0.0
      %v2502 = vmax.f32 %v2470, 0.0
      %v2503 = vmax.f32 %v2471, 0.0
      %v2504 = vmax.f32 %v2472, 0.0
      %v2505 = vmax.f32 %v2473, 0.0
      %v2506 = vmax.f32 %v2474, 0.0
      %v2507 = vmax.f32 %v2475, 0.0
      %v2508 = vmax.f32 %v2476, 0.0
      %v2509 = vmax.f32 %v2477, 0.0
      %v2526 = vrot.slane %v989, 7
      %v2527 = vrot.slane %v990, 7
      %v2528 = vrot.slane %v991, 7
      %v2529 = vrot.slane %v992, 7
      %v2530 = vrot.slane %v993, 7
      %v2531 = vrot.slane %v994, 7
      %v2532 = vrot.slane %v995, 7
      %v2533 = vrot.slane %v996, 7
      %v2534 = vrot.slane %v997, 7
      %v2535 = vrot.slane %v998, 7
      %v2536 = vrot.slane %v999, 7
      %v2537 = vrot.slane %v1000, 7
      %v2538 = vrot.slane %v1001, 7
      %v2539 = vrot.slane %v1002, 7
      %v2540 = vrot.slane %v1003, 7
      %v2541 = vrot.slane %v1004, 7
      %2542 = vrot.lane.b32.xlu0 %v2526, 124
      %v2543 = vpop.permute.xlu0 %2542
      %2544 = vrot.lane.b32.xlu0 %v2527, 124
      %v2545 = vpop.permute.xlu0 %2544
      %2546 = vrot.lane.b32.xlu0 %v2528, 124
      %v2547 = vpop.permute.xlu0 %2546
      %2548 = vrot.lane.b32.xlu0 %v2529, 124
      %v2549 = vpop.permute.xlu0 %2548
      %2550 = vrot.lane.b32.xlu0 %v2530, 124
      %v2551 = vpop.permute.xlu0 %2550
      %2552 = vrot.lane.b32.xlu0 %v2531, 124
      %v2553 = vpop.permute.xlu0 %2552
      %2554 = vrot.lane.b32.xlu0 %v2532, 124
      %v2555 = vpop.permute.xlu0 %2554
      %2556 = vrot.lane.b32.xlu0 %v2533, 124
      %v2557 = vpop.permute.xlu0 %2556
      %2558 = vrot.lane.b32.xlu0 %v2534, 124
      %v2559 = vpop.permute.xlu0 %2558
      %2560 = vrot.lane.b32.xlu0 %v2535, 124
      %v2561 = vpop.permute.xlu0 %2560
      %2562 = vrot.lane.b32.xlu0 %v2536, 124
      %v2563 = vpop.permute.xlu0 %2562
      %2564 = vrot.lane.b32.xlu0 %v2537, 124
      %v2565 = vpop.permute.xlu0 %2564
      %2566 = vrot.lane.b32.xlu0 %v2538, 124
      %v2567 = vpop.permute.xlu0 %2566
      %2568 = vrot.lane.b32.xlu0 %v2539, 124
      %v2569 = vpop.permute.xlu0 %2568
      %2570 = vrot.lane.b32.xlu0 %v2540, 124
      %v2571 = vpop.permute.xlu0 %2570
      %2572 = vrot.lane.b32.xlu0 %v2541, 124
      %v2573 = vpop.permute.xlu0 %2572
      %v2575 = vsel %vm401, 0, %v2543
      %v2577 = vsel %vm401, 0, %v2545
      %v2579 = vsel %vm401, 0, %v2547
      %v2581 = vsel %vm401, 0, %v2549
      %v2583 = vsel %vm401, 0, %v2551
      %v2585 = vsel %vm401, 0, %v2553
      %v2587 = vsel %vm401, 0, %v2555
      %v2589 = vsel %vm401, 0, %v2557
      %v2591 = vsel %vm401, 0, %v2559
      %v2593 = vsel %vm401, 0, %v2561
      %v2595 = vsel %vm401, 0, %v2563
      %v2597 = vsel %vm401, 0, %v2565
      %v2599 = vsel %vm401, 0, %v2567
      %v2601 = vsel %vm401, 0, %v2569
      %v2603 = vsel %vm401, 0, %v2571
      %v2605 = vsel %vm401, 0, %v2573
      %v2606 = vsel %vm401, %v2543, 0
      %v2607 = vsel %vm401, %v2545, 0
      %v2608 = vsel %vm401, %v2547, 0
      %v2609 = vsel %vm401, %v2549, 0
      %v2610 = vsel %vm401, %v2551, 0
      %v2611 = vsel %vm401, %v2553, 0
      %v2612 = vsel %vm401, %v2555, 0
      %v2613 = vsel %vm401, %v2557, 0
      %v2614 = vsel %vm401, %v2559, 0
      %v2615 = vsel %vm401, %v2561, 0
      %v2616 = vsel %vm401, %v2563, 0
      %v2617 = vsel %vm401, %v2565, 0
      %v2618 = vsel %vm401, %v2567, 0
      %v2619 = vsel %vm401, %v2569, 0
      %v2620 = vsel %vm401, %v2571, 0
      %v2621 = vsel %vm401, %v2573, 0
      %v2622 = vshrl.u32 %v2575, 16
      %v2624 = vshll.u32 %v2575, 16
      %v2626 = vrot.slane %v2624, 1
      %v2627 = vor.u32 %v2622, %v2626
      %v2628 = vshll.u32 %v2606, 16
      %v2630 = vrot.slane %v2628, 1
      %v2631 = vsel %vm1452, %v2627, %v2630
      %v2632 = vshrl.u32 %v2577, 16
      %v2634 = vshll.u32 %v2577, 16
      %v2636 = vrot.slane %v2634, 1
      %v2637 = vor.u32 %v2632, %v2636
      %v2638 = vshll.u32 %v2607, 16
      %v2640 = vrot.slane %v2638, 1
      %v2641 = vsel %vm1452, %v2637, %v2640
      %v2642 = vshrl.u32 %v2579, 16
      %v2644 = vshll.u32 %v2579, 16
      %v2646 = vrot.slane %v2644, 1
      %v2647 = vor.u32 %v2642, %v2646
      %v2648 = vshll.u32 %v2608, 16
      %v2650 = vrot.slane %v2648, 1
      %v2651 = vsel %vm1452, %v2647, %v2650
      %v2652 = vshrl.u32 %v2581, 16
      %v2654 = vshll.u32 %v2581, 16
      %v2656 = vrot.slane %v2654, 1
      %v2657 = vor.u32 %v2652, %v2656
      %v2658 = vshll.u32 %v2609, 16
      %v2660 = vrot.slane %v2658, 1
      %v2661 = vsel %vm1452, %v2657, %v2660
      %v2662 = vshrl.u32 %v2583, 16
      %v2664 = vshll.u32 %v2583, 16
      %v2666 = vrot.slane %v2664, 1
      %v2667 = vor.u32 %v2662, %v2666
      %v2668 = vshll.u32 %v2610, 16
      %v2670 = vrot.slane %v2668, 1
      %v2671 = vsel %vm1452, %v2667, %v2670
      %v2672 = vshrl.u32 %v2585, 16
      %v2674 = vshll.u32 %v2585, 16
      %v2676 = vrot.slane %v2674, 1
      %v2677 = vor.u32 %v2672, %v2676
      %v2678 = vshll.u32 %v2611, 16
      %v2680 = vrot.slane %v2678, 1
      %v2681 = vsel %vm1452, %v2677, %v2680
      %v2682 = vshrl.u32 %v2587, 16
      %v2684 = vshll.u32 %v2587, 16
      %v2686 = vrot.slane %v2684, 1
      %v2687 = vor.u32 %v2682, %v2686
      %v2688 = vshll.u32 %v2612, 16
      %v2690 = vrot.slane %v2688, 1
      %v2691 = vsel %vm1452, %v2687, %v2690
      %v2692 = vshrl.u32 %v2589, 16
      %v2694 = vshll.u32 %v2589, 16
      %v2696 = vrot.slane %v2694, 1
      %v2697 = vor.u32 %v2692, %v2696
      %v2698 = vshll.u32 %v2613, 16
      %v2700 = vrot.slane %v2698, 1
      %v2701 = vsel %vm1452, %v2697, %v2700
      %v2702 = vshrl.u32 %v2591, 16
      %v2704 = vshll.u32 %v2591, 16
      %v2706 = vrot.slane %v2704, 1
      %v2707 = vor.u32 %v2702, %v2706
      %v2708 = vshll.u32 %v2614, 16
      %v2710 = vrot.slane %v2708, 1
      %v2711 = vsel %vm1452, %v2707, %v2710
      %v2712 = vshrl.u32 %v2593, 16
      %v2714 = vshll.u32 %v2593, 16
      %v2716 = vrot.slane %v2714, 1
      %v2717 = vor.u32 %v2712, %v2716
      %v2718 = vshll.u32 %v2615, 16
      %v2720 = vrot.slane %v2718, 1
      %v2721 = vsel %vm1452, %v2717, %v2720
      %v2722 = vshrl.u32 %v2595, 16
      %v2724 = vshll.u32 %v2595, 16
      %v2726 = vrot.slane %v2724, 1
      %v2727 = vor.u32 %v2722, %v2726
      %v2728 = vshll.u32 %v2616, 16
      %v2730 = vrot.slane %v2728, 1
      %v2731 = vsel %vm1452, %v2727, %v2730
      %v2732 = vshrl.u32 %v2597, 16
      %v2734 = vshll.u32 %v2597, 16
      %v2736 = vrot.slane %v2734, 1
      %v2737 = vor.u32 %v2732, %v2736
      %v2738 = vshll.u32 %v2617, 16
      %v2740 = vrot.slane %v2738, 1
      %v2741 = vsel %vm1452, %v2737, %v2740
      %v2742 = vshrl.u32 %v2599, 16
      %v2744 = vshll.u32 %v2599, 16
      %v2746 = vrot.slane %v2744, 1
      %v2747 = vor.u32 %v2742, %v2746
      %v2748 = vshll.u32 %v2618, 16
      %v2750 = vrot.slane %v2748, 1
      %v2751 = vsel %vm1452, %v2747, %v2750
      %v2752 = vshrl.u32 %v2601, 16
      %v2754 = vshll.u32 %v2601, 16
      %v2756 = vrot.slane %v2754, 1
      %v2757 = vor.u32 %v2752, %v2756
      %v2758 = vshll.u32 %v2619, 16
      %v2760 = vrot.slane %v2758, 1
      %v2761 = vsel %vm1452, %v2757, %v2760
      %v2762 = vshrl.u32 %v2603, 16
      %v2764 = vshll.u32 %v2603, 16
      %v2766 = vrot.slane %v2764, 1
      %v2767 = vor.u32 %v2762, %v2766
      %v2768 = vshll.u32 %v2620, 16
      %v2770 = vrot.slane %v2768, 1
      %v2771 = vsel %vm1452, %v2767, %v2770
      %v2772 = vshrl.u32 %v2605, 16
      %v2774 = vshll.u32 %v2605, 16
      %v2776 = vrot.slane %v2774, 1
      %v2777 = vor.u32 %v2772, %v2776
      %v2778 = vshll.u32 %v2621, 16
      %v2780 = vrot.slane %v2778, 1
      %v2781 = vsel %vm1452, %v2777, %v2780
      %2782 = vrot.lane.b32.xlu0 %v2631, 4
      %v2783 = vpop.permute.xlu0 %2782
      %2784 = vrot.lane.b32.xlu0 %v2641, 4
      %v2785 = vpop.permute.xlu0 %2784
      %2786 = vrot.lane.b32.xlu0 %v2651, 4
      %v2787 = vpop.permute.xlu0 %2786
      %2788 = vrot.lane.b32.xlu0 %v2661, 4
      %v2789 = vpop.permute.xlu0 %2788
      %2790 = vrot.lane.b32.xlu0 %v2671, 4
      %v2791 = vpop.permute.xlu0 %2790
      %2792 = vrot.lane.b32.xlu0 %v2681, 4
      %v2793 = vpop.permute.xlu0 %2792
      %2794 = vrot.lane.b32.xlu0 %v2691, 4
      %v2795 = vpop.permute.xlu0 %2794
      %2796 = vrot.lane.b32.xlu0 %v2701, 4
      %v2797 = vpop.permute.xlu0 %2796
      %2798 = vrot.lane.b32.xlu0 %v2711, 4
      %v2799 = vpop.permute.xlu0 %2798
      %2800 = vrot.lane.b32.xlu0 %v2721, 4
      %v2801 = vpop.permute.xlu0 %2800
      %2802 = vrot.lane.b32.xlu0 %v2731, 4
      %v2803 = vpop.permute.xlu0 %2802
      %2804 = vrot.lane.b32.xlu0 %v2741, 4
      %v2805 = vpop.permute.xlu0 %2804
      %2806 = vrot.lane.b32.xlu0 %v2751, 4
      %v2807 = vpop.permute.xlu0 %2806
      %2808 = vrot.lane.b32.xlu0 %v2761, 4
      %v2809 = vpop.permute.xlu0 %2808
      %2810 = vrot.lane.b32.xlu0 %v2771, 4
      %v2811 = vpop.permute.xlu0 %2810
      %2812 = vrot.lane.b32.xlu0 %v2781, 4
      %v2813 = vpop.permute.xlu0 %2812
      %v2846 = vrot.slane %v2575, 1
      %v2847 = vrot.slane %v2606, 1
      %v2848 = vsel %vm1709, %v2846, %v2847
      %v2849 = vrot.slane %v2577, 1
      %v2850 = vrot.slane %v2607, 1
      %v2851 = vsel %vm1709, %v2849, %v2850
      %v2852 = vrot.slane %v2579, 1
      %v2853 = vrot.slane %v2608, 1
      %v2854 = vsel %vm1709, %v2852, %v2853
      %v2855 = vrot.slane %v2581, 1
      %v2856 = vrot.slane %v2609, 1
      %v2857 = vsel %vm1709, %v2855, %v2856
      %v2858 = vrot.slane %v2583, 1
      %v2859 = vrot.slane %v2610, 1
      %v2860 = vsel %vm1709, %v2858, %v2859
      %v2861 = vrot.slane %v2585, 1
      %v2862 = vrot.slane %v2611, 1
      %v2863 = vsel %vm1709, %v2861, %v2862
      %v2864 = vrot.slane %v2587, 1
      %v2865 = vrot.slane %v2612, 1
      %v2866 = vsel %vm1709, %v2864, %v2865
      %v2867 = vrot.slane %v2589, 1
      %v2868 = vrot.slane %v2613, 1
      %v2869 = vsel %vm1709, %v2867, %v2868
      %v2870 = vrot.slane %v2591, 1
      %v2871 = vrot.slane %v2614, 1
      %v2872 = vsel %vm1709, %v2870, %v2871
      %v2873 = vrot.slane %v2593, 1
      %v2874 = vrot.slane %v2615, 1
      %v2875 = vsel %vm1709, %v2873, %v2874
      %v2876 = vrot.slane %v2595, 1
      %v2877 = vrot.slane %v2616, 1
      %v2878 = vsel %vm1709, %v2876, %v2877
      %v2879 = vrot.slane %v2597, 1
      %v2880 = vrot.slane %v2617, 1
      %v2881 = vsel %vm1709, %v2879, %v2880
      %v2882 = vrot.slane %v2599, 1
      %v2883 = vrot.slane %v2618, 1
      %v2884 = vsel %vm1709, %v2882, %v2883
      %v2885 = vrot.slane %v2601, 1
      %v2886 = vrot.slane %v2619, 1
      %v2887 = vsel %vm1709, %v2885, %v2886
      %v2888 = vrot.slane %v2603, 1
      %v2889 = vrot.slane %v2620, 1
      %v2890 = vsel %vm1709, %v2888, %v2889
      %v2891 = vrot.slane %v2605, 1
      %v2892 = vrot.slane %v2621, 1
      %v2893 = vsel %vm1709, %v2891, %v2892
      %2894 = vrot.lane.b32.xlu0 %v2848, 8
      %v2895 = vpop.permute.xlu0 %2894
      %2896 = vrot.lane.b32.xlu0 %v2851, 8
      %v2897 = vpop.permute.xlu0 %2896
      %2898 = vrot.lane.b32.xlu0 %v2854, 8
      %v2899 = vpop.permute.xlu0 %2898
      %2900 = vrot.lane.b32.xlu0 %v2857, 8
      %v2901 = vpop.permute.xlu0 %2900
      %2902 = vrot.lane.b32.xlu0 %v2860, 8
      %v2903 = vpop.permute.xlu0 %2902
      %2904 = vrot.lane.b32.xlu0 %v2863, 8
      %v2905 = vpop.permute.xlu0 %2904
      %2906 = vrot.lane.b32.xlu0 %v2866, 8
      %v2907 = vpop.permute.xlu0 %2906
      %2908 = vrot.lane.b32.xlu0 %v2869, 8
      %v2909 = vpop.permute.xlu0 %2908
      %2910 = vrot.lane.b32.xlu0 %v2872, 8
      %v2911 = vpop.permute.xlu0 %2910
      %2912 = vrot.lane.b32.xlu0 %v2875, 8
      %v2913 = vpop.permute.xlu0 %2912
      %2914 = vrot.lane.b32.xlu0 %v2878, 8
      %v2915 = vpop.permute.xlu0 %2914
      %2916 = vrot.lane.b32.xlu0 %v2881, 8
      %v2917 = vpop.permute.xlu0 %2916
      %2918 = vrot.lane.b32.xlu0 %v2884, 8
      %v2919 = vpop.permute.xlu0 %2918
      %2920 = vrot.lane.b32.xlu0 %v2887, 8
      %v2921 = vpop.permute.xlu0 %2920
      %2922 = vrot.lane.b32.xlu0 %v2890, 8
      %v2923 = vpop.permute.xlu0 %2922
      %2924 = vrot.lane.b32.xlu0 %v2893, 8
      %v2925 = vpop.permute.xlu0 %2924
      %vm2926 = vsmask.f32 6400
      %v2927 = vrot.slane %v2622, 1
      %v2928 = vrot.slane %v2624, 2
      %v2929 = vor.u32 %v2927, %v2928
      %v2930 = vshrl.u32 %v2606, 16
      %v2932 = vrot.slane %v2930, 1
      %v2933 = vrot.slane %v2628, 2
      %v2934 = vor.u32 %v2932, %v2933
      %v2935 = vsel %vm2926, %v2929, %v2934
      %v2936 = vrot.slane %v2632, 1
      %v2937 = vrot.slane %v2634, 2
      %v2938 = vor.u32 %v2936, %v2937
      %v2939 = vshrl.u32 %v2607, 16
      %v2941 = vrot.slane %v2939, 1
      %v2942 = vrot.slane %v2638, 2
      %v2943 = vor.u32 %v2941, %v2942
      %v2944 = vsel %vm2926, %v2938, %v2943
      %v2945 = vrot.slane %v2642, 1
      %v2946 = vrot.slane %v2644, 2
      %v2947 = vor.u32 %v2945, %v2946
      %v2948 = vshrl.u32 %v2608, 16
      %v2950 = vrot.slane %v2948, 1
      %v2951 = vrot.slane %v2648, 2
      %v2952 = vor.u32 %v2950, %v2951
      %v2953 = vsel %vm2926, %v2947, %v2952
      %v2954 = vrot.slane %v2652, 1
      %v2955 = vrot.slane %v2654, 2
      %v2956 = vor.u32 %v2954, %v2955
      %v2957 = vshrl.u32 %v2609, 16
      %v2959 = vrot.slane %v2957, 1
      %v2960 = vrot.slane %v2658, 2
      %v2961 = vor.u32 %v2959, %v2960
      %v2962 = vsel %vm2926, %v2956, %v2961
      %v2963 = vrot.slane %v2662, 1
      %v2964 = vrot.slane %v2664, 2
      %v2965 = vor.u32 %v2963, %v2964
      %v2966 = vshrl.u32 %v2610, 16
      %v2968 = vrot.slane %v2966, 1
      %v2969 = vrot.slane %v2668, 2
      %v2970 = vor.u32 %v2968, %v2969
      %v2971 = vsel %vm2926, %v2965, %v2970
      %v2972 = vrot.slane %v2672, 1
      %v2973 = vrot.slane %v2674, 2
      %v2974 = vor.u32 %v2972, %v2973
      %v2975 = vshrl.u32 %v2611, 16
      %v2977 = vrot.slane %v2975, 1
      %v2978 = vrot.slane %v2678, 2
      %v2979 = vor.u32 %v2977, %v2978
      %v2980 = vsel %vm2926, %v2974, %v2979
      %v2981 = vrot.slane %v2682, 1
      %v2982 = vrot.slane %v2684, 2
      %v2983 = vor.u32 %v2981, %v2982
      %v2984 = vshrl.u32 %v2612, 16
      %v2986 = vrot.slane %v2984, 1
      %v2987 = vrot.slane %v2688, 2
      %v2988 = vor.u32 %v2986, %v2987
      %v2989 = vsel %vm2926, %v2983, %v2988
      %v2990 = vrot.slane %v2692, 1
      %v2991 = vrot.slane %v2694, 2
      %v2992 = vor.u32 %v2990, %v2991
      %v2993 = vshrl.u32 %v2613, 16
      %v2995 = vrot.slane %v2993, 1
      %v2996 = vrot.slane %v2698, 2
      %v2997 = vor.u32 %v2995, %v2996
      %v2998 = vsel %vm2926, %v2992, %v2997
      %v2999 = vrot.slane %v2702, 1
      %v3000 = vrot.slane %v2704, 2
      %v3001 = vor.u32 %v2999, %v3000
      %v3002 = vshrl.u32 %v2614, 16
      %v3004 = vrot.slane %v3002, 1
      %v3005 = vrot.slane %v2708, 2
      %v3006 = vor.u32 %v3004, %v3005
      %v3007 = vsel %vm2926, %v3001, %v3006
      %v3008 = vrot.slane %v2712, 1
      %v3009 = vrot.slane %v2714, 2
      %v3010 = vor.u32 %v3008, %v3009
      %v3011 = vshrl.u32 %v2615, 16
      %v3013 = vrot.slane %v3011, 1
      %v3014 = vrot.slane %v2718, 2
      %v3015 = vor.u32 %v3013, %v3014
      %v3016 = vsel %vm2926, %v3010, %v3015
      %v3017 = vrot.slane %v2722, 1
      %v3018 = vrot.slane %v2724, 2
      %v3019 = vor.u32 %v3017, %v3018
      %v3020 = vshrl.u32 %v2616, 16
      %v3022 = vrot.slane %v3020, 1
      %v3023 = vrot.slane %v2728, 2
      %v3024 = vor.u32 %v3022, %v3023
      %v3025 = vsel %vm2926, %v3019, %v3024
      %v3026 = vrot.slane %v2732, 1
      %v3027 = vrot.slane %v2734, 2
      %v3028 = vor.u32 %v3026, %v3027
      %v3029 = vshrl.u32 %v2617, 16
      %v3031 = vrot.slane %v3029, 1
      %v3032 = vrot.slane %v2738, 2
      %v3033 = vor.u32 %v3031, %v3032
      %v3034 = vsel %vm2926, %v3028, %v3033
      %v3035 = vrot.slane %v2742, 1
      %v3036 = vrot.slane %v2744, 2
      %v3037 = vor.u32 %v3035, %v3036
      %v3038 = vshrl.u32 %v2618, 16
      %v3040 = vrot.slane %v3038, 1
      %v3041 = vrot.slane %v2748, 2
      %v3042 = vor.u32 %v3040, %v3041
      %v3043 = vsel %vm2926, %v3037, %v3042
      %v3044 = vrot.slane %v2752, 1
      %v3045 = vrot.slane %v2754, 2
      %v3046 = vor.u32 %v3044, %v3045
      %v3047 = vshrl.u32 %v2619, 16
      %v3049 = vrot.slane %v3047, 1
      %v3050 = vrot.slane %v2758, 2
      %v3051 = vor.u32 %v3049, %v3050
      %v3052 = vsel %vm2926, %v3046, %v3051
      %v3053 = vrot.slane %v2762, 1
      %v3054 = vrot.slane %v2764, 2
      %v3055 = vor.u32 %v3053, %v3054
      %v3056 = vshrl.u32 %v2620, 16
      %v3058 = vrot.slane %v3056, 1
      %v3059 = vrot.slane %v2768, 2
      %v3060 = vor.u32 %v3058, %v3059
      %v3061 = vsel %vm2926, %v3055, %v3060
      %v3062 = vrot.slane %v2772, 1
      %v3063 = vrot.slane %v2774, 2
      %v3064 = vor.u32 %v3062, %v3063
      %v3065 = vshrl.u32 %v2621, 16
      %v3067 = vrot.slane %v3065, 1
      %v3068 = vrot.slane %v2778, 2
      %v3069 = vor.u32 %v3067, %v3068
      %v3070 = vsel %vm2926, %v3064, %v3069
      %3071 = vrot.lane.b32.xlu0 %v2935, 12
      %v3072 = vpop.permute.xlu0 %3071
      %3073 = vrot.lane.b32.xlu0 %v2944, 12
      %v3074 = vpop.permute.xlu0 %3073
      %3075 = vrot.lane.b32.xlu0 %v2953, 12
      %v3076 = vpop.permute.xlu0 %3075
      %3077 = vrot.lane.b32.xlu0 %v2962, 12
      %v3078 = vpop.permute.xlu0 %3077
      %3079 = vrot.lane.b32.xlu0 %v2971, 12
      %v3080 = vpop.permute.xlu0 %3079
      %3081 = vrot.lane.b32.xlu0 %v2980, 12
      %v3082 = vpop.permute.xlu0 %3081
      %3083 = vrot.lane.b32.xlu0 %v2989, 12
      %v3084 = vpop.permute.xlu0 %3083
      %3085 = vrot.lane.b32.xlu0 %v2998, 12
      %v3086 = vpop.permute.xlu0 %3085
      %3087 = vrot.lane.b32.xlu0 %v3007, 12
      %v3088 = vpop.permute.xlu0 %3087
      %3089 = vrot.lane.b32.xlu0 %v3016, 12
      %v3090 = vpop.permute.xlu0 %3089
      %3091 = vrot.lane.b32.xlu0 %v3025, 12
      %v3092 = vpop.permute.xlu0 %3091
      %3093 = vrot.lane.b32.xlu0 %v3034, 12
      %v3094 = vpop.permute.xlu0 %3093
      %3095 = vrot.lane.b32.xlu0 %v3043, 12
      %v3096 = vpop.permute.xlu0 %3095
      %3097 = vrot.lane.b32.xlu0 %v3052, 12
      %v3098 = vpop.permute.xlu0 %3097
      %3099 = vrot.lane.b32.xlu0 %v3061, 12
      %v3100 = vpop.permute.xlu0 %3099
      %3101 = vrot.lane.b32.xlu0 %v3070, 12
      %v3102 = vpop.permute.xlu0 %3101
      %vm3103 = vcmask 1045504
      %v3104 = vrot.slane %v2575, 2
      %v3105 = vrot.slane %v2606, 2
      %v3106 = vsel %vm3103, %v3104, %v3105
      %v3107 = vrot.slane %v2577, 2
      %v3108 = vrot.slane %v2607, 2
      %v3109 = vsel %vm3103, %v3107, %v3108
      %v3110 = vrot.slane %v2579, 2
      %v3111 = vrot.slane %v2608, 2
      %v3112 = vsel %vm3103, %v3110, %v3111
      %v3113 = vrot.slane %v2581, 2
      %v3114 = vrot.slane %v2609, 2
      %v3115 = vsel %vm3103, %v3113, %v3114
      %v3116 = vrot.slane %v2583, 2
      %v3117 = vrot.slane %v2610, 2
      %v3118 = vsel %vm3103, %v3116, %v3117
      %v3119 = vrot.slane %v2585, 2
      %v3120 = vrot.slane %v2611, 2
      %v3121 = vsel %vm3103, %v3119, %v3120
      %v3122 = vrot.slane %v2587, 2
      %v3123 = vrot.slane %v2612, 2
      %v3124 = vsel %vm3103, %v3122, %v3123
      %v3125 = vrot.slane %v2589, 2
      %v3126 = vrot.slane %v2613, 2
      %v3127 = vsel %vm3103, %v3125, %v3126
      %v3128 = vrot.slane %v2591, 2
      %v3129 = vrot.slane %v2614, 2
      %v3130 = vsel %vm3103, %v3128, %v3129
      %v3131 = vrot.slane %v2593, 2
      %v3132 = vrot.slane %v2615, 2
      %v3133 = vsel %vm3103, %v3131, %v3132
      %v3134 = vrot.slane %v2595, 2
      %v3135 = vrot.slane %v2616, 2
      %v3136 = vsel %vm3103, %v3134, %v3135
      %v3137 = vrot.slane %v2597, 2
      %v3138 = vrot.slane %v2617, 2
      %v3139 = vsel %vm3103, %v3137, %v3138
      %v3140 = vrot.slane %v2599, 2
      %v3141 = vrot.slane %v2618, 2
      %v3142 = vsel %vm3103, %v3140, %v3141
      %v3143 = vrot.slane %v2601, 2
      %v3144 = vrot.slane %v2619, 2
      %v3145 = vsel %vm3103, %v3143, %v3144
      %v3146 = vrot.slane %v2603, 2
      %v3147 = vrot.slane %v2620, 2
      %v3148 = vsel %vm3103, %v3146, %v3147
      %v3149 = vrot.slane %v2605, 2
      %v3150 = vrot.slane %v2621, 2
      %v3151 = vsel %vm3103, %v3149, %v3150
      %3152 = vrot.lane.b32.xlu0 %v3106, 16
      %v3153 = vpop.permute.xlu0 %3152
      %3154 = vrot.lane.b32.xlu0 %v3109, 16
      %v3155 = vpop.permute.xlu0 %3154
      %3156 = vrot.lane.b32.xlu0 %v3112, 16
      %v3157 = vpop.permute.xlu0 %3156
      %3158 = vrot.lane.b32.xlu0 %v3115, 16
      %v3159 = vpop.permute.xlu0 %3158
      %3160 = vrot.lane.b32.xlu0 %v3118, 16
      %v3161 = vpop.permute.xlu0 %3160
      %3162 = vrot.lane.b32.xlu0 %v3121, 16
      %v3163 = vpop.permute.xlu0 %3162
      %3164 = vrot.lane.b32.xlu0 %v3124, 16
      %v3165 = vpop.permute.xlu0 %3164
      %3166 = vrot.lane.b32.xlu0 %v3127, 16
      %v3167 = vpop.permute.xlu0 %3166
      %3168 = vrot.lane.b32.xlu0 %v3130, 16
      %v3169 = vpop.permute.xlu0 %3168
      %3170 = vrot.lane.b32.xlu0 %v3133, 16
      %v3171 = vpop.permute.xlu0 %3170
      %3172 = vrot.lane.b32.xlu0 %v3136, 16
      %v3173 = vpop.permute.xlu0 %3172
      %3174 = vrot.lane.b32.xlu0 %v3139, 16
      %v3175 = vpop.permute.xlu0 %3174
      %3176 = vrot.lane.b32.xlu0 %v3142, 16
      %v3177 = vpop.permute.xlu0 %3176
      %3178 = vrot.lane.b32.xlu0 %v3145, 16
      %v3179 = vpop.permute.xlu0 %3178
      %3180 = vrot.lane.b32.xlu0 %v3148, 16
      %v3181 = vpop.permute.xlu0 %3180
      %3182 = vrot.lane.b32.xlu0 %v3151, 16
      %v3183 = vpop.permute.xlu0 %3182
      %v3185 = vsel %vm743, %v2575, %v2783
      %v3187 = vsel %vm743, %v2577, %v2785
      %v3189 = vsel %vm743, %v2579, %v2787
      %v3191 = vsel %vm743, %v2581, %v2789
      %v3193 = vsel %vm743, %v2583, %v2791
      %v3195 = vsel %vm743, %v2585, %v2793
      %v3197 = vsel %vm743, %v2587, %v2795
      %v3199 = vsel %vm743, %v2589, %v2797
      %v3201 = vsel %vm743, %v2591, %v2799
      %v3203 = vsel %vm743, %v2593, %v2801
      %v3205 = vsel %vm743, %v2595, %v2803
      %v3207 = vsel %vm743, %v2597, %v2805
      %v3209 = vsel %vm743, %v2599, %v2807
      %v3211 = vsel %vm743, %v2601, %v2809
      %v3213 = vsel %vm743, %v2603, %v2811
      %v3215 = vsel %vm743, %v2605, %v2813
      %v3217 = vsel %vm1822, %v3185, %v2895
      %v3219 = vsel %vm1822, %v3187, %v2897
      %v3221 = vsel %vm1822, %v3189, %v2899
      %v3223 = vsel %vm1822, %v3191, %v2901
      %v3225 = vsel %vm1822, %v3193, %v2903
      %v3227 = vsel %vm1822, %v3195, %v2905
      %v3229 = vsel %vm1822, %v3197, %v2907
      %v3231 = vsel %vm1822, %v3199, %v2909
      %v3233 = vsel %vm1822, %v3201, %v2911
      %v3235 = vsel %vm1822, %v3203, %v2913
      %v3237 = vsel %vm1822, %v3205, %v2915
      %v3239 = vsel %vm1822, %v3207, %v2917
      %v3241 = vsel %vm1822, %v3209, %v2919
      %v3243 = vsel %vm1822, %v3211, %v2921
      %v3245 = vsel %vm1822, %v3213, %v2923
      %v3247 = vsel %vm1822, %v3215, %v2925
      %v3249 = vsel %vm1865, %v3217, %v3072
      %v3251 = vsel %vm1865, %v3219, %v3074
      %v3253 = vsel %vm1865, %v3221, %v3076
      %v3255 = vsel %vm1865, %v3223, %v3078
      %v3257 = vsel %vm1865, %v3225, %v3080
      %v3259 = vsel %vm1865, %v3227, %v3082
      %v3261 = vsel %vm1865, %v3229, %v3084
      %v3263 = vsel %vm1865, %v3231, %v3086
      %v3265 = vsel %vm1865, %v3233, %v3088
      %v3267 = vsel %vm1865, %v3235, %v3090
      %v3269 = vsel %vm1865, %v3237, %v3092
      %v3271 = vsel %vm1865, %v3239, %v3094
      %v3273 = vsel %vm1865, %v3241, %v3096
      %v3275 = vsel %vm1865, %v3243, %v3098
      %v3277 = vsel %vm1865, %v3245, %v3100
      %v3279 = vsel %vm1865, %v3247, %v3102
      %vm3280 = vcmask 130048
      %v3282 = vsel %vm3280, %v3249, %v3153
      %v3284 = vsel %vm3280, %v3251, %v3155
      %v3286 = vsel %vm3280, %v3253, %v3157
      %v3288 = vsel %vm3280, %v3255, %v3159
      %v3290 = vsel %vm3280, %v3257, %v3161
      %v3292 = vsel %vm3280, %v3259, %v3163
      %v3294 = vsel %vm3280, %v3261, %v3165
      %v3296 = vsel %vm3280, %v3263, %v3167
      %v3298 = vsel %vm3280, %v3265, %v3169
      %v3300 = vsel %vm3280, %v3267, %v3171
      %v3302 = vsel %vm3280, %v3269, %v3173
      %v3304 = vsel %vm3280, %v3271, %v3175
      %v3306 = vsel %vm3280, %v3273, %v3177
      %v3308 = vsel %vm3280, %v3275, %v3179
      %v3310 = vsel %vm3280, %v3277, %v3181
      %v3312 = vsel %vm3280, %v3279, %v3183
      %v3313 = vld [vmem:[%s7] sm:$0xf]
      %v3314 = vld [vmem:[%s7 + $0x4] sm:$0xf]
      %v3315 = vld [vmem:[%s7 + $0x8] sm:$0x3]
      %s3316 = scalar_lea.vmem %s7, 12
      %v3317 = vld [vmem:[%s3316] sm:$0xf]
      %v3318 = vld [vmem:[%s3316 + $0x4] sm:$0xf]
      %v3319 = vld [vmem:[%s3316 + $0x8] sm:$0x3]
      %v3323 = vunpack.c.l.b16 %v3317
      %v3324 = vunpack.c.l.b16 %v3318
      %v3325 = vunpack.c.l.b16 %v3319
      %v3326 = vpack.c.b16 %v3324, %v3323
      %v3327 = vpack.c.b16 %v3325, %v3325
      %vm3329 = vcmask 162816
      %v3330 = vsel %vm3329, 0, 0
      %v3332 = vsel %vm3329, %v3282, 0
      %v3334 = vsel %vm3329, %v3284, 0
      %v3336 = vsel %vm3329, %v3286, 0
      %v3338 = vsel %vm3329, %v3288, 0
      %v3340 = vsel %vm3329, %v3290, 0
      %v3342 = vsel %vm3329, %v3292, 0
      %v3344 = vsel %vm3329, %v3294, 0
      %v3346 = vsel %vm3329, %v3296, 0
      %v3348 = vsel %vm3329, %v3298, 0
      %v3350 = vsel %vm3329, %v3300, 0
      %v3352 = vsel %vm3329, %v3302, 0
      %v3354 = vsel %vm3329, %v3304, 0
      %v3356 = vsel %vm3329, %v3306, 0
      %v3358 = vsel %vm3329, %v3308, 0
      %v3360 = vsel %vm3329, %v3310, 0
      %v3363 = vsel %vm792, %v3327, 0
      %3365 = vmatprep.subr.bf16.mxu0 0
      %3366 = vmatpush1.bf16.msra.mxu0 0
      %3367 = vmatprep.subr.bf16.mxu0 0
      %3368 = vmatpush1.bf16.msra.mxu0 0
      %3369 = vmatprep.subr.bf16.mxu0 0
      %3370 = vmatpush1.bf16.msra.mxu0 0
      %3371 = vmatprep.subr.bf16.mxu0 0
      %3372 = vmatpush1.bf16.msra.mxu0 0
      %3373 = vmatprep.subr.bf16.mxu0 0
      %3374 = vmatpush1.bf16.msra.mxu0 0
      %3375 = vmatprep.subr.bf16.mxu0 0
      %3376 = vmatpush1.bf16.msra.mxu0 0
      %3377 = vmatprep.subr.bf16.mxu0 0
      %3378 = vmatpush1.bf16.msra.mxu0 %v3363
      %3379 = vmatprep.subr.bf16.mxu0 0
      %3380 = vmatpush1.bf16.msra.mxu0 %v3326
      %3381 = vmatprep.subr.bf16.mxu0 0
      %3382 = vmatpush2.bf16.msra.mxu0 0
      %3383 = vmatprep.subr.bf16.mxu0 0
      %3384 = vmatpush2.bf16.msra.mxu0 0
      %3385 = vmatprep.subr.bf16.mxu0 0
      %3386 = vmatpush2.bf16.msra.mxu0 0
      %3387 = vmatprep.subr.bf16.mxu0 0
      %3388 = vmatpush2.bf16.msra.mxu0 0
      %3389 = vmatprep.subr.bf16.mxu0 0
      %3390 = vmatpush2.bf16.msra.mxu0 0
      %3391 = vmatprep.subr.bf16.mxu0 0
      %3392 = vmatpush2.bf16.msra.mxu0 0
      %3393 = vmatprep.subr.bf16.mxu0 0
      %3394 = vmatpush2.bf16.msra.mxu0 0
      %3395 = vmatprep.subr.bf16.mxu0 0
      %3396 = vmatpush2.bf16.msra.mxu0 0
      %3397 = vmatprep.mubr.bf16.mxu0 0
      %3398 = vmatmul.mubr.bf16.gmra.mxu0 %v3330
      %v3399 = vpop.f32.mrf.mxu0
      %v3400 = vadd.f32 0.0, %v3399
      %v3401 = vpop.f32.mrf.mxu0
      %v3402 = vpop.f32.mrf.mxu0
      %v3403 = vadd.f32 0.0, %v3402
      %v3404 = vpop.f32.mrf.mxu0
      %3405 = vmatprep.mubr.bf16.mxu0 0
      %3406 = vmatmul.mubr.bf16.gmra.mxu0 %v3332
      %v3407 = vpop.f32.mrf.mxu0
      %v3408 = vadd.f32 0.0, %v3407
      %v3409 = vpop.f32.mrf.mxu0
      %v3410 = vpop.f32.mrf.mxu0
      %v3411 = vadd.f32 0.0, %v3410
      %v3412 = vpop.f32.mrf.mxu0
      %3413 = vmatprep.mubr.bf16.mxu0 0
      %3414 = vmatmul.mubr.bf16.gmra.mxu0 %v3334
      %v3415 = vpop.f32.mrf.mxu0
      %v3416 = vadd.f32 0.0, %v3415
      %v3417 = vpop.f32.mrf.mxu0
      %v3418 = vpop.f32.mrf.mxu0
      %v3419 = vadd.f32 0.0, %v3418
      %v3420 = vpop.f32.mrf.mxu0
      %3421 = vmatprep.mubr.bf16.mxu0 0
      %3422 = vmatmul.mubr.bf16.gmra.mxu0 %v3336
      %v3423 = vpop.f32.mrf.mxu0
      %v3424 = vadd.f32 0.0, %v3423
      %v3425 = vpop.f32.mrf.mxu0
      %v3426 = vpop.f32.mrf.mxu0
      %v3427 = vadd.f32 0.0, %v3426
      %v3428 = vpop.f32.mrf.mxu0
      %3429 = vmatprep.mubr.bf16.mxu0 0
      %3430 = vmatmul.mubr.bf16.gmra.mxu0 %v3338
      %v3431 = vpop.f32.mrf.mxu0
      %v3432 = vadd.f32 0.0, %v3431
      %v3433 = vpop.f32.mrf.mxu0
      %v3434 = vpop.f32.mrf.mxu0
      %v3435 = vadd.f32 0.0, %v3434
      %v3436 = vpop.f32.mrf.mxu0
      %3437 = vmatprep.mubr.bf16.mxu0 0
      %3438 = vmatmul.mubr.bf16.gmra.mxu0 %v3340
      %v3439 = vpop.f32.mrf.mxu0
      %v3440 = vadd.f32 0.0, %v3439
      %v3441 = vpop.f32.mrf.mxu0
      %v3442 = vpop.f32.mrf.mxu0
      %v3443 = vadd.f32 0.0, %v3442
      %v3444 = vpop.f32.mrf.mxu0
      %3445 = vmatprep.mubr.bf16.mxu0 0
      %3446 = vmatmul.mubr.bf16.gmra.mxu0 %v3342
      %v3447 = vpop.f32.mrf.mxu0
      %v3448 = vadd.f32 0.0, %v3447
      %v3449 = vpop.f32.mrf.mxu0
      %v3450 = vpop.f32.mrf.mxu0
      %v3451 = vadd.f32 0.0, %v3450
      %v3452 = vpop.f32.mrf.mxu0
      %3453 = vmatprep.mubr.bf16.mxu0 0
      %3454 = vmatmul.mubr.bf16.gmra.mxu0 %v3344
      %v3455 = vpop.f32.mrf.mxu0
      %v3456 = vadd.f32 0.0, %v3455
      %v3457 = vpop.f32.mrf.mxu0
      %v3458 = vpop.f32.mrf.mxu0
      %v3459 = vadd.f32 0.0, %v3458
      %v3460 = vpop.f32.mrf.mxu0
      %3461 = vmatprep.mubr.bf16.mxu0 0
      %3462 = vmatmul.mubr.bf16.gmra.mxu0 %v3346
      %v3463 = vpop.f32.mrf.mxu0
      %v3464 = vadd.f32 0.0, %v3463
      %v3465 = vpop.f32.mrf.mxu0
      %v3466 = vpop.f32.mrf.mxu0
      %v3467 = vadd.f32 0.0, %v3466
      %v3468 = vpop.f32.mrf.mxu0
      %3469 = vmatprep.mubr.bf16.mxu0 0
      %3470 = vmatmul.mubr.bf16.gmra.mxu0 %v3348
      %v3471 = vpop.f32.mrf.mxu0
      %v3472 = vadd.f32 0.0, %v3471
      %v3473 = vpop.f32.mrf.mxu0
      %v3474 = vpop.f32.mrf.mxu0
      %v3475 = vadd.f32 0.0, %v3474
      %v3476 = vpop.f32.mrf.mxu0
      %3477 = vmatprep.mubr.bf16.mxu0 0
      %3478 = vmatmul.mubr.bf16.gmra.mxu0 %v3350
      %v3479 = vpop.f32.mrf.mxu0
      %v3480 = vadd.f32 0.0, %v3479
      %v3481 = vpop.f32.mrf.mxu0
      %v3482 = vpop.f32.mrf.mxu0
      %v3483 = vadd.f32 0.0, %v3482
      %v3484 = vpop.f32.mrf.mxu0
      %3485 = vmatprep.mubr.bf16.mxu0 0
      %3486 = vmatmul.mubr.bf16.gmra.mxu0 %v3352
      %v3487 = vpop.f32.mrf.mxu0
      %v3488 = vadd.f32 0.0, %v3487
      %v3489 = vpop.f32.mrf.mxu0
      %v3490 = vpop.f32.mrf.mxu0
      %v3491 = vadd.f32 0.0, %v3490
      %v3492 = vpop.f32.mrf.mxu0
      %3493 = vmatprep.mubr.bf16.mxu0 0
      %3494 = vmatmul.mubr.bf16.gmra.mxu0 %v3354
      %v3495 = vpop.f32.mrf.mxu0
      %v3496 = vadd.f32 0.0, %v3495
      %v3497 = vpop.f32.mrf.mxu0
      %v3498 = vpop.f32.mrf.mxu0
      %v3499 = vadd.f32 0.0, %v3498
      %v3500 = vpop.f32.mrf.mxu0
      %3501 = vmatprep.mubr.bf16.mxu0 0
      %3502 = vmatmul.mubr.bf16.gmra.mxu0 %v3356
      %v3503 = vpop.f32.mrf.mxu0
      %v3504 = vadd.f32 0.0, %v3503
      %v3505 = vpop.f32.mrf.mxu0
      %v3506 = vpop.f32.mrf.mxu0
      %v3507 = vadd.f32 0.0, %v3506
      %v3508 = vpop.f32.mrf.mxu0
      %3509 = vmatprep.mubr.bf16.mxu0 0
      %3510 = vmatmul.mubr.bf16.gmra.mxu0 %v3358
      %v3511 = vpop.f32.mrf.mxu0
      %v3512 = vadd.f32 0.0, %v3511
      %v3513 = vpop.f32.mrf.mxu0
      %v3514 = vpop.f32.mrf.mxu0
      %v3515 = vadd.f32 0.0, %v3514
      %v3516 = vpop.f32.mrf.mxu0
      %3517 = vmatprep.mubr.bf16.mxu0 0
      %3518 = vmatmul.mubr.bf16.gmra.mxu0 %v3360
      %v3519 = vpop.f32.mrf.mxu0
      %v3520 = vadd.f32 0.0, %v3519
      %v3521 = vpop.f32.mrf.mxu0
      %v3522 = vpop.f32.mrf.mxu0
      %v3523 = vadd.f32 0.0, %v3522
      %v3524 = vpop.f32.mrf.mxu0
      %3525 = vdwg.mxu0
      %v3529 = vunpack.c.l.b16 %v3313
      %v3530 = vunpack.c.l.b16 %v3314
      %v3531 = vunpack.c.l.b16 %v3315
      %v3532 = vpack.c.b16 %v3530, %v3529
      %v3533 = vpack.c.b16 %v3531, %v3531
      %v3536 = vsel %vm792, %v3533, 0
      %3538 = vmatprep.subr.bf16.mxu0 0
      %3539 = vmatpush1.bf16.msra.mxu0 0
      %3540 = vmatprep.subr.bf16.mxu0 0
      %3541 = vmatpush1.bf16.msra.mxu0 0
      %3542 = vmatprep.subr.bf16.mxu0 0
      %3543 = vmatpush1.bf16.msra.mxu0 0
      %3544 = vmatprep.subr.bf16.mxu0 0
      %3545 = vmatpush1.bf16.msra.mxu0 0
      %3546 = vmatprep.subr.bf16.mxu0 0
      %3547 = vmatpush1.bf16.msra.mxu0 0
      %3548 = vmatprep.subr.bf16.mxu0 0
      %3549 = vmatpush1.bf16.msra.mxu0 0
      %3550 = vmatprep.subr.bf16.mxu0 0
      %3551 = vmatpush1.bf16.msra.mxu0 %v3536
      %3552 = vmatprep.subr.bf16.mxu0 0
      %3553 = vmatpush1.bf16.msra.mxu0 %v3532
      %3554 = vmatprep.subr.bf16.mxu0 0
      %3555 = vmatpush2.bf16.msra.mxu0 0
      %3556 = vmatprep.subr.bf16.mxu0 0
      %3557 = vmatpush2.bf16.msra.mxu0 0
      %3558 = vmatprep.subr.bf16.mxu0 0
      %3559 = vmatpush2.bf16.msra.mxu0 0
      %3560 = vmatprep.subr.bf16.mxu0 0
      %3561 = vmatpush2.bf16.msra.mxu0 0
      %3562 = vmatprep.subr.bf16.mxu0 0
      %3563 = vmatpush2.bf16.msra.mxu0 0
      %3564 = vmatprep.subr.bf16.mxu0 0
      %3565 = vmatpush2.bf16.msra.mxu0 0
      %3566 = vmatprep.subr.bf16.mxu0 0
      %3567 = vmatpush2.bf16.msra.mxu0 0
      %3568 = vmatprep.subr.bf16.mxu0 0
      %3569 = vmatpush2.bf16.msra.mxu0 0
      %3570 = vmatprep.mubr.bf16.mxu0 0
      %3571 = vmatmul.mubr.bf16.gmra.mxu0 %v3330
      %v3572 = vpop.f32.mrf.mxu0
      %v3573 = vadd.f32 %v3400, %v3572
      %v3574 = vpop.f32.mrf.mxu0
      %v3575 = vpop.f32.mrf.mxu0
      %v3576 = vadd.f32 %v3403, %v3575
      %v3577 = vpop.f32.mrf.mxu0
      %3578 = vmatprep.mubr.bf16.mxu0 0
      %3579 = vmatmul.mubr.bf16.gmra.mxu0 %v3330
      %v3580 = vpop.f32.mrf.mxu0
      %v3581 = vadd.f32 %v3408, %v3580
      %v3582 = vpop.f32.mrf.mxu0
      %v3583 = vpop.f32.mrf.mxu0
      %v3584 = vadd.f32 %v3411, %v3583
      %v3585 = vpop.f32.mrf.mxu0
      %3586 = vmatprep.mubr.bf16.mxu0 0
      %3587 = vmatmul.mubr.bf16.gmra.mxu0 %v3332
      %v3588 = vpop.f32.mrf.mxu0
      %v3589 = vadd.f32 %v3416, %v3588
      %v3590 = vpop.f32.mrf.mxu0
      %v3591 = vpop.f32.mrf.mxu0
      %v3592 = vadd.f32 %v3419, %v3591
      %v3593 = vpop.f32.mrf.mxu0
      %3594 = vmatprep.mubr.bf16.mxu0 0
      %3595 = vmatmul.mubr.bf16.gmra.mxu0 %v3334
      %v3596 = vpop.f32.mrf.mxu0
      %v3597 = vadd.f32 %v3424, %v3596
      %v3598 = vpop.f32.mrf.mxu0
      %v3599 = vpop.f32.mrf.mxu0
      %v3600 = vadd.f32 %v3427, %v3599
      %v3601 = vpop.f32.mrf.mxu0
      %3602 = vmatprep.mubr.bf16.mxu0 0
      %3603 = vmatmul.mubr.bf16.gmra.mxu0 %v3336
      %v3604 = vpop.f32.mrf.mxu0
      %v3605 = vadd.f32 %v3432, %v3604
      %v3606 = vpop.f32.mrf.mxu0
      %v3607 = vpop.f32.mrf.mxu0
      %v3608 = vadd.f32 %v3435, %v3607
      %v3609 = vpop.f32.mrf.mxu0
      %3610 = vmatprep.mubr.bf16.mxu0 0
      %3611 = vmatmul.mubr.bf16.gmra.mxu0 %v3338
      %v3612 = vpop.f32.mrf.mxu0
      %v3613 = vadd.f32 %v3440, %v3612
      %v3614 = vpop.f32.mrf.mxu0
      %v3615 = vpop.f32.mrf.mxu0
      %v3616 = vadd.f32 %v3443, %v3615
      %v3617 = vpop.f32.mrf.mxu0
      %3618 = vmatprep.mubr.bf16.mxu0 0
      %3619 = vmatmul.mubr.bf16.gmra.mxu0 %v3340
      %v3620 = vpop.f32.mrf.mxu0
      %v3621 = vadd.f32 %v3448, %v3620
      %v3622 = vpop.f32.mrf.mxu0
      %v3623 = vpop.f32.mrf.mxu0
      %v3624 = vadd.f32 %v3451, %v3623
      %v3625 = vpop.f32.mrf.mxu0
      %3626 = vmatprep.mubr.bf16.mxu0 0
      %3627 = vmatmul.mubr.bf16.gmra.mxu0 %v3342
      %v3628 = vpop.f32.mrf.mxu0
      %v3629 = vadd.f32 %v3456, %v3628
      %v3630 = vpop.f32.mrf.mxu0
      %v3631 = vpop.f32.mrf.mxu0
      %v3632 = vadd.f32 %v3459, %v3631
      %v3633 = vpop.f32.mrf.mxu0
      %3634 = vmatprep.mubr.bf16.mxu0 0
      %3635 = vmatmul.mubr.bf16.gmra.mxu0 %v3344
      %v3636 = vpop.f32.mrf.mxu0
      %v3637 = vadd.f32 %v3464, %v3636
      %v3638 = vpop.f32.mrf.mxu0
      %v3639 = vpop.f32.mrf.mxu0
      %v3640 = vadd.f32 %v3467, %v3639
      %v3641 = vpop.f32.mrf.mxu0
      %3642 = vmatprep.mubr.bf16.mxu0 0
      %3643 = vmatmul.mubr.bf16.gmra.mxu0 %v3346
      %v3644 = vpop.f32.mrf.mxu0
      %v3645 = vadd.f32 %v3472, %v3644
      %v3646 = vpop.f32.mrf.mxu0
      %v3647 = vpop.f32.mrf.mxu0
      %v3648 = vadd.f32 %v3475, %v3647
      %v3649 = vpop.f32.mrf.mxu0
      %3650 = vmatprep.mubr.bf16.mxu0 0
      %3651 = vmatmul.mubr.bf16.gmra.mxu0 %v3348
      %v3652 = vpop.f32.mrf.mxu0
      %v3653 = vadd.f32 %v3480, %v3652
      %v3654 = vpop.f32.mrf.mxu0
      %v3655 = vpop.f32.mrf.mxu0
      %v3656 = vadd.f32 %v3483, %v3655
      %v3657 = vpop.f32.mrf.mxu0
      %3658 = vmatprep.mubr.bf16.mxu0 0
      %3659 = vmatmul.mubr.bf16.gmra.mxu0 %v3350
      %v3660 = vpop.f32.mrf.mxu0
      %v3661 = vadd.f32 %v3488, %v3660
      %v3662 = vpop.f32.mrf.mxu0
      %v3663 = vpop.f32.mrf.mxu0
      %v3664 = vadd.f32 %v3491, %v3663
      %v3665 = vpop.f32.mrf.mxu0
      %3666 = vmatprep.mubr.bf16.mxu0 0
      %3667 = vmatmul.mubr.bf16.gmra.mxu0 %v3352
      %v3668 = vpop.f32.mrf.mxu0
      %v3669 = vadd.f32 %v3496, %v3668
      %v3670 = vpop.f32.mrf.mxu0
      %v3671 = vpop.f32.mrf.mxu0
      %v3672 = vadd.f32 %v3499, %v3671
      %v3673 = vpop.f32.mrf.mxu0
      %3674 = vmatprep.mubr.bf16.mxu0 0
      %3675 = vmatmul.mubr.bf16.gmra.mxu0 %v3354
      %v3676 = vpop.f32.mrf.mxu0
      %v3677 = vadd.f32 %v3504, %v3676
      %v3678 = vpop.f32.mrf.mxu0
      %v3679 = vpop.f32.mrf.mxu0
      %v3680 = vadd.f32 %v3507, %v3679
      %v3681 = vpop.f32.mrf.mxu0
      %3682 = vmatprep.mubr.bf16.mxu0 0
      %3683 = vmatmul.mubr.bf16.gmra.mxu0 %v3356
      %v3684 = vpop.f32.mrf.mxu0
      %v3685 = vadd.f32 %v3512, %v3684
      %v3686 = vpop.f32.mrf.mxu0
      %v3687 = vpop.f32.mrf.mxu0
      %v3688 = vadd.f32 %v3515, %v3687
      %v3689 = vpop.f32.mrf.mxu0
      %3690 = vmatprep.mubr.bf16.mxu0 0
      %3691 = vmatmul.mubr.bf16.gmra.mxu0 %v3358
      %v3692 = vpop.f32.mrf.mxu0
      %v3693 = vadd.f32 %v3520, %v3692
      %v3694 = vpop.f32.mrf.mxu0
      %v3695 = vpop.f32.mrf.mxu0
      %v3696 = vadd.f32 %v3523, %v3695
      %v3697 = vpop.f32.mrf.mxu0
      %3698 = vdwg.mxu0
      %s3699 = scalar_lea.vmem %s7, 24
      %v3700 = vld [vmem:[%s3699] sm:$0xf]
      %v3701 = vld [vmem:[%s3699 + $0x4] sm:$0xf]
      %v3702 = vld [vmem:[%s3699 + $0x8] sm:$0x3]
      %v3706 = vunpack.c.l.b16 %v3700
      %v3707 = vunpack.c.l.b16 %v3701
      %v3708 = vunpack.c.l.b16 %v3702
      %v3709 = vpack.c.b16 %v3707, %v3706
      %v3710 = vpack.c.b16 %v3708, %v3708
      %v3712 = vsel %vm3329, %v3312, 0
      %v3715 = vsel %vm792, %v3710, 0
      %3717 = vmatprep.subr.bf16.mxu0 0
      %3718 = vmatpush1.bf16.msra.mxu0 0
      %3719 = vmatprep.subr.bf16.mxu0 0
      %3720 = vmatpush1.bf16.msra.mxu0 0
      %3721 = vmatprep.subr.bf16.mxu0 0
      %3722 = vmatpush1.bf16.msra.mxu0 0
      %3723 = vmatprep.subr.bf16.mxu0 0
      %3724 = vmatpush1.bf16.msra.mxu0 0
      %3725 = vmatprep.subr.bf16.mxu0 0
      %3726 = vmatpush1.bf16.msra.mxu0 0
      %3727 = vmatprep.subr.bf16.mxu0 0
      %3728 = vmatpush1.bf16.msra.mxu0 0
      %3729 = vmatprep.subr.bf16.mxu0 0
      %3730 = vmatpush1.bf16.msra.mxu0 %v3715
      %3731 = vmatprep.subr.bf16.mxu0 0
      %3732 = vmatpush1.bf16.msra.mxu0 %v3709
      %3733 = vmatprep.subr.bf16.mxu0 0
      %3734 = vmatpush2.bf16.msra.mxu0 0
      %3735 = vmatprep.subr.bf16.mxu0 0
      %3736 = vmatpush2.bf16.msra.mxu0 0
      %3737 = vmatprep.subr.bf16.mxu0 0
      %3738 = vmatpush2.bf16.msra.mxu0 0
      %3739 = vmatprep.subr.bf16.mxu0 0
      %3740 = vmatpush2.bf16.msra.mxu0 0
      %3741 = vmatprep.subr.bf16.mxu0 0
      %3742 = vmatpush2.bf16.msra.mxu0 0
      %3743 = vmatprep.subr.bf16.mxu0 0
      %3744 = vmatpush2.bf16.msra.mxu0 0
      %3745 = vmatprep.subr.bf16.mxu0 0
      %3746 = vmatpush2.bf16.msra.mxu0 0
      %3747 = vmatprep.subr.bf16.mxu0 0
      %3748 = vmatpush2.bf16.msra.mxu0 0
      %3749 = vmatprep.mubr.bf16.mxu0 0
      %3750 = vmatmul.mubr.bf16.gmra.mxu0 %v3332
      %v3751 = vpop.f32.mrf.mxu0
      %v3752 = vadd.f32 0.0, %v3751
      %v3753 = vpop.f32.mrf.mxu0
      %v3754 = vpop.f32.mrf.mxu0
      %v3755 = vadd.f32 0.0, %v3754
      %v3756 = vpop.f32.mrf.mxu0
      %3757 = vmatprep.mubr.bf16.mxu0 0
      %3758 = vmatmul.mubr.bf16.gmra.mxu0 %v3334
      %v3759 = vpop.f32.mrf.mxu0
      %v3760 = vadd.f32 0.0, %v3759
      %v3761 = vpop.f32.mrf.mxu0
      %v3762 = vpop.f32.mrf.mxu0
      %v3763 = vadd.f32 0.0, %v3762
      %v3764 = vpop.f32.mrf.mxu0
      %3765 = vmatprep.mubr.bf16.mxu0 0
      %3766 = vmatmul.mubr.bf16.gmra.mxu0 %v3336
      %v3767 = vpop.f32.mrf.mxu0
      %v3768 = vadd.f32 0.0, %v3767
      %v3769 = vpop.f32.mrf.mxu0
      %v3770 = vpop.f32.mrf.mxu0
      %v3771 = vadd.f32 0.0, %v3770
      %v3772 = vpop.f32.mrf.mxu0
      %3773 = vmatprep.mubr.bf16.mxu0 0
      %3774 = vmatmul.mubr.bf16.gmra.mxu0 %v3338
      %v3775 = vpop.f32.mrf.mxu0
      %v3776 = vadd.f32 0.0, %v3775
      %v3777 = vpop.f32.mrf.mxu0
      %v3778 = vpop.f32.mrf.mxu0
      %v3779 = vadd.f32 0.0, %v3778
      %v3780 = vpop.f32.mrf.mxu0
      %3781 = vmatprep.mubr.bf16.mxu0 0
      %3782 = vmatmul.mubr.bf16.gmra.mxu0 %v3340
      %v3783 = vpop.f32.mrf.mxu0
      %v3784 = vadd.f32 0.0, %v3783
      %v3785 = vpop.f32.mrf.mxu0
      %v3786 = vpop.f32.mrf.mxu0
      %v3787 = vadd.f32 0.0, %v3786
      %v3788 = vpop.f32.mrf.mxu0
      %3789 = vmatprep.mubr.bf16.mxu0 0
      %3790 = vmatmul.mubr.bf16.gmra.mxu0 %v3342
      %v3791 = vpop.f32.mrf.mxu0
      %v3792 = vadd.f32 0.0, %v3791
      %v3793 = vpop.f32.mrf.mxu0
      %v3794 = vpop.f32.mrf.mxu0
      %v3795 = vadd.f32 0.0, %v3794
      %v3796 = vpop.f32.mrf.mxu0
      %3797 = vmatprep.mubr.bf16.mxu0 0
      %3798 = vmatmul.mubr.bf16.gmra.mxu0 %v3344
      %v3799 = vpop.f32.mrf.mxu0
      %v3800 = vadd.f32 0.0, %v3799
      %v3801 = vpop.f32.mrf.mxu0
      %v3802 = vpop.f32.mrf.mxu0
      %v3803 = vadd.f32 0.0, %v3802
      %v3804 = vpop.f32.mrf.mxu0
      %3805 = vmatprep.mubr.bf16.mxu0 0
      %3806 = vmatmul.mubr.bf16.gmra.mxu0 %v3346
      %v3807 = vpop.f32.mrf.mxu0
      %v3808 = vadd.f32 0.0, %v3807
      %v3809 = vpop.f32.mrf.mxu0
      %v3810 = vpop.f32.mrf.mxu0
      %v3811 = vadd.f32 0.0, %v3810
      %v3812 = vpop.f32.mrf.mxu0
      %3813 = vmatprep.mubr.bf16.mxu0 0
      %3814 = vmatmul.mubr.bf16.gmra.mxu0 %v3348
      %v3815 = vpop.f32.mrf.mxu0
      %v3816 = vadd.f32 0.0, %v3815
      %v3817 = vpop.f32.mrf.mxu0
      %v3818 = vpop.f32.mrf.mxu0
      %v3819 = vadd.f32 0.0, %v3818
      %v3820 = vpop.f32.mrf.mxu0
      %3821 = vmatprep.mubr.bf16.mxu0 0
      %3822 = vmatmul.mubr.bf16.gmra.mxu0 %v3350
      %v3823 = vpop.f32.mrf.mxu0
      %v3824 = vadd.f32 0.0, %v3823
      %v3825 = vpop.f32.mrf.mxu0
      %v3826 = vpop.f32.mrf.mxu0
      %v3827 = vadd.f32 0.0, %v3826
      %v3828 = vpop.f32.mrf.mxu0
      %3829 = vmatprep.mubr.bf16.mxu0 0
      %3830 = vmatmul.mubr.bf16.gmra.mxu0 %v3352
      %v3831 = vpop.f32.mrf.mxu0
      %v3832 = vadd.f32 0.0, %v3831
      %v3833 = vpop.f32.mrf.mxu0
      %v3834 = vpop.f32.mrf.mxu0
      %v3835 = vadd.f32 0.0, %v3834
      %v3836 = vpop.f32.mrf.mxu0
      %3837 = vmatprep.mubr.bf16.mxu0 0
      %3838 = vmatmul.mubr.bf16.gmra.mxu0 %v3354
      %v3839 = vpop.f32.mrf.mxu0
      %v3840 = vadd.f32 0.0, %v3839
      %v3841 = vpop.f32.mrf.mxu0
      %v3842 = vpop.f32.mrf.mxu0
      %v3843 = vadd.f32 0.0, %v3842
      %v3844 = vpop.f32.mrf.mxu0
      %3845 = vmatprep.mubr.bf16.mxu0 0
      %3846 = vmatmul.mubr.bf16.gmra.mxu0 %v3356
      %v3847 = vpop.f32.mrf.mxu0
      %v3848 = vadd.f32 0.0, %v3847
      %v3849 = vpop.f32.mrf.mxu0
      %v3850 = vpop.f32.mrf.mxu0
      %v3851 = vadd.f32 0.0, %v3850
      %v3852 = vpop.f32.mrf.mxu0
      %3853 = vmatprep.mubr.bf16.mxu0 0
      %3854 = vmatmul.mubr.bf16.gmra.mxu0 %v3358
      %v3855 = vpop.f32.mrf.mxu0
      %v3856 = vadd.f32 0.0, %v3855
      %v3857 = vpop.f32.mrf.mxu0
      %v3858 = vpop.f32.mrf.mxu0
      %v3859 = vadd.f32 0.0, %v3858
      %v3860 = vpop.f32.mrf.mxu0
      %3861 = vmatprep.mubr.bf16.mxu0 0
      %3862 = vmatmul.mubr.bf16.gmra.mxu0 %v3360
      %v3863 = vpop.f32.mrf.mxu0
      %v3864 = vadd.f32 0.0, %v3863
      %v3865 = vpop.f32.mrf.mxu0
      %v3866 = vpop.f32.mrf.mxu0
      %v3867 = vadd.f32 0.0, %v3866
      %v3868 = vpop.f32.mrf.mxu0
      %3869 = vmatprep.mubr.bf16.mxu0 0
      %3870 = vmatmul.mubr.bf16.gmra.mxu0 %v3712
      %v3871 = vpop.f32.mrf.mxu0
      %v3872 = vadd.f32 0.0, %v3871
      %v3873 = vpop.f32.mrf.mxu0
      %v3874 = vpop.f32.mrf.mxu0
      %v3875 = vadd.f32 0.0, %v3874
      %v3876 = vpop.f32.mrf.mxu0
      %3877 = vdwg.mxu0
      %v3878 = vadd.f32 %v3573, %v3752
      %v3879 = vadd.f32 %v3576, %v3755
      %v3880 = vadd.f32 %v3581, %v3760
      %v3881 = vadd.f32 %v3584, %v3763
      %v3882 = vadd.f32 %v3589, %v3768
      %v3883 = vadd.f32 %v3592, %v3771
      %v3884 = vadd.f32 %v3597, %v3776
      %v3885 = vadd.f32 %v3600, %v3779
      %v3886 = vadd.f32 %v3605, %v3784
      %v3887 = vadd.f32 %v3608, %v3787
      %v3888 = vadd.f32 %v3613, %v3792
      %v3889 = vadd.f32 %v3616, %v3795
      %v3890 = vadd.f32 %v3621, %v3800
      %v3891 = vadd.f32 %v3624, %v3803
      %v3892 = vadd.f32 %v3629, %v3808
      %v3893 = vadd.f32 %v3632, %v3811
      %v3894 = vadd.f32 %v3637, %v3816
      %v3895 = vadd.f32 %v3640, %v3819
      %v3896 = vadd.f32 %v3645, %v3824
      %v3897 = vadd.f32 %v3648, %v3827
      %v3898 = vadd.f32 %v3653, %v3832
      %v3899 = vadd.f32 %v3656, %v3835
      %v3900 = vadd.f32 %v3661, %v3840
      %v3901 = vadd.f32 %v3664, %v3843
      %v3902 = vadd.f32 %v3669, %v3848
      %v3903 = vadd.f32 %v3672, %v3851
      %v3904 = vadd.f32 %v3677, %v3856
      %v3905 = vadd.f32 %v3680, %v3859
      %v3906 = vadd.f32 %v3685, %v3864
      %v3907 = vadd.f32 %v3688, %v3867
      %v3908 = vadd.f32 %v3693, %v3872
      %v3909 = vadd.f32 %v3696, %v3875
      %s3910 = scalar_lea.vmem %s7, 36
      %v3911 = vld [vmem:[%s3910] sm:$0xf]
      %v3912 = vld [vmem:[%s3910 + $0x4] sm:$0xf]
      %v3913 = vld [vmem:[%s3910 + $0x8] sm:$0x3]
      %v3917 = vunpack.c.l.b16 %v3911
      %v3918 = vunpack.c.l.b16 %v3912
      %v3919 = vunpack.c.l.b16 %v3913
      %v3920 = vpack.c.b16 %v3918, %v3917
      %v3921 = vpack.c.b16 %v3919, %v3919
      %v3924 = vsel %vm792, %v3921, 0
      %3926 = vmatprep.subr.bf16.mxu0 0
      %3927 = vmatpush1.bf16.msra.mxu0 0
      %3928 = vmatprep.subr.bf16.mxu0 0
      %3929 = vmatpush1.bf16.msra.mxu0 0
      %3930 = vmatprep.subr.bf16.mxu0 0
      %3931 = vmatpush1.bf16.msra.mxu0 0
      %3932 = vmatprep.subr.bf16.mxu0 0
      %3933 = vmatpush1.bf16.msra.mxu0 0
      %3934 = vmatprep.subr.bf16.mxu0 0
      %3935 = vmatpush1.bf16.msra.mxu0 0
      %3936 = vmatprep.subr.bf16.mxu0 0
      %3937 = vmatpush1.bf16.msra.mxu0 0
      %3938 = vmatprep.subr.bf16.mxu0 0
      %3939 = vmatpush1.bf16.msra.mxu0 %v3924
      %3940 = vmatprep.subr.bf16.mxu0 0
      %3941 = vmatpush1.bf16.msra.mxu0 %v3920
      %3942 = vmatprep.subr.bf16.mxu0 0
      %3943 = vmatpush2.bf16.msra.mxu0 0
      %3944 = vmatprep.subr.bf16.mxu0 0
      %3945 = vmatpush2.bf16.msra.mxu0 0
      %3946 = vmatprep.subr.bf16.mxu0 0
      %3947 = vmatpush2.bf16.msra.mxu0 0
      %3948 = vmatprep.subr.bf16.mxu0 0
      %3949 = vmatpush2.bf16.msra.mxu0 0
      %3950 = vmatprep.subr.bf16.mxu0 0
      %3951 = vmatpush2.bf16.msra.mxu0 0
      %3952 = vmatprep.subr.bf16.mxu0 0
      %3953 = vmatpush2.bf16.msra.mxu0 0
      %3954 = vmatprep.subr.bf16.mxu0 0
      %3955 = vmatpush2.bf16.msra.mxu0 0
      %3956 = vmatprep.subr.bf16.mxu0 0
      %3957 = vmatpush2.bf16.msra.mxu0 0
      %3958 = vmatprep.mubr.bf16.mxu0 0
      %3959 = vmatmul.mubr.bf16.gmra.mxu0 %v3334
      %v3960 = vpop.f32.mrf.mxu0
      %v3961 = vadd.f32 0.0, %v3960
      %v3962 = vpop.f32.mrf.mxu0
      %v3963 = vpop.f32.mrf.mxu0
      %v3964 = vadd.f32 0.0, %v3963
      %v3965 = vpop.f32.mrf.mxu0
      %3966 = vmatprep.mubr.bf16.mxu0 0
      %3967 = vmatmul.mubr.bf16.gmra.mxu0 %v3336
      %v3968 = vpop.f32.mrf.mxu0
      %v3969 = vadd.f32 0.0, %v3968
      %v3970 = vpop.f32.mrf.mxu0
      %v3971 = vpop.f32.mrf.mxu0
      %v3972 = vadd.f32 0.0, %v3971
      %v3973 = vpop.f32.mrf.mxu0
      %3974 = vmatprep.mubr.bf16.mxu0 0
      %3975 = vmatmul.mubr.bf16.gmra.mxu0 %v3338
      %v3976 = vpop.f32.mrf.mxu0
      %v3977 = vadd.f32 0.0, %v3976
      %v3978 = vpop.f32.mrf.mxu0
      %v3979 = vpop.f32.mrf.mxu0
      %v3980 = vadd.f32 0.0, %v3979
      %v3981 = vpop.f32.mrf.mxu0
      %3982 = vmatprep.mubr.bf16.mxu0 0
      %3983 = vmatmul.mubr.bf16.gmra.mxu0 %v3340
      %v3984 = vpop.f32.mrf.mxu0
      %v3985 = vadd.f32 0.0, %v3984
      %v3986 = vpop.f32.mrf.mxu0
      %v3987 = vpop.f32.mrf.mxu0
      %v3988 = vadd.f32 0.0, %v3987
      %v3989 = vpop.f32.mrf.mxu0
      %3990 = vmatprep.mubr.bf16.mxu0 0
      %3991 = vmatmul.mubr.bf16.gmra.mxu0 %v3342
      %v3992 = vpop.f32.mrf.mxu0
      %v3993 = vadd.f32 0.0, %v3992
      %v3994 = vpop.f32.mrf.mxu0
      %v3995 = vpop.f32.mrf.mxu0
      %v3996 = vadd.f32 0.0, %v3995
      %v3997 = vpop.f32.mrf.mxu0
      %3998 = vmatprep.mubr.bf16.mxu0 0
      %3999 = vmatmul.mubr.bf16.gmra.mxu0 %v3344
      %v4000 = vpop.f32.mrf.mxu0
      %v4001 = vadd.f32 0.0, %v4000
      %v4002 = vpop.f32.mrf.mxu0
      %v4003 = vpop.f32.mrf.mxu0
      %v4004 = vadd.f32 0.0, %v4003
      %v4005 = vpop.f32.mrf.mxu0
      %4006 = vmatprep.mubr.bf16.mxu0 0
      %4007 = vmatmul.mubr.bf16.gmra.mxu0 %v3346
      %v4008 = vpop.f32.mrf.mxu0
      %v4009 = vadd.f32 0.0, %v4008
      %v4010 = vpop.f32.mrf.mxu0
      %v4011 = vpop.f32.mrf.mxu0
      %v4012 = vadd.f32 0.0, %v4011
      %v4013 = vpop.f32.mrf.mxu0
      %4014 = vmatprep.mubr.bf16.mxu0 0
      %4015 = vmatmul.mubr.bf16.gmra.mxu0 %v3348
      %v4016 = vpop.f32.mrf.mxu0
      %v4017 = vadd.f32 0.0, %v4016
      %v4018 = vpop.f32.mrf.mxu0
      %v4019 = vpop.f32.mrf.mxu0
      %v4020 = vadd.f32 0.0, %v4019
      %v4021 = vpop.f32.mrf.mxu0
      %4022 = vmatprep.mubr.bf16.mxu0 0
      %4023 = vmatmul.mubr.bf16.gmra.mxu0 %v3350
      %v4024 = vpop.f32.mrf.mxu0
      %v4025 = vadd.f32 0.0, %v4024
      %v4026 = vpop.f32.mrf.mxu0
      %v4027 = vpop.f32.mrf.mxu0
      %v4028 = vadd.f32 0.0, %v4027
      %v4029 = vpop.f32.mrf.mxu0
      %4030 = vmatprep.mubr.bf16.mxu0 0
      %4031 = vmatmul.mubr.bf16.gmra.mxu0 %v3352
      %v4032 = vpop.f32.mrf.mxu0
      %v4033 = vadd.f32 0.0, %v4032
      %v4034 = vpop.f32.mrf.mxu0
      %v4035 = vpop.f32.mrf.mxu0
      %v4036 = vadd.f32 0.0, %v4035
      %v4037 = vpop.f32.mrf.mxu0
      %4038 = vmatprep.mubr.bf16.mxu0 0
      %4039 = vmatmul.mubr.bf16.gmra.mxu0 %v3354
      %v4040 = vpop.f32.mrf.mxu0
      %v4041 = vadd.f32 0.0, %v4040
      %v4042 = vpop.f32.mrf.mxu0
      %v4043 = vpop.f32.mrf.mxu0
      %v4044 = vadd.f32 0.0, %v4043
      %v4045 = vpop.f32.mrf.mxu0
      %4046 = vmatprep.mubr.bf16.mxu0 0
      %4047 = vmatmul.mubr.bf16.gmra.mxu0 %v3356
      %v4048 = vpop.f32.mrf.mxu0
      %v4049 = vadd.f32 0.0, %v4048
      %v4050 = vpop.f32.mrf.mxu0
      %v4051 = vpop.f32.mrf.mxu0
      %v4052 = vadd.f32 0.0, %v4051
      %v4053 = vpop.f32.mrf.mxu0
      %4054 = vmatprep.mubr.bf16.mxu0 0
      %4055 = vmatmul.mubr.bf16.gmra.mxu0 %v3358
      %v4056 = vpop.f32.mrf.mxu0
      %v4057 = vadd.f32 0.0, %v4056
      %v4058 = vpop.f32.mrf.mxu0
      %v4059 = vpop.f32.mrf.mxu0
      %v4060 = vadd.f32 0.0, %v4059
      %v4061 = vpop.f32.mrf.mxu0
      %4062 = vmatprep.mubr.bf16.mxu0 0
      %4063 = vmatmul.mubr.bf16.gmra.mxu0 %v3360
      %v4064 = vpop.f32.mrf.mxu0
      %v4065 = vadd.f32 0.0, %v4064
      %v4066 = vpop.f32.mrf.mxu0
      %v4067 = vpop.f32.mrf.mxu0
      %v4068 = vadd.f32 0.0, %v4067
      %v4069 = vpop.f32.mrf.mxu0
      %4070 = vmatprep.mubr.bf16.mxu0 0
      %4071 = vmatmul.mubr.bf16.gmra.mxu0 %v3712
      %v4072 = vpop.f32.mrf.mxu0
      %v4073 = vadd.f32 0.0, %v4072
      %v4074 = vpop.f32.mrf.mxu0
      %v4075 = vpop.f32.mrf.mxu0
      %v4076 = vadd.f32 0.0, %v4075
      %v4077 = vpop.f32.mrf.mxu0
      %4078 = vmatprep.mubr.bf16.mxu0 0
      %4079 = vmatmul.mubr.bf16.gmra.mxu0 %v3330
      %v4080 = vpop.f32.mrf.mxu0
      %v4081 = vadd.f32 0.0, %v4080
      %v4082 = vpop.f32.mrf.mxu0
      %v4083 = vpop.f32.mrf.mxu0
      %v4084 = vadd.f32 0.0, %v4083
      %v4085 = vpop.f32.mrf.mxu0
      %4086 = vdwg.mxu0
      %v4087 = vadd.f32 %v3878, %v3961
      %v4088 = vadd.f32 %v3879, %v3964
      %v4089 = vadd.f32 %v3880, %v3969
      %v4090 = vadd.f32 %v3881, %v3972
      %v4091 = vadd.f32 %v3882, %v3977
      %v4092 = vadd.f32 %v3883, %v3980
      %v4093 = vadd.f32 %v3884, %v3985
      %v4094 = vadd.f32 %v3885, %v3988
      %v4095 = vadd.f32 %v3886, %v3993
      %v4096 = vadd.f32 %v3887, %v3996
      %v4097 = vadd.f32 %v3888, %v4001
      %v4098 = vadd.f32 %v3889, %v4004
      %v4099 = vadd.f32 %v3890, %v4009
      %v4100 = vadd.f32 %v3891, %v4012
      %v4101 = vadd.f32 %v3892, %v4017
      %v4102 = vadd.f32 %v3893, %v4020
      %v4103 = vadd.f32 %v3894, %v4025
      %v4104 = vadd.f32 %v3895, %v4028
      %v4105 = vadd.f32 %v3896, %v4033
      %v4106 = vadd.f32 %v3897, %v4036
      %v4107 = vadd.f32 %v3898, %v4041
      %v4108 = vadd.f32 %v3899, %v4044
      %v4109 = vadd.f32 %v3900, %v4049
      %v4110 = vadd.f32 %v3901, %v4052
      %v4111 = vadd.f32 %v3902, %v4057
      %v4112 = vadd.f32 %v3903, %v4060
      %v4113 = vadd.f32 %v3904, %v4065
      %v4114 = vadd.f32 %v3905, %v4068
      %v4115 = vadd.f32 %v3906, %v4073
      %v4116 = vadd.f32 %v3907, %v4076
      %v4117 = vadd.f32 %v3908, %v4081
      %v4118 = vadd.f32 %v3909, %v4084
      %s4119 = scalar_lea.vmem %s7, 48
      %v4120 = vld [vmem:[%s4119] sm:$0xf]
      %v4121 = vld [vmem:[%s4119 + $0x4] sm:$0xf]
      %v4122 = vld [vmem:[%s4119 + $0x8] sm:$0x3]
      %v4126 = vunpack.c.l.b16 %v4120
      %v4127 = vunpack.c.l.b16 %v4121
      %v4128 = vunpack.c.l.b16 %v4122
      %v4129 = vpack.c.b16 %v4127, %v4126
      %v4130 = vpack.c.b16 %v4128, %v4128
      %v4133 = vsel %vm792, %v4130, 0
      %4135 = vmatprep.subr.bf16.mxu0 0
      %4136 = vmatpush1.bf16.msra.mxu0 0
      %4137 = vmatprep.subr.bf16.mxu0 0
      %4138 = vmatpush1.bf16.msra.mxu0 0
      %4139 = vmatprep.subr.bf16.mxu0 0
      %4140 = vmatpush1.bf16.msra.mxu0 0
      %4141 = vmatprep.subr.bf16.mxu0 0
      %4142 = vmatpush1.bf16.msra.mxu0 0
      %4143 = vmatprep.subr.bf16.mxu0 0
      %4144 = vmatpush1.bf16.msra.mxu0 0
      %4145 = vmatprep.subr.bf16.mxu0 0
      %4146 = vmatpush1.bf16.msra.mxu0 0
      %4147 = vmatprep.subr.bf16.mxu0 0
      %4148 = vmatpush1.bf16.msra.mxu0 %v4133
      %4149 = vmatprep.subr.bf16.mxu0 0
      %4150 = vmatpush1.bf16.msra.mxu0 %v4129
      %4151 = vmatprep.subr.bf16.mxu0 0
      %4152 = vmatpush2.bf16.msra.mxu0 0
      %4153 = vmatprep.subr.bf16.mxu0 0
      %4154 = vmatpush2.bf16.msra.mxu0 0
      %4155 = vmatprep.subr.bf16.mxu0 0
      %4156 = vmatpush2.bf16.msra.mxu0 0
      %4157 = vmatprep.subr.bf16.mxu0 0
      %4158 = vmatpush2.bf16.msra.mxu0 0
      %4159 = vmatprep.subr.bf16.mxu0 0
      %4160 = vmatpush2.bf16.msra.mxu0 0
      %4161 = vmatprep.subr.bf16.mxu0 0
      %4162 = vmatpush2.bf16.msra.mxu0 0
      %4163 = vmatprep.subr.bf16.mxu0 0
      %4164 = vmatpush2.bf16.msra.mxu0 0
      %4165 = vmatprep.subr.bf16.mxu0 0
      %4166 = vmatpush2.bf16.msra.mxu0 0
      %4167 = vmatprep.mubr.bf16.mxu0 0
      %4168 = vmatmul.mubr.bf16.gmra.mxu0 %v3336
      %v4169 = vpop.f32.mrf.mxu0
      %v4170 = vadd.f32 0.0, %v4169
      %v4171 = vpop.f32.mrf.mxu0
      %v4172 = vpop.f32.mrf.mxu0
      %v4173 = vadd.f32 0.0, %v4172
      %v4174 = vpop.f32.mrf.mxu0
      %4175 = vmatprep.mubr.bf16.mxu0 0
      %4176 = vmatmul.mubr.bf16.gmra.mxu0 %v3338
      %v4177 = vpop.f32.mrf.mxu0
      %v4178 = vadd.f32 0.0, %v4177
      %v4179 = vpop.f32.mrf.mxu0
      %v4180 = vpop.f32.mrf.mxu0
      %v4181 = vadd.f32 0.0, %v4180
      %v4182 = vpop.f32.mrf.mxu0
      %4183 = vmatprep.mubr.bf16.mxu0 0
      %4184 = vmatmul.mubr.bf16.gmra.mxu0 %v3340
      %v4185 = vpop.f32.mrf.mxu0
      %v4186 = vadd.f32 0.0, %v4185
      %v4187 = vpop.f32.mrf.mxu0
      %v4188 = vpop.f32.mrf.mxu0
      %v4189 = vadd.f32 0.0, %v4188
      %v4190 = vpop.f32.mrf.mxu0
      %4191 = vmatprep.mubr.bf16.mxu0 0
      %4192 = vmatmul.mubr.bf16.gmra.mxu0 %v3342
      %v4193 = vpop.f32.mrf.mxu0
      %v4194 = vadd.f32 0.0, %v4193
      %v4195 = vpop.f32.mrf.mxu0
      %v4196 = vpop.f32.mrf.mxu0
      %v4197 = vadd.f32 0.0, %v4196
      %v4198 = vpop.f32.mrf.mxu0
      %4199 = vmatprep.mubr.bf16.mxu0 0
      %4200 = vmatmul.mubr.bf16.gmra.mxu0 %v3344
      %v4201 = vpop.f32.mrf.mxu0
      %v4202 = vadd.f32 0.0, %v4201
      %v4203 = vpop.f32.mrf.mxu0
      %v4204 = vpop.f32.mrf.mxu0
      %v4205 = vadd.f32 0.0, %v4204
      %v4206 = vpop.f32.mrf.mxu0
      %4207 = vmatprep.mubr.bf16.mxu0 0
      %4208 = vmatmul.mubr.bf16.gmra.mxu0 %v3346
      %v4209 = vpop.f32.mrf.mxu0
      %v4210 = vadd.f32 0.0, %v4209
      %v4211 = vpop.f32.mrf.mxu0
      %v4212 = vpop.f32.mrf.mxu0
      %v4213 = vadd.f32 0.0, %v4212
      %v4214 = vpop.f32.mrf.mxu0
      %4215 = vmatprep.mubr.bf16.mxu0 0
      %4216 = vmatmul.mubr.bf16.gmra.mxu0 %v3348
      %v4217 = vpop.f32.mrf.mxu0
      %v4218 = vadd.f32 0.0, %v4217
      %v4219 = vpop.f32.mrf.mxu0
      %v4220 = vpop.f32.mrf.mxu0
      %v4221 = vadd.f32 0.0, %v4220
      %v4222 = vpop.f32.mrf.mxu0
      %4223 = vmatprep.mubr.bf16.mxu0 0
      %4224 = vmatmul.mubr.bf16.gmra.mxu0 %v3350
      %v4225 = vpop.f32.mrf.mxu0
      %v4226 = vadd.f32 0.0, %v4225
      %v4227 = vpop.f32.mrf.mxu0
      %v4228 = vpop.f32.mrf.mxu0
      %v4229 = vadd.f32 0.0, %v4228
      %v4230 = vpop.f32.mrf.mxu0
      %4231 = vmatprep.mubr.bf16.mxu0 0
      %4232 = vmatmul.mubr.bf16.gmra.mxu0 %v3352
      %v4233 = vpop.f32.mrf.mxu0
      %v4234 = vadd.f32 0.0, %v4233
      %v4235 = vpop.f32.mrf.mxu0
      %v4236 = vpop.f32.mrf.mxu0
      %v4237 = vadd.f32 0.0, %v4236
      %v4238 = vpop.f32.mrf.mxu0
      %4239 = vmatprep.mubr.bf16.mxu0 0
      %4240 = vmatmul.mubr.bf16.gmra.mxu0 %v3354
      %v4241 = vpop.f32.mrf.mxu0
      %v4242 = vadd.f32 0.0, %v4241
      %v4243 = vpop.f32.mrf.mxu0
      %v4244 = vpop.f32.mrf.mxu0
      %v4245 = vadd.f32 0.0, %v4244
      %v4246 = vpop.f32.mrf.mxu0
      %4247 = vmatprep.mubr.bf16.mxu0 0
      %4248 = vmatmul.mubr.bf16.gmra.mxu0 %v3356
      %v4249 = vpop.f32.mrf.mxu0
      %v4250 = vadd.f32 0.0, %v4249
      %v4251 = vpop.f32.mrf.mxu0
      %v4252 = vpop.f32.mrf.mxu0
      %v4253 = vadd.f32 0.0, %v4252
      %v4254 = vpop.f32.mrf.mxu0
      %4255 = vmatprep.mubr.bf16.mxu0 0
      %4256 = vmatmul.mubr.bf16.gmra.mxu0 %v3358
      %v4257 = vpop.f32.mrf.mxu0
      %v4258 = vadd.f32 0.0, %v4257
      %v4259 = vpop.f32.mrf.mxu0
      %v4260 = vpop.f32.mrf.mxu0
      %v4261 = vadd.f32 0.0, %v4260
      %v4262 = vpop.f32.mrf.mxu0
      %4263 = vmatprep.mubr.bf16.mxu0 0
      %4264 = vmatmul.mubr.bf16.gmra.mxu0 %v3360
      %v4265 = vpop.f32.mrf.mxu0
      %v4266 = vadd.f32 0.0, %v4265
      %v4267 = vpop.f32.mrf.mxu0
      %v4268 = vpop.f32.mrf.mxu0
      %v4269 = vadd.f32 0.0, %v4268
      %v4270 = vpop.f32.mrf.mxu0
      %4271 = vmatprep.mubr.bf16.mxu0 0
      %4272 = vmatmul.mubr.bf16.gmra.mxu0 %v3712
      %v4273 = vpop.f32.mrf.mxu0
      %v4274 = vadd.f32 0.0, %v4273
      %v4275 = vpop.f32.mrf.mxu0
      %v4276 = vpop.f32.mrf.mxu0
      %v4277 = vadd.f32 0.0, %v4276
      %v4278 = vpop.f32.mrf.mxu0
      %4279 = vmatprep.mubr.bf16.mxu0 0
      %4280 = vmatmul.mubr.bf16.gmra.mxu0 %v3330
      %v4281 = vpop.f32.mrf.mxu0
      %v4282 = vadd.f32 0.0, %v4281
      %v4283 = vpop.f32.mrf.mxu0
      %v4284 = vpop.f32.mrf.mxu0
      %v4285 = vadd.f32 0.0, %v4284
      %v4286 = vpop.f32.mrf.mxu0
      %4287 = vmatprep.mubr.bf16.mxu0 0
      %4288 = vmatmul.mubr.bf16.gmra.mxu0 %v3330
      %v4289 = vpop.f32.mrf.mxu0
      %v4290 = vadd.f32 0.0, %v4289
      %v4291 = vpop.f32.mrf.mxu0
      %v4292 = vpop.f32.mrf.mxu0
      %v4293 = vadd.f32 0.0, %v4292
      %v4294 = vpop.f32.mrf.mxu0
      %4295 = vdwg.mxu0
      %v4296 = vadd.f32 %v4087, %v4170
      %v4297 = vadd.f32 %v4088, %v4173
      %v4298 = vadd.f32 %v4089, %v4178
      %v4299 = vadd.f32 %v4090, %v4181
      %v4300 = vadd.f32 %v4091, %v4186
      %v4301 = vadd.f32 %v4092, %v4189
      %v4302 = vadd.f32 %v4093, %v4194
      %v4303 = vadd.f32 %v4094, %v4197
      %v4304 = vadd.f32 %v4095, %v4202
      %v4305 = vadd.f32 %v4096, %v4205
      %v4306 = vadd.f32 %v4097, %v4210
      %v4307 = vadd.f32 %v4098, %v4213
      %v4308 = vadd.f32 %v4099, %v4218
      %v4309 = vadd.f32 %v4100, %v4221
      %v4310 = vadd.f32 %v4101, %v4226
      %v4311 = vadd.f32 %v4102, %v4229
      %v4312 = vadd.f32 %v4103, %v4234
      %v4313 = vadd.f32 %v4104, %v4237
      %v4314 = vadd.f32 %v4105, %v4242
      %v4315 = vadd.f32 %v4106, %v4245
      %v4316 = vadd.f32 %v4107, %v4250
      %v4317 = vadd.f32 %v4108, %v4253
      %v4318 = vadd.f32 %v4109, %v4258
      %v4319 = vadd.f32 %v4110, %v4261
      %v4320 = vadd.f32 %v4111, %v4266
      %v4321 = vadd.f32 %v4112, %v4269
      %v4322 = vadd.f32 %v4113, %v4274
      %v4323 = vadd.f32 %v4114, %v4277
      %v4324 = vadd.f32 %v4115, %v4282
      %v4325 = vadd.f32 %v4116, %v4285
      %v4326 = vadd.f32 %v4117, %v4290
      %v4327 = vadd.f32 %v4118, %v4293
      %v4328 = vld [vmem:[%s8] sm:$0x1]
      %v4330 = vlaneseq
      %v4331 = vshrl.u32 %v4330, 7
      %v4332 = vsub.s32 0, %v4331
      %v4333 = vrot.slane %v4328, %v4332
      %v4335 = vadd.f32 %v4296, %v4333
      %v4336 = vadd.f32 %v4297, %v4333
      %v4337 = vadd.f32 %v4298, %v4333
      %v4338 = vadd.f32 %v4299, %v4333
      %v4339 = vadd.f32 %v4300, %v4333
      %v4340 = vadd.f32 %v4301, %v4333
      %v4341 = vadd.f32 %v4302, %v4333
      %v4342 = vadd.f32 %v4303, %v4333
      %v4343 = vadd.f32 %v4304, %v4333
      %v4344 = vadd.f32 %v4305, %v4333
      %v4345 = vadd.f32 %v4306, %v4333
      %v4346 = vadd.f32 %v4307, %v4333
      %v4347 = vadd.f32 %v4308, %v4333
      %v4348 = vadd.f32 %v4309, %v4333
      %v4349 = vadd.f32 %v4310, %v4333
      %v4350 = vadd.f32 %v4311, %v4333
      %v4351 = vadd.f32 %v4312, %v4333
      %v4352 = vadd.f32 %v4313, %v4333
      %v4353 = vadd.f32 %v4314, %v4333
      %v4354 = vadd.f32 %v4315, %v4333
      %v4355 = vadd.f32 %v4316, %v4333
      %v4356 = vadd.f32 %v4317, %v4333
      %v4357 = vadd.f32 %v4318, %v4333
      %v4358 = vadd.f32 %v4319, %v4333
      %v4359 = vadd.f32 %v4320, %v4333
      %v4360 = vadd.f32 %v4321, %v4333
      %v4361 = vadd.f32 %v4322, %v4333
      %v4362 = vadd.f32 %v4323, %v4333
      %v4363 = vadd.f32 %v4324, %v4333
      %v4364 = vadd.f32 %v4325, %v4333
      %v4365 = vadd.f32 %v4326, %v4333
      %v4366 = vadd.f32 %v4327, %v4333
      %v4367 = vmax.f32 %v4335, 0.0
      %v4368 = vmax.f32 %v4336, 0.0
      %v4369 = vmax.f32 %v4337, 0.0
      %v4370 = vmax.f32 %v4338, 0.0
      %v4371 = vmax.f32 %v4339, 0.0
      %v4372 = vmax.f32 %v4340, 0.0
      %v4373 = vmax.f32 %v4341, 0.0
      %v4374 = vmax.f32 %v4342, 0.0
      %v4375 = vmax.f32 %v4343, 0.0
      %v4376 = vmax.f32 %v4344, 0.0
      %v4377 = vmax.f32 %v4345, 0.0
      %v4378 = vmax.f32 %v4346, 0.0
      %v4379 = vmax.f32 %v4347, 0.0
      %v4380 = vmax.f32 %v4348, 0.0
      %v4381 = vmax.f32 %v4349, 0.0
      %v4382 = vmax.f32 %v4350, 0.0
      %v4383 = vmax.f32 %v4351, 0.0
      %v4384 = vmax.f32 %v4352, 0.0
      %v4385 = vmax.f32 %v4353, 0.0
      %v4386 = vmax.f32 %v4354, 0.0
      %v4387 = vmax.f32 %v4355, 0.0
      %v4388 = vmax.f32 %v4356, 0.0
      %v4389 = vmax.f32 %v4357, 0.0
      %v4390 = vmax.f32 %v4358, 0.0
      %v4391 = vmax.f32 %v4359, 0.0
      %v4392 = vmax.f32 %v4360, 0.0
      %v4393 = vmax.f32 %v4361, 0.0
      %v4394 = vmax.f32 %v4362, 0.0
      %v4395 = vmax.f32 %v4363, 0.0
      %v4396 = vmax.f32 %v4364, 0.0
      %v4397 = vmax.f32 %v4365, 0.0
      %v4398 = vmax.f32 %v4366, 0.0
      %4431 = vrot.lane.b32.xlu0 %v957, 120
      %v4432 = vpop.permute.xlu0 %4431
      %4433 = vrot.lane.b32.xlu0 %v958, 120
      %v4434 = vpop.permute.xlu0 %4433
      %4435 = vrot.lane.b32.xlu0 %v959, 120
      %v4436 = vpop.permute.xlu0 %4435
      %4437 = vrot.lane.b32.xlu0 %v960, 120
      %v4438 = vpop.permute.xlu0 %4437
      %4439 = vrot.lane.b32.xlu0 %v961, 120
      %v4440 = vpop.permute.xlu0 %4439
      %4441 = vrot.lane.b32.xlu0 %v962, 120
      %v4442 = vpop.permute.xlu0 %4441
      %4443 = vrot.lane.b32.xlu0 %v963, 120
      %v4444 = vpop.permute.xlu0 %4443
      %4445 = vrot.lane.b32.xlu0 %v964, 120
      %v4446 = vpop.permute.xlu0 %4445
      %4447 = vrot.lane.b32.xlu0 %v965, 120
      %v4448 = vpop.permute.xlu0 %4447
      %4449 = vrot.lane.b32.xlu0 %v966, 120
      %v4450 = vpop.permute.xlu0 %4449
      %4451 = vrot.lane.b32.xlu0 %v967, 120
      %v4452 = vpop.permute.xlu0 %4451
      %4453 = vrot.lane.b32.xlu0 %v968, 120
      %v4454 = vpop.permute.xlu0 %4453
      %4455 = vrot.lane.b32.xlu0 %v969, 120
      %v4456 = vpop.permute.xlu0 %4455
      %4457 = vrot.lane.b32.xlu0 %v970, 120
      %v4458 = vpop.permute.xlu0 %4457
      %4459 = vrot.lane.b32.xlu0 %v971, 120
      %v4460 = vpop.permute.xlu0 %4459
      %4461 = vrot.lane.b32.xlu0 %v972, 120
      %v4462 = vpop.permute.xlu0 %4461
      %4463 = vrot.lane.b32.xlu0 %v973, 120
      %v4464 = vpop.permute.xlu0 %4463
      %4465 = vrot.lane.b32.xlu0 %v974, 120
      %v4466 = vpop.permute.xlu0 %4465
      %4467 = vrot.lane.b32.xlu0 %v975, 120
      %v4468 = vpop.permute.xlu0 %4467
      %4469 = vrot.lane.b32.xlu0 %v976, 120
      %v4470 = vpop.permute.xlu0 %4469
      %4471 = vrot.lane.b32.xlu0 %v977, 120
      %v4472 = vpop.permute.xlu0 %4471
      %4473 = vrot.lane.b32.xlu0 %v978, 120
      %v4474 = vpop.permute.xlu0 %4473
      %4475 = vrot.lane.b32.xlu0 %v979, 120
      %v4476 = vpop.permute.xlu0 %4475
      %4477 = vrot.lane.b32.xlu0 %v980, 120
      %v4478 = vpop.permute.xlu0 %4477
      %4479 = vrot.lane.b32.xlu0 %v981, 120
      %v4480 = vpop.permute.xlu0 %4479
      %4481 = vrot.lane.b32.xlu0 %v982, 120
      %v4482 = vpop.permute.xlu0 %4481
      %4483 = vrot.lane.b32.xlu0 %v983, 120
      %v4484 = vpop.permute.xlu0 %4483
      %4485 = vrot.lane.b32.xlu0 %v984, 120
      %v4486 = vpop.permute.xlu0 %4485
      %4487 = vrot.lane.b32.xlu0 %v985, 120
      %v4488 = vpop.permute.xlu0 %4487
      %4489 = vrot.lane.b32.xlu0 %v986, 120
      %v4490 = vpop.permute.xlu0 %4489
      %4491 = vrot.lane.b32.xlu0 %v987, 120
      %v4492 = vpop.permute.xlu0 %4491
      %4493 = vrot.lane.b32.xlu0 %v988, 120
      %v4494 = vpop.permute.xlu0 %4493
      %4559 = vrot.lane.b32.xlu0 %v2478, 8
      %v4560 = vpop.permute.xlu0 %4559
      %4561 = vrot.lane.b32.xlu0 %v2479, 8
      %v4562 = vpop.permute.xlu0 %4561
      %4563 = vrot.lane.b32.xlu0 %v2480, 8
      %v4564 = vpop.permute.xlu0 %4563
      %4565 = vrot.lane.b32.xlu0 %v2481, 8
      %v4566 = vpop.permute.xlu0 %4565
      %4567 = vrot.lane.b32.xlu0 %v2482, 8
      %v4568 = vpop.permute.xlu0 %4567
      %4569 = vrot.lane.b32.xlu0 %v2483, 8
      %v4570 = vpop.permute.xlu0 %4569
      %4571 = vrot.lane.b32.xlu0 %v2484, 8
      %v4572 = vpop.permute.xlu0 %4571
      %4573 = vrot.lane.b32.xlu0 %v2485, 8
      %v4574 = vpop.permute.xlu0 %4573
      %4575 = vrot.lane.b32.xlu0 %v2486, 8
      %v4576 = vpop.permute.xlu0 %4575
      %4577 = vrot.lane.b32.xlu0 %v2487, 8
      %v4578 = vpop.permute.xlu0 %4577
      %4579 = vrot.lane.b32.xlu0 %v2488, 8
      %v4580 = vpop.permute.xlu0 %4579
      %4581 = vrot.lane.b32.xlu0 %v2489, 8
      %v4582 = vpop.permute.xlu0 %4581
      %4583 = vrot.lane.b32.xlu0 %v2490, 8
      %v4584 = vpop.permute.xlu0 %4583
      %4585 = vrot.lane.b32.xlu0 %v2491, 8
      %v4586 = vpop.permute.xlu0 %4585
      %4587 = vrot.lane.b32.xlu0 %v2492, 8
      %v4588 = vpop.permute.xlu0 %4587
      %4589 = vrot.lane.b32.xlu0 %v2493, 8
      %v4590 = vpop.permute.xlu0 %4589
      %4591 = vrot.lane.b32.xlu0 %v2494, 8
      %v4592 = vpop.permute.xlu0 %4591
      %4593 = vrot.lane.b32.xlu0 %v2495, 8
      %v4594 = vpop.permute.xlu0 %4593
      %4595 = vrot.lane.b32.xlu0 %v2496, 8
      %v4596 = vpop.permute.xlu0 %4595
      %4597 = vrot.lane.b32.xlu0 %v2497, 8
      %v4598 = vpop.permute.xlu0 %4597
      %4599 = vrot.lane.b32.xlu0 %v2498, 8
      %v4600 = vpop.permute.xlu0 %4599
      %4601 = vrot.lane.b32.xlu0 %v2499, 8
      %v4602 = vpop.permute.xlu0 %4601
      %4603 = vrot.lane.b32.xlu0 %v2500, 8
      %v4604 = vpop.permute.xlu0 %4603
      %4605 = vrot.lane.b32.xlu0 %v2501, 8
      %v4606 = vpop.permute.xlu0 %4605
      %4607 = vrot.lane.b32.xlu0 %v2502, 8
      %v4608 = vpop.permute.xlu0 %4607
      %4609 = vrot.lane.b32.xlu0 %v2503, 8
      %v4610 = vpop.permute.xlu0 %4609
      %4611 = vrot.lane.b32.xlu0 %v2504, 8
      %v4612 = vpop.permute.xlu0 %4611
      %4613 = vrot.lane.b32.xlu0 %v2505, 8
      %v4614 = vpop.permute.xlu0 %4613
      %4615 = vrot.lane.b32.xlu0 %v2506, 8
      %v4616 = vpop.permute.xlu0 %4615
      %4617 = vrot.lane.b32.xlu0 %v2507, 8
      %v4618 = vpop.permute.xlu0 %4617
      %4619 = vrot.lane.b32.xlu0 %v2508, 8
      %v4620 = vpop.permute.xlu0 %4619
      %4621 = vrot.lane.b32.xlu0 %v2509, 8
      %v4622 = vpop.permute.xlu0 %4621
      %4687 = vrot.lane.b32.xlu0 %v4367, 16
      %v4688 = vpop.permute.xlu0 %4687
      %4689 = vrot.lane.b32.xlu0 %v4368, 16
      %v4690 = vpop.permute.xlu0 %4689
      %4691 = vrot.lane.b32.xlu0 %v4369, 16
      %v4692 = vpop.permute.xlu0 %4691
      %4693 = vrot.lane.b32.xlu0 %v4370, 16
      %v4694 = vpop.permute.xlu0 %4693
      %4695 = vrot.lane.b32.xlu0 %v4371, 16
      %v4696 = vpop.permute.xlu0 %4695
      %4697 = vrot.lane.b32.xlu0 %v4372, 16
      %v4698 = vpop.permute.xlu0 %4697
      %4699 = vrot.lane.b32.xlu0 %v4373, 16
      %v4700 = vpop.permute.xlu0 %4699
      %4701 = vrot.lane.b32.xlu0 %v4374, 16
      %v4702 = vpop.permute.xlu0 %4701
      %4703 = vrot.lane.b32.xlu0 %v4375, 16
      %v4704 = vpop.permute.xlu0 %4703
      %4705 = vrot.lane.b32.xlu0 %v4376, 16
      %v4706 = vpop.permute.xlu0 %4705
      %4707 = vrot.lane.b32.xlu0 %v4377, 16
      %v4708 = vpop.permute.xlu0 %4707
      %4709 = vrot.lane.b32.xlu0 %v4378, 16
      %v4710 = vpop.permute.xlu0 %4709
      %4711 = vrot.lane.b32.xlu0 %v4379, 16
      %v4712 = vpop.permute.xlu0 %4711
      %4713 = vrot.lane.b32.xlu0 %v4380, 16
      %v4714 = vpop.permute.xlu0 %4713
      %4715 = vrot.lane.b32.xlu0 %v4381, 16
      %v4716 = vpop.permute.xlu0 %4715
      %4717 = vrot.lane.b32.xlu0 %v4382, 16
      %v4718 = vpop.permute.xlu0 %4717
      %4719 = vrot.lane.b32.xlu0 %v4383, 16
      %v4720 = vpop.permute.xlu0 %4719
      %4721 = vrot.lane.b32.xlu0 %v4384, 16
      %v4722 = vpop.permute.xlu0 %4721
      %4723 = vrot.lane.b32.xlu0 %v4385, 16
      %v4724 = vpop.permute.xlu0 %4723
      %4725 = vrot.lane.b32.xlu0 %v4386, 16
      %v4726 = vpop.permute.xlu0 %4725
      %4727 = vrot.lane.b32.xlu0 %v4387, 16
      %v4728 = vpop.permute.xlu0 %4727
      %4729 = vrot.lane.b32.xlu0 %v4388, 16
      %v4730 = vpop.permute.xlu0 %4729
      %4731 = vrot.lane.b32.xlu0 %v4389, 16
      %v4732 = vpop.permute.xlu0 %4731
      %4733 = vrot.lane.b32.xlu0 %v4390, 16
      %v4734 = vpop.permute.xlu0 %4733
      %4735 = vrot.lane.b32.xlu0 %v4391, 16
      %v4736 = vpop.permute.xlu0 %4735
      %4737 = vrot.lane.b32.xlu0 %v4392, 16
      %v4738 = vpop.permute.xlu0 %4737
      %4739 = vrot.lane.b32.xlu0 %v4393, 16
      %v4740 = vpop.permute.xlu0 %4739
      %4741 = vrot.lane.b32.xlu0 %v4394, 16
      %v4742 = vpop.permute.xlu0 %4741
      %4743 = vrot.lane.b32.xlu0 %v4395, 16
      %v4744 = vpop.permute.xlu0 %4743
      %4745 = vrot.lane.b32.xlu0 %v4396, 16
      %v4746 = vpop.permute.xlu0 %4745
      %4747 = vrot.lane.b32.xlu0 %v4397, 16
      %v4748 = vpop.permute.xlu0 %4747
      %4749 = vrot.lane.b32.xlu0 %v4398, 16
      %v4750 = vpop.permute.xlu0 %4749
      %4815 = vrot.lane.b32.xlu0 %v1241, 24
      %v4816 = vpop.permute.xlu0 %4815
      %4817 = vrot.lane.b32.xlu0 %v1242, 24
      %v4818 = vpop.permute.xlu0 %4817
      %4819 = vrot.lane.b32.xlu0 %v1243, 24
      %v4820 = vpop.permute.xlu0 %4819
      %4821 = vrot.lane.b32.xlu0 %v1244, 24
      %v4822 = vpop.permute.xlu0 %4821
      %4823 = vrot.lane.b32.xlu0 %v1245, 24
      %v4824 = vpop.permute.xlu0 %4823
      %4825 = vrot.lane.b32.xlu0 %v1246, 24
      %v4826 = vpop.permute.xlu0 %4825
      %4827 = vrot.lane.b32.xlu0 %v1247, 24
      %v4828 = vpop.permute.xlu0 %4827
      %4829 = vrot.lane.b32.xlu0 %v1248, 24
      %v4830 = vpop.permute.xlu0 %4829
      %4831 = vrot.lane.b32.xlu0 %v1249, 24
      %v4832 = vpop.permute.xlu0 %4831
      %4833 = vrot.lane.b32.xlu0 %v1250, 24
      %v4834 = vpop.permute.xlu0 %4833
      %4835 = vrot.lane.b32.xlu0 %v1251, 24
      %v4836 = vpop.permute.xlu0 %4835
      %4837 = vrot.lane.b32.xlu0 %v1252, 24
      %v4838 = vpop.permute.xlu0 %4837
      %4839 = vrot.lane.b32.xlu0 %v1253, 24
      %v4840 = vpop.permute.xlu0 %4839
      %4841 = vrot.lane.b32.xlu0 %v1254, 24
      %v4842 = vpop.permute.xlu0 %4841
      %4843 = vrot.lane.b32.xlu0 %v1255, 24
      %v4844 = vpop.permute.xlu0 %4843
      %4845 = vrot.lane.b32.xlu0 %v1256, 24
      %v4846 = vpop.permute.xlu0 %4845
      %4847 = vrot.lane.b32.xlu0 %v1257, 24
      %v4848 = vpop.permute.xlu0 %4847
      %4849 = vrot.lane.b32.xlu0 %v1258, 24
      %v4850 = vpop.permute.xlu0 %4849
      %4851 = vrot.lane.b32.xlu0 %v1259, 24
      %v4852 = vpop.permute.xlu0 %4851
      %4853 = vrot.lane.b32.xlu0 %v1260, 24
      %v4854 = vpop.permute.xlu0 %4853
      %4855 = vrot.lane.b32.xlu0 %v1261, 24
      %v4856 = vpop.permute.xlu0 %4855
      %4857 = vrot.lane.b32.xlu0 %v1262, 24
      %v4858 = vpop.permute.xlu0 %4857
      %4859 = vrot.lane.b32.xlu0 %v1263, 24
      %v4860 = vpop.permute.xlu0 %4859
      %4861 = vrot.lane.b32.xlu0 %v1264, 24
      %v4862 = vpop.permute.xlu0 %4861
      %4863 = vrot.lane.b32.xlu0 %v1265, 24
      %v4864 = vpop.permute.xlu0 %4863
      %4865 = vrot.lane.b32.xlu0 %v1266, 24
      %v4866 = vpop.permute.xlu0 %4865
      %4867 = vrot.lane.b32.xlu0 %v1267, 24
      %v4868 = vpop.permute.xlu0 %4867
      %4869 = vrot.lane.b32.xlu0 %v1268, 24
      %v4870 = vpop.permute.xlu0 %4869
      %4871 = vrot.lane.b32.xlu0 %v1269, 24
      %v4872 = vpop.permute.xlu0 %4871
      %4873 = vrot.lane.b32.xlu0 %v1270, 24
      %v4874 = vpop.permute.xlu0 %4873
      %4875 = vrot.lane.b32.xlu0 %v1271, 24
      %v4876 = vpop.permute.xlu0 %4875
      %4877 = vrot.lane.b32.xlu0 %v1272, 24
      %v4878 = vpop.permute.xlu0 %4877
      %v4911 = vsel %vm1822, %v4432, %v4560
      %v4912 = vsel %vm1822, %v4434, %v4562
      %v4913 = vsel %vm1822, %v4436, %v4564
      %v4914 = vsel %vm1822, %v4438, %v4566
      %v4915 = vsel %vm1822, %v4440, %v4568
      %v4916 = vsel %vm1822, %v4442, %v4570
      %v4917 = vsel %vm1822, %v4444, %v4572
      %v4918 = vsel %vm1822, %v4446, %v4574
      %v4919 = vsel %vm1822, %v4448, %v4576
      %v4920 = vsel %vm1822, %v4450, %v4578
      %v4921 = vsel %vm1822, %v4452, %v4580
      %v4922 = vsel %vm1822, %v4454, %v4582
      %v4923 = vsel %vm1822, %v4456, %v4584
      %v4924 = vsel %vm1822, %v4458, %v4586
      %v4925 = vsel %vm1822, %v4460, %v4588
      %v4926 = vsel %vm1822, %v4462, %v4590
      %v4927 = vsel %vm1822, %v4464, %v4592
      %v4928 = vsel %vm1822, %v4466, %v4594
      %v4929 = vsel %vm1822, %v4468, %v4596
      %v4930 = vsel %vm1822, %v4470, %v4598
      %v4931 = vsel %vm1822, %v4472, %v4600
      %v4932 = vsel %vm1822, %v4474, %v4602
      %v4933 = vsel %vm1822, %v4476, %v4604
      %v4934 = vsel %vm1822, %v4478, %v4606
      %v4935 = vsel %vm1822, %v4480, %v4608
      %v4936 = vsel %vm1822, %v4482, %v4610
      %v4937 = vsel %vm1822, %v4484, %v4612
      %v4938 = vsel %vm1822, %v4486, %v4614
      %v4939 = vsel %vm1822, %v4488, %v4616
      %v4940 = vsel %vm1822, %v4490, %v4618
      %v4941 = vsel %vm1822, %v4492, %v4620
      %v4942 = vsel %vm1822, %v4494, %v4622
      %v4943 = vsel %vm3280, %v4911, %v4688
      %v4944 = vsel %vm3280, %v4912, %v4690
      %v4945 = vsel %vm3280, %v4913, %v4692
      %v4946 = vsel %vm3280, %v4914, %v4694
      %v4947 = vsel %vm3280, %v4915, %v4696
      %v4948 = vsel %vm3280, %v4916, %v4698
      %v4949 = vsel %vm3280, %v4917, %v4700
      %v4950 = vsel %vm3280, %v4918, %v4702
      %v4951 = vsel %vm3280, %v4919, %v4704
      %v4952 = vsel %vm3280, %v4920, %v4706
      %v4953 = vsel %vm3280, %v4921, %v4708
      %v4954 = vsel %vm3280, %v4922, %v4710
      %v4955 = vsel %vm3280, %v4923, %v4712
      %v4956 = vsel %vm3280, %v4924, %v4714
      %v4957 = vsel %vm3280, %v4925, %v4716
      %v4958 = vsel %vm3280, %v4926, %v4718
      %v4959 = vsel %vm3280, %v4927, %v4720
      %v4960 = vsel %vm3280, %v4928, %v4722
      %v4961 = vsel %vm3280, %v4929, %v4724
      %v4962 = vsel %vm3280, %v4930, %v4726
      %v4963 = vsel %vm3280, %v4931, %v4728
      %v4964 = vsel %vm3280, %v4932, %v4730
      %v4965 = vsel %vm3280, %v4933, %v4732
      %v4966 = vsel %vm3280, %v4934, %v4734
      %v4967 = vsel %vm3280, %v4935, %v4736
      %v4968 = vsel %vm3280, %v4936, %v4738
      %v4969 = vsel %vm3280, %v4937, %v4740
      %v4970 = vsel %vm3280, %v4938, %v4742
      %v4971 = vsel %vm3280, %v4939, %v4744
      %v4972 = vsel %vm3280, %v4940, %v4746
      %v4973 = vsel %vm3280, %v4941, %v4748
      %v4974 = vsel %vm3280, %v4942, %v4750
      %vm4975 = vcmask 195584
      %v4976 = vsel %vm4975, %v4943, %v4816
      %v4977 = vsel %vm4975, %v4944, %v4818
      %v4978 = vsel %vm4975, %v4945, %v4820
      %v4979 = vsel %vm4975, %v4946, %v4822
      %v4980 = vsel %vm4975, %v4947, %v4824
      %v4981 = vsel %vm4975, %v4948, %v4826
      %v4982 = vsel %vm4975, %v4949, %v4828
      %v4983 = vsel %vm4975, %v4950, %v4830
      %v4984 = vsel %vm4975, %v4951, %v4832
      %v4985 = vsel %vm4975, %v4952, %v4834
      %v4986 = vsel %vm4975, %v4953, %v4836
      %v4987 = vsel %vm4975, %v4954, %v4838
      %v4988 = vsel %vm4975, %v4955, %v4840
      %v4989 = vsel %vm4975, %v4956, %v4842
      %v4990 = vsel %vm4975, %v4957, %v4844
      %v4991 = vsel %vm4975, %v4958, %v4846
      %v4992 = vsel %vm4975, %v4959, %v4848
      %v4993 = vsel %vm4975, %v4960, %v4850
      %v4994 = vsel %vm4975, %v4961, %v4852
      %v4995 = vsel %vm4975, %v4962, %v4854
      %v4996 = vsel %vm4975, %v4963, %v4856
      %v4997 = vsel %vm4975, %v4964, %v4858
      %v4998 = vsel %vm4975, %v4965, %v4860
      %v4999 = vsel %vm4975, %v4966, %v4862
      %v5000 = vsel %vm4975, %v4967, %v4864
      %v5001 = vsel %vm4975, %v4968, %v4866
      %v5002 = vsel %vm4975, %v4969, %v4868
      %v5003 = vsel %vm4975, %v4970, %v4870
      %v5004 = vsel %vm4975, %v4971, %v4872
      %v5005 = vsel %vm4975, %v4972, %v4874
      %v5006 = vsel %vm4975, %v4973, %v4876
      %v5007 = vsel %vm4975, %v4974, %v4878
      %vm5008 = vcmask 261120
      %5009 = vst.msk [vmem:[%s334] sm:$0xff] %vm5008, %v4976
      %5010 = vst.msk [vmem:[%s334 + $0x8] sm:$0xff] %vm5008, %v4977
      %5011 = vst.msk [vmem:[%s334 + $0x10] sm:$0xff] %vm5008, %v4978
      %5012 = vst.msk [vmem:[%s334 + $0x18] sm:$0xff] %vm5008, %v4979
      %5013 = vst.msk [vmem:[%s334 + $0x20] sm:$0xff] %vm5008, %v4980
      %5014 = vst.msk [vmem:[%s334 + $0x28] sm:$0xff] %vm5008, %v4981
      %5015 = vst.msk [vmem:[%s334 + $0x30] sm:$0xff] %vm5008, %v4982
      %5016 = vst.msk [vmem:[%s334 + $0x38] sm:$0xff] %vm5008, %v4983
      %5017 = vst.msk [vmem:[%s334 + $0x40] sm:$0xff] %vm5008, %v4984
      %5018 = vst.msk [vmem:[%s334 + $0x48] sm:$0xff] %vm5008, %v4985
      %5019 = vst.msk [vmem:[%s334 + $0x50] sm:$0xff] %vm5008, %v4986
      %5020 = vst.msk [vmem:[%s334 + $0x58] sm:$0xff] %vm5008, %v4987
      %5021 = vst.msk [vmem:[%s334 + $0x60] sm:$0xff] %vm5008, %v4988
      %5022 = vst.msk [vmem:[%s334 + $0x68] sm:$0xff] %vm5008, %v4989
      %5023 = vst.msk [vmem:[%s334 + $0x70] sm:$0xff] %vm5008, %v4990
      %5024 = vst.msk [vmem:[%s334 + $0x78] sm:$0xff] %vm5008, %v4991
      %5025 = vst.msk [vmem:[%s334 + $0x80] sm:$0xff] %vm5008, %v4992
      %5026 = vst.msk [vmem:[%s334 + $0x88] sm:$0xff] %vm5008, %v4993
      %5027 = vst.msk [vmem:[%s334 + $0x90] sm:$0xff] %vm5008, %v4994
      %5028 = vst.msk [vmem:[%s334 + $0x98] sm:$0xff] %vm5008, %v4995
      %5029 = vst.msk [vmem:[%s334 + $0xa0] sm:$0xff] %vm5008, %v4996
      %5030 = vst.msk [vmem:[%s334 + $0xa8] sm:$0xff] %vm5008, %v4997
      %5031 = vst.msk [vmem:[%s334 + $0xb0] sm:$0xff] %vm5008, %v4998
      %5032 = vst.msk [vmem:[%s334 + $0xb8] sm:$0xff] %vm5008, %v4999
      %5033 = vst.msk [vmem:[%s334 + $0xc0] sm:$0xff] %vm5008, %v5000
      %5034 = vst.msk [vmem:[%s334 + $0xc8] sm:$0xff] %vm5008, %v5001
      %5035 = vst.msk [vmem:[%s334 + $0xd0] sm:$0xff] %vm5008, %v5002
      %5036 = vst.msk [vmem:[%s334 + $0xd8] sm:$0xff] %vm5008, %v5003
      %5037 = vst.msk [vmem:[%s334 + $0xe0] sm:$0xff] %vm5008, %v5004
      %5038 = vst.msk [vmem:[%s334 + $0xe8] sm:$0xff] %vm5008, %v5005
      %5039 = vst.msk [vmem:[%s334 + $0xf0] sm:$0xff] %vm5008, %v5006
      %5040 = vst.msk [vmem:[%s334 + $0xf8] sm:$0xff] %vm5008, %v5007
      %s5041 = smul.u32 32, %s20
      %p5042 = scmp.lt.s32.totalorder %s5041, 63
      %s5043 = scalar_select %p5042, %s5041, 63
      %s5044 = smul.addr %s5043, 8
      %s5045 = scalar_lea.vmem %s9, %s5044
      // Predicated region
      $region57: #{tpu_custom_call.1} parent=55 // pred_check
        %p5046 = pneg %p232
      $region58: #{tpu_custom_call.1} parent=55 // pred_check_branch
        %5048 = sbr.rel (%p5046) target = $region60
      $region59: #{tpu_custom_call.1} parent=55 // pred_region
        %s5049 = smul.u32 32, %s20
      $region60: #{tpu_custom_call.1} parent=55 // pred_fallthru
        _
    $region56: #{tpu_custom_call.1} parent=5 // pred_fallthru
      _
    %p5050 = scmp.le.s32.totalorder 2, %s15
    // Predicated region
    $region61: #{tpu_custom_call.1} parent=5 // pred_check
      %p5051 = pneg %p5050
    $region62: #{tpu_custom_call.1} parent=5 // pred_check_branch
      %5053 = sbr.rel (%p5051) target = $region64
    $region63: #{tpu_custom_call.1} parent=5 // pred_region
      %s5054 = ssub.s32 %s15, 2
      // Predicated region
      $region65: #{tpu_custom_call.1} parent=63 // pred_check
        %p5055 = pneg %p238
      $region66: #{tpu_custom_call.1} parent=63 // pred_check_branch
        %5057 = sbr.rel (%p5055) target = $region68
      $region67: #{tpu_custom_call.1} parent=63 // pred_region
        %s5058 = smul.u32 32, %s21
        %p5059 = scmp.lt.s32.totalorder %s5058, 63
        %s5060 = scalar_select %p5059, %s5058, 63
        %s5061 = smul.addr %s5060, 8
        %s5062 = scalar_lea.vmem %s9, %s5061
      $region68: #{tpu_custom_call.1} parent=63 // pred_fallthru
        _
    $region64: #{tpu_custom_call.1} parent=5 // pred_fallthru
      _
  $region6: #{tpu_custom_call.1} parent=0 // loop_footer
    %s19 = sadd.s32 1, %s15
  $region7: #{tpu_custom_call.1} parent=0 // loop_footer_branch
    %14 = sbr.rel target = $region3
  $region8: #{tpu_custom_call.1} parent=0 // loop_exit
    _

</llo_original>
